<compile_context>
chip_gen: v7x
topology: tpu7x:2x2x1
jax: 0.10.0
libtpu: 0.0.40
codegen_flags: <defaults>
</compile_context>

<pallas_src>
import functools

import jax
import jax.numpy as jnp
from jax import lax
from jax.experimental import pallas as pl
from jax.experimental.pallas import tpu as pltpu


def make_generator_kernel(bb, S, Ls, Lu, H, V, G, use_teacher_forcing):
  """Per-(batch-block, decode-step) kernel body.  grid = (B // bb, R)."""
  N = bb * S
  H2, H3, H4 = 2 * H, 3 * H, 4 * H
  f32, bf16 = jnp.float32, jnp.bfloat16

  def attend(seq, seq_t, musk, cond3):
    # scores / contexts on the MXU; encoder states shared across slots.
    scores = jnp.einsum('bsh,bhl->bsl', cond3, seq_t,
                        preferred_element_type=f32) + musk          # (bb,S,L)
    m = jnp.max(scores, axis=-1, keepdims=True)
    e = jnp.exp(scores - m)
    prob = e * pl.reciprocal(jnp.sum(e, axis=-1, keepdims=True), approx=True)
    ctx = jnp.einsum('bsl,blh->bsh', prob, seq,
                     preferred_element_type=f32)                    # (bb,S,H)
    return ctx, prob

  def shared_step(r_step, cond0_ref, dec0_ref, sysh_ref, sysht_ref,
                  userh_ref, userht_ref, smusk_ref, umusk_ref,
                  wih_ref, whh_ref, bih_ref, bhh_ref,
                  wgate_ref, bgate_ref, wheads_ref, bheads_ref,
                  gate_ref, hid_ref, din_ref):
    sysh, sysht = sysh_ref[...], sysht_ref[...]
    userh, userht = userh_ref[...], userht_ref[...]
    smusk, umusk = smusk_ref[...], umusk_ref[...]

    # (Re)initialise the recurrent state at the first decode step of this
    # batch block.  State lives in VMEM scratch across the "arbitrary" R axis.
    @pl.when(r_step == 0)
    def _():
      cond0 = cond0_ref[...]                                        # (bb,S,H)
      c0s, _ = attend(sysh, sysht, smusk, cond0)
      c0u, _ = attend(userh, userht, umusk, cond0)
      hid_ref[...] = (c0s + c0u).reshape(N, H)
      din_ref[...] = dec0_ref[...].reshape(N, H)

    hidden = hid_ref[...]                                           # (N, H)
    dec_in = din_ref[...]                                           # (N, H)

    # --- GRU cell: split matmuls (no lane-axis concat copies) ---
    gx = jnp.dot(dec_in, wih_ref[...], preferred_element_type=f32) + bih_ref[...]
    gh = jnp.dot(hidden, whh_ref[...], preferred_element_type=f32) + bhh_ref[...]
    r = jax.nn.sigmoid(gx[:, 0:H] + gh[:, 0:H])
    z = jax.nn.sigmoid(gx[:, H:H2] + gh[:, H:H2])
    n = jnp.tanh(gx[:, H2:H3] + r * gh[:, H2:H3])
    h_new = (1.0 - z) * n + z * hidden
    hid_ref[...] = h_new

    # --- attentions over sys / user history with the new hidden state ---
    h3 = h_new.reshape(bb, S, H)
    ctx_s3, prob_sys = attend(sysh, sysht, smusk, h3)
    ctx_u3, prob_user = attend(userh, userht, umusk, h3)
    ctx_sys = ctx_s3.reshape(N, H)
    ctx_user = ctx_u3.reshape(N, H)

    # --- gate head (first decode step only; output block stays resident) ---
    @pl.when(r_step == 0)
    def _():
      gate_ref[...] = (
          jnp.dot(ctx_sys, wgate_ref[0:H, :], preferred_element_type=f32)
          + jnp.dot(ctx_user, wgate_ref[H:H2, :], preferred_element_type=f32)
          + bgate_ref[...]).reshape(bb, S, G)

    # --- ratio + both copy logits: 4 split matmuls on the fused (4H,3) W ---
    heads = (jnp.dot(h_new, wheads_ref[0:H, :], preferred_element_type=f32)
             + jnp.dot(dec_in, wheads_ref[H:H2, :], preferred_element_type=f32)
             + jnp.dot(ctx_sys, wheads_ref[H2:H3, :], preferred_element_type=f32)
             + jnp.dot(ctx_user, wheads_ref[H3:H4, :], preferred_element_type=f32)
             + bheads_ref[...])                                     # (N, 3)
    return h_new, dec_in, prob_sys, prob_user, heads

  if use_teacher_forcing:
    def kernel(cond0_ref, dec0_ref, sysh_ref, sysht_ref, userh_ref, userht_ref,
               smusk_ref, umusk_ref, tgt_ref, embt_ref,
               wih_ref, whh_ref, bih_ref, bhh_ref, wgate_ref, bgate_ref,
               wheads_ref, bheads_ref,
               logits_ref, psys_ref, puser_ref, heads_ref, gate_ref,
               hid_ref, din_ref):
      r_step = pl.program_id(1)
      h_new, dec_in, prob_sys, prob_user, heads = shared_step(
          r_step, cond0_ref, dec0_ref, sysh_ref, sysht_ref, userh_ref,
          userht_ref, smusk_ref, umusk_ref, wih_ref, whh_ref, bih_ref,
          bhh_ref, wgate_ref, bgate_ref, wheads_ref, bheads_ref,
          gate_ref, hid_ref, din_ref)

      # Vocab logits on the bf16 MXU path; emb is pre-transposed (no vxpose).
      logits = jnp.dot(h_new.astype(bf16), embt_ref[...],
                       preferred_element_type=f32)                  # (N, V)
      logits_ref[...] = logits.reshape(bb, S, V)
      psys_ref[...] = prob_sys
      puser_ref[...] = prob_user
      heads_ref[...] = heads.reshape(bb, S, 3)

      # Teacher forcing: next decoder input = emb[target[:, :, r]].
      din_ref[...] = tgt_ref[...].astype(f32).reshape(N, H)

    return kernel

  def kernel(cond0_ref, dec0_ref, sysh_ref, sysht_ref, userh_ref, userht_ref,
             smusk_ref, umusk_ref, ohsys_ref, ohuser_ref, embt_ref, emb_ref,
             wih_ref, whh_ref, bih_ref, bhh_ref, wgate_ref, bgate_ref,
             wheads_ref, bheads_ref,
             point_ref, pred_ref, gate_ref,
             hid_ref, din_ref):
    r_step = pl.program_id(1)
    h_new, dec_in, prob_sys, prob_user, heads = shared_step(
        r_step, cond0_ref, dec0_ref, sysh_ref, sysht_ref, userh_ref,
        userht_ref, smusk_ref, umusk_ref, wih_ref, whh_ref, bih_ref,
        bhh_ref, wgate_ref, bgate_ref, wheads_ref, bheads_ref,
        gate_ref, hid_ref, din_ref)

    logits = jnp.dot(h_new.astype(bf16), embt_ref[...],
                     preferred_element_type=f32)                    # (N, V)
    lm = jnp.max(logits, axis=-1, keepdims=True)
    le = jnp.exp(logits - lm)
    p_vocab = le * pl.reciprocal(jnp.sum(le, axis=-1, keepdims=True),
                                 approx=True)

    switch = jax.nn.sigmoid(heads[:, 0:1])                          # (N, 1)
    c_sys, c_user = heads[:, 1:2], heads[:, 2:3]
    cm = jnp.maximum(c_sys, c_user)
    e_s, e_u = jnp.exp(c_sys - cm), jnp.exp(c_user - cm)
    denom = e_s + e_u
    alpha, beta = e_s / denom, e_u / denom                          # exact

    # scatter_add_(1, story, prob) as bf16 one-hot matmuls on the MXU.
    p_ctx_sys = jnp.einsum('bsl,blv->bsv', prob_sys.astype(bf16),
                           ohsys_ref[...],
                           preferred_element_type=f32).reshape(N, V)
    p_ctx_user = jnp.einsum('bsl,blv->bsv', prob_user.astype(bf16),
                            ohuser_ref[...],
                            preferred_element_type=f32).reshape(N, V)

    final_p = ((1.0 - switch) * (alpha * p_ctx_sys + beta * p_ctx_user)
               + switch * p_vocab)                                  # (N, V)
    point_ref[...] = final_p.reshape(bb, S, V)

    # Greedy argmax (first occurrence, like torch.argmax).
    iota_v = lax.broadcasted_iota(jnp.int32, (N, V), 1)
    maxv = jnp.max(final_p, axis=-1, keepdims=True)
    pred = jnp.min(jnp.where(final_p == maxv, iota_v, V),
                   axis=-1, keepdims=True).astype(jnp.int32)        # (N, 1)
    pred_ref[...] = pred.reshape(bb, S, 1)

    # Next decoder input = emb[pred].
    # TODO(synk): replace the one-hot matmul with per-row dynamic gathers from
    #             the VMEM emb ref to avoid the O(N*V*H) matmul at large V.
    onehot_nxt = (pred == iota_v).astype(bf16)                      # (N, V)
    din_ref[...] = jnp.dot(onehot_nxt, emb_ref[...],
                           preferred_element_type=f32)

  return kernel


@functools.partial(
    jax.jit,
    static_argnames=("max_res_len", "nb_gate", "use_teacher_forcing",
                     "batch_block"))
def generator_forward(sys_H, user_H, story_sys, story_user, sys_musk, user_musk,
                      targets, slot_att_all, slot_dec_emb_all, params,
                      max_res_len, nb_gate, use_teacher_forcing=True,
                      batch_block=1):
  f32, bf16 = jnp.float32, jnp.bfloat16
  B, Ls, H = sys_H.shape
  Lu = user_H.shape[1]
  V = params["emb"].shape[0]
  S = slot_att_all.shape[0]
  R, G = max_res_len, nb_gate
  bb = batch_block
  if B % bb != 0:
    raise ValueError("batch_block must divide the batch size")
  NB = B // bb
  H2, H3, H4 = 2 * H, 3 * H, 4 * H

  emb = params["emb"].astype(f32)
  slot_att = slot_att_all.reshape(S, H).astype(f32)
  slot_dec = slot_dec_emb_all.reshape(S, H).astype(f32)

  # ---- layout plumbing & weight packing (plain XLA, outside the kernel) ----
  cond0 = jnp.broadcast_to(slot_att[None], (B, S, H))               # (B,S,H)
  dec_in0 = jnp.broadcast_to(slot_dec[None], (B, S, H))             # (B,S,H)
  sysH = sys_H.astype(f32)
  userH = user_H.astype(f32)
  sysHt = jnp.transpose(sysH, (0, 2, 1))                            # (B,H,Ls)
  userHt = jnp.transpose(userH, (0, 2, 1))                          # (B,H,Lu)
  smusk = sys_musk.astype(f32)[:, None, :]                          # (B,1,Ls)
  umusk = user_musk.astype(f32)[:, None, :]                         # (B,1,Lu)
  emb_t = jnp.transpose(emb).astype(bf16)                           # (H,V)

  w_ih = params["w_ih_t"].astype(f32)                               # (H,3H)
  w_hh = params["w_hh_t"].astype(f32)                               # (H,3H)
  b_ih = params["b_ih"].astype(f32)                                 # (1,3H)
  b_hh = params["b_hh"].astype(f32)                                 # (1,3H)
  w_gate = params["w_gate_t"].astype(f32)                           # (2H,G)
  b_gate = params["b_gate"].astype(f32)                             # (1,G)

  # fused ratio/copy head, rows = [dec_state | dec_in | ctx_sys | ctx_user].
  wr = params["w_ratio"].astype(f32)[0]                             # (4H,)
  wc = params["w_copy"].astype(f32)[0]                              # (3H,)
  zH = jnp.zeros((H,), f32)
  w_heads = jnp.concatenate([
      jnp.stack([wr[0:H], wc[0:H], wc[0:H]], axis=1),               # dec_state
      jnp.stack([wr[H3:H4], wc[H2:H3], wc[H2:H3]], axis=1),         # dec_in
      jnp.stack([wr[H:H2], wc[H:H2], zH], axis=1),                  # ctx_sys
      jnp.stack([wr[H2:H3], zH, wc[H:H2]], axis=1),                 # ctx_user
  ], axis=0)                                                        # (4H, 3)
  b_heads = jnp.concatenate(
      [params["b_ratio"], params["b_copy"], params["b_copy"]],
      axis=1).astype(f32)                                           # (1, 3)

  # ---- grid / specs ----
  grid = (NB, R)
  bmap = lambda b, r: (b, 0, 0)
  brmap = lambda b, r: (r, b, 0, 0)
  cmap = lambda b, r: (0, 0)

  base_specs = [
      pl.BlockSpec((bb, S, H), bmap),        # cond0
      pl.BlockSpec((bb, S, H), bmap),        # dec_in0
      pl.BlockSpec((bb, Ls, H), bmap),       # sys_H
      pl.BlockSpec((bb, H, Ls), bmap),       # sys_H^T
      pl.BlockSpec((bb, Lu, H), bmap),       # user_H
      pl.BlockSpec((bb, H, Lu), bmap),       # user_H^T
      pl.BlockSpec((bb, 1, Ls), bmap),       # sys mask
      pl.BlockSpec((bb, 1, Lu), bmap),       # user mask
  ]
  weight_specs = [
      pl.BlockSpec((H, H3), cmap),           # w_ih
      pl.BlockSpec((H, H3), cmap),           # w_hh
      pl.BlockSpec((1, H3), cmap),           # b_ih
      pl.BlockSpec((1, H3), cmap),           # b_hh
      pl.BlockSpec((H2, G), cmap),           # w_gate
      pl.BlockSpec((1, G), cmap),            # b_gate
      pl.BlockSpec((H4, 3), cmap),           # w_heads
      pl.BlockSpec((1, 3), cmap),            # b_heads
  ]
  base_args = [cond0, dec_in0, sysH, sysHt, userH, userHt, smusk, umusk]
  weight_args = [w_ih, w_hh, b_ih, b_hh, w_gate, b_gate, w_heads, b_heads]

  # VMEM budget sized from the actual block footprint (double-buffer margin).
  def _sz(shape, itemsize):
    n = 1
    for d in shape:
      n *= int(d)
    return n * itemsize

  blk = (2 * _sz((bb, S, H), 4) + _sz((bb, Ls, H), 4) + _sz((bb, H, Ls), 4)
         + _sz((bb, Lu, H), 4) + _sz((bb, H, Lu), 4)
         + _sz((bb, 1, Ls), 4) + _sz((bb, 1, Lu), 4)
         + _sz((H, V), 2) + 2 * _sz((H, H3), 4) + 2 * _sz((1, H3), 4)
         + _sz((H2, G), 4) + _sz((1, G), 4) + _sz((H4, 3), 4) + _sz((1, 3), 4)
         + _sz((bb, S, G), 4) + 2 * _sz((bb * S, H), 4))
  if use_teacher_forcing:
    blk += (_sz((bb, S, H), 2) + _sz((bb, S, V), 4) + _sz((bb, S, Ls), 4)
            + _sz((bb, S, Lu), 4) + _sz((bb, S, 3), 4))
  else:
    blk += (_sz((bb, Ls, V), 2) + _sz((bb, Lu, V), 2) + _sz((V, H), 2)
            + _sz((bb, S, V), 4) + _sz((bb, S, 1), 4))
  vmem_limit = int(min(max(2 * blk + (8 << 20), 32 << 20), 64 << 20))

  compiler_params = pltpu.CompilerParams(
      dimension_semantics=("parallel", "arbitrary"),
      vmem_limit_bytes=vmem_limit)
  scratch = [pltpu.VMEM((bb * S, H), f32), pltpu.VMEM((bb * S, H), f32)]
  kernel = make_generator_kernel(bb, S, Ls, Lu, H, V, G, use_teacher_forcing)

  if use_teacher_forcing:
    # teacher-forcing embeddings gathered with one XLA gather: (R, B, S, H)
    tgt_emb = jnp.transpose(emb[targets], (2, 1, 0, 3)).astype(bf16)

    logits_r, psys_r, puser_r, heads_r, gate_r = pl.pallas_call(
        kernel,
        grid=grid,
        in_specs=base_specs + [
            pl.BlockSpec((None, bb, S, H), brmap),   # tgt_emb (per step, bf16)
            pl.BlockSpec((H, V), cmap),              # emb^T (bf16)
        ] + weight_specs,
        out_specs=[
            pl.BlockSpec((None, bb, S, V), brmap),   # vocab logits
            pl.BlockSpec((None, bb, S, Ls), brmap),  # prob_sys
            pl.BlockSpec((None, bb, S, Lu), brmap),  # prob_user
            pl.BlockSpec((None, bb, S, 3), brmap),   # [ratio, c_sys, c_user]
            pl.BlockSpec((bb, S, G), bmap),          # gate
        ],
        out_shape=[
            jax.ShapeDtypeStruct((R, B, S, V), f32),
            jax.ShapeDtypeStruct((R, B, S, Ls), f32),
            jax.ShapeDtypeStruct((R, B, S, Lu), f32),
            jax.ShapeDtypeStruct((R, B, S, 3), f32),
            jax.ShapeDtypeStruct((B, S, G), f32),
        ],
        scratch_shapes=scratch,
        compiler_params=compiler_params,
    )(*(base_args + [tgt_emb, emb_t] + weight_args))

    # ---- deferred (exact, plain-XLA) vocab softmax / scatter / mixing ----
    p_vocab = jax.nn.softmax(logits_r, axis=-1)                     # (R,B,S,V)
    switch = jax.nn.sigmoid(heads_r[..., 0:1])                      # (R,B,S,1)
    pw = jax.nn.softmax(heads_r[..., 1:3], axis=-1)                 # (R,B,S,2)
    alpha, beta = pw[..., 0:1], pw[..., 1:2]

    def scatter_one(prob_b, story_b):                               # (R,S,L),(L,)
      return jnp.zeros((R, S, V), f32).at[..., story_b].add(prob_b)

    p_ctx_sys = jax.vmap(scatter_one, in_axes=(1, 0), out_axes=1)(
        psys_r, story_sys)                                          # (R,B,S,V)
    p_ctx_user = jax.vmap(scatter_one, in_axes=(1, 0), out_axes=1)(
        puser_r, story_user)

    final_p = ((1.0 - switch) * (alpha * p_ctx_sys + beta * p_ctx_user)
               + switch * p_vocab)                                  # (R,B,S,V)
    pred_r = jnp.argmax(final_p, axis=-1)                           # (R,B,S)

    point = jnp.transpose(final_p, (2, 1, 0, 3))                    # (S,B,R,V)
    gate = jnp.transpose(gate_r, (1, 0, 2))                         # (S,B,G)
    pred = jnp.transpose(pred_r, (2, 1, 0))                         # (S,B,R)
    return point, gate, pred

  # ---- greedy decoding: full pointer mixing stays in-kernel ----
  oh_sys = jax.nn.one_hot(story_sys, V, dtype=bf16)                 # (B,Ls,V)
  oh_user = jax.nn.one_hot(story_user, V, dtype=bf16)               # (B,Lu,V)
  emb_bf = emb.astype(bf16)                                         # (V,H)

  point_r, pred_r, gate_r = pl.pallas_call(
      kernel,
      grid=grid,
      in_specs=base_specs + [
          pl.BlockSpec((bb, Ls, V), bmap),           # one-hot sys story (bf16)
          pl.BlockSpec((bb, Lu, V), bmap),           # one-hot user story (bf16)
          pl.BlockSpec((H, V), cmap),                # emb^T (bf16)
          pl.BlockSpec((V, H), cmap),                # emb (bf16)
      ] + weight_specs,
      out_specs=[
          pl.BlockSpec((None, bb, S, V), brmap),     # final_p
          pl.BlockSpec((None, bb, S, 1), brmap),     # greedy token ids
          pl.BlockSpec((bb, S, G), bmap),            # gate
      ],
      out_shape=[
          jax.ShapeDtypeStruct((R, B, S, V), f32),
          jax.ShapeDtypeStruct((R, B, S, 1), jnp.int32),
          jax.ShapeDtypeStruct((B, S, G), f32),
      ],
      scratch_shapes=scratch,
      compiler_params=compiler_params,
  )(*(base_args + [oh_sys, oh_user, emb_t, emb_bf] + weight_args))

  point = jnp.transpose(point_r, (2, 1, 0, 3))                      # (S,B,R,V)
  gate = jnp.transpose(gate_r, (1, 0, 2))                           # (S,B,G)
  pred = jnp.transpose(pred_r[..., 0], (2, 1, 0))                   # (S,B,R)
  return point, gate, pred


def reference_forward(sys_H, user_H, story_sys, story_user, sys_musk, user_musk,
                      targets, slot_att_all, slot_dec_emb_all, params,
                      R, G, use_teacher_forcing=True):
  """Pure-JAX mirror of the torch forward."""
  B, Ls, H = sys_H.shape
  V = params["emb"].shape[0]
  S = slot_att_all.shape[0]
  emb = params["emb"]
  w_ih, w_hh = params["w_ih_t"], params["w_hh_t"]
  b_ih, b_hh = params["b_ih"], params["b_hh"]
  wg, bg = params["w_gate_t"], params["b_gate"]
  wr, br = params["w_ratio"], params["b_ratio"]
  wc, bc = params["w_copy"], params["b_copy"]

  def attend(seq, cond, musk):
    scores_ = jnp.sum(seq * cond[:, None, :], axis=2) + musk
    prob = jax.nn.softmax(scores_, axis=1)
    ctx = jnp.sum(seq * prob[:, :, None], axis=1)
    return ctx, prob

  bidx = jnp.arange(B)[:, None]
  all_point, all_gate = [], []
  for si in range(S):
    cond0 = jnp.broadcast_to(slot_att_all[si], (B, H))
    h_sys, _ = attend(sys_H, cond0, sys_musk)
    h_user, _ = attend(user_H, cond0, user_musk)
    hidden = h_sys + h_user
    dec_in = jnp.broadcast_to(slot_dec_emb_all[si], (B, H))
    points, gate = [], None
    for wi in range(R):
      gi = dec_in @ w_ih + b_ih
      gh = hidden @ w_hh + b_hh
      r = jax.nn.sigmoid(gi[:, :H] + gh[:, :H])
      z = jax.nn.sigmoid(gi[:, H:2 * H] + gh[:, H:2 * H])
      n = jnp.tanh(gi[:, 2 * H:] + r * gh[:, 2 * H:])
      h_new = (1 - z) * n + z * hidden
      hidden = h_new
      dec_state = h_new
      ctx_sys, prob_sys = attend(sys_H, h_new, sys_musk)
      ctx_user, prob_user = attend(user_H, h_new, user_musk)
      M = jnp.concatenate([ctx_sys, ctx_user], -1)
      if wi == 0:
        gate = M @ wg + bg
      p_vocab = jax.nn.softmax(h_new @ emb.T, axis=1)
      p_gen = jnp.concatenate([dec_state, M, dec_in], -1)
      switch = jax.nn.sigmoid(p_gen @ wr.T + br)
      p_ctx_sys = jnp.zeros((B, V)).at[bidx, story_sys].add(prob_sys)
      p_ctx_user = jnp.zeros((B, V)).at[bidx, story_user].add(prob_user)
      c_sys = jnp.concatenate([dec_state, ctx_sys, dec_in], -1) @ wc.T + bc
      c_user = jnp.concatenate([dec_state, ctx_user, dec_in], -1) @ wc.T + bc
      pw = jax.nn.softmax(jnp.concatenate([c_sys, c_user], 1), axis=1)
      alpha, beta = pw[:, 0:1], pw[:, 1:2]
      final_p = ((1 - switch) * (alpha * p_ctx_sys + beta * p_ctx_user)
                 + switch * p_vocab)
      points.append(final_p)
      if use_teacher_forcing:
        nxt = targets[si, :, wi]
      else:
        nxt = jnp.argmax(final_p, axis=1)
      dec_in = emb[nxt]
    all_point.append(jnp.stack(points, axis=1))
    all_gate.append(gate)
  return jnp.stack(all_point, 0), jnp.stack(all_gate, 0)


if __name__ == "__main__":
  B, H, V = 2, 32, 128           # batch, hidden_size, vocab_size
  Ls, Lu = 8, 8                  # sys / user history lengths
  R = 4                          # max_res_len
  G = 3                          # nb_gate
  slots = ["hotel-area", "hotel-pricerange", "restaurant-food"]
  S = len(slots)

  keys = iter(jax.random.split(jax.random.PRNGKey(0), 32))

  sys_H = jax.random.normal(next(keys), (B, Ls, H), jnp.float32)
  user_H = jax.random.normal(next(keys), (B, Lu, H), jnp.float32)
  story_sys = jax.random.randint(next(keys), (B, Ls), 0, V, jnp.int32)
  story_user = jax.random.randint(next(keys), (B, Lu), 0, V, jnp.int32)
  sys_lens = jnp.array([Ls, Ls - 2])
  user_lens = jnp.array([Lu - 1, Lu])
  sys_musk = jnp.where(jnp.arange(Ls)[None, :] < sys_lens[:, None],
                       0.0, -1e9).astype(jnp.float32)
  user_musk = jnp.where(jnp.arange(Lu)[None, :] < user_lens[:, None],
                        0.0, -1e9).astype(jnp.float32)
  targets = jax.random.randint(next(keys), (S, B, R), 0, V, jnp.int32)

  # --- deterministic parameter init (shapes from Generator.__init__) ---
  emb = 0.1 * jax.random.normal(next(keys), (V, H), jnp.float32)
  slot_w2i = {}
  for slot in slots:
    for tok in slot.split("-"):
      if tok not in slot_w2i:
        slot_w2i[tok] = len(slot_w2i)
  slot_emb_tbl = 0.1 * jax.random.normal(next(keys), (len(slot_w2i), H),
                                         jnp.float32)
  slot_att_all = (0.1 * jax.random.normal(next(keys), (S, H), jnp.float32)
                  ).reshape(S, 1, H)
  slot_dec_emb_all = jnp.stack(
      [slot_emb_tbl[slot_w2i[s.split("-")[0]]]
       + slot_emb_tbl[slot_w2i[s.split("-")[1]]] for s in slots],
      axis=0).reshape(S, 1, H)

  params = dict(
      emb=emb,
      w_ih_t=0.1 * jax.random.normal(next(keys), (H, 3 * H), jnp.float32),
      w_hh_t=0.1 * jax.random.normal(next(keys), (H, 3 * H), jnp.float32),
      b_ih=0.1 * jax.random.normal(next(keys), (1, 3 * H), jnp.float32),
      b_hh=0.1 * jax.random.normal(next(keys), (1, 3 * H), jnp.float32),
      w_gate_t=0.1 * jax.random.normal(next(keys), (2 * H, G), jnp.float32),
      b_gate=0.1 * jax.random.normal(next(keys), (1, G), jnp.float32),
      w_ratio=0.1 * jax.random.normal(next(keys), (1, 4 * H), jnp.float32),
      b_ratio=0.1 * jax.random.normal(next(keys), (1, 1), jnp.float32),
      w_copy=0.1 * jax.random.normal(next(keys), (1, 3 * H), jnp.float32),
      b_copy=0.1 * jax.random.normal(next(keys), (1, 1), jnp.float32),
  )

  # --- teacher-forcing path (value-checked against the pure-JAX reference) --
  point, gate, pred = generator_forward(
      sys_H, user_H, story_sys, story_user, sys_musk, user_musk,
      targets, slot_att_all, slot_dec_emb_all, params,
      max_res_len=R, nb_gate=G, use_teacher_forcing=True, batch_block=1)
  jax.block_until_ready(point)
  jax.block_until_ready(gate)
  jax.block_until_ready(pred)

  ref_point, ref_gate = reference_forward(
      sys_H, user_H, story_sys, story_user, sys_musk, user_musk,
      targets, slot_att_all, slot_dec_emb_all, params,
      R, G, use_teacher_forcing=True)

  assert point.shape == (S, B, R, V) and gate.shape == (S, B, G)
  assert pred.shape == (S, B, R)
  assert jnp.allclose(point, ref_point, rtol=1e-2, atol=2e-2)
  assert jnp.allclose(gate, ref_gate, rtol=1e-2, atol=2e-2)

  # --- greedy path (step 0 is teacher-forcing independent; later steps may
  #     diverge by argmax choice, so only step 0 / gate are value-checked) ---
  point_g, gate_g, pred_g = generator_forward(
      sys_H, user_H, story_sys, story_user, sys_musk, user_musk,
      targets, slot_att_all, slot_dec_emb_all, params,
      max_res_len=R, nb_gate=G, use_teacher_forcing=False, batch_block=1)
  jax.block_until_ready(point_g)
  assert point_g.shape == (S, B, R, V) and gate_g.shape == (S, B, G)
  assert pred_g.shape == (S, B, R)
  assert bool(jnp.all(jnp.isfinite(point_g)))
  assert bool(jnp.all((pred_g >= 0) & (pred_g < V)))
  assert jnp.allclose(gate_g, ref_gate, rtol=1e-2, atol=2e-2)
  assert jnp.allclose(point_g[:, :, 0, :], ref_point[:, :, 0, :],
                      rtol=1e-2, atol=2e-2)

  print("KERNEL_OK")
</pallas_src>

<mosaic_0001>
module attributes {stable_mosaic.version = 11 : i64} {
  func.func @kernel(%arg0: i32, %arg1: i32, %arg2: memref<1x3x32xf32, #tpu.memory_space<vmem>>, %arg3: memref<1x3x32xf32, #tpu.memory_space<vmem>>, %arg4: memref<1x8x32xf32, #tpu.memory_space<vmem>>, %arg5: memref<1x32x8xf32, #tpu.memory_space<vmem>>, %arg6: memref<1x8x32xf32, #tpu.memory_space<vmem>>, %arg7: memref<1x32x8xf32, #tpu.memory_space<vmem>>, %arg8: memref<1x1x8xf32, #tpu.memory_space<vmem>>, %arg9: memref<1x1x8xf32, #tpu.memory_space<vmem>>, %arg10: memref<1x1x3x32xbf16, #tpu.memory_space<vmem>>, %arg11: memref<32x128xbf16, #tpu.memory_space<vmem>>, %arg12: memref<32x96xf32, #tpu.memory_space<vmem>>, %arg13: memref<32x96xf32, #tpu.memory_space<vmem>>, %arg14: memref<1x96xf32, #tpu.memory_space<vmem>>, %arg15: memref<1x96xf32, #tpu.memory_space<vmem>>, %arg16: memref<64x3xf32, #tpu.memory_space<vmem>>, %arg17: memref<1x3xf32, #tpu.memory_space<vmem>>, %arg18: memref<128x3xf32, #tpu.memory_space<vmem>>, %arg19: memref<1x3xf32, #tpu.memory_space<vmem>>, %arg20: memref<1x1x3x128xf32, #tpu.memory_space<vmem>>, %arg21: memref<1x1x3x8xf32, #tpu.memory_space<vmem>>, %arg22: memref<1x1x3x8xf32, #tpu.memory_space<vmem>>, %arg23: memref<1x1x3x3xf32, #tpu.memory_space<vmem>>, %arg24: memref<1x3x3xf32, #tpu.memory_space<vmem>>, %arg25: memref<3x32xf32, #tpu.memory_space<vmem>>, %arg26: memref<3x32xf32, #tpu.memory_space<vmem>>) attributes {dimension_semantics = [#tpu.dimension_semantics<parallel>, #tpu.dimension_semantics<arbitrary>], iteration_bounds = array<i64: 2, 4>, scalar_prefetch = 0 : i64, scratch_operands = 2 : i64, tpu.core_type = #tpu.core_type<tc>, window_params = [{transform_indices = @transform_0, window_bounds = array<i64: 1, 3, 32>}, {transform_indices = @transform_1, window_bounds = array<i64: 1, 3, 32>}, {transform_indices = @transform_2, window_bounds = array<i64: 1, 8, 32>}, {transform_indices = @transform_3, window_bounds = array<i64: 1, 32, 8>}, {transform_indices = @transform_4, window_bounds = array<i64: 1, 8, 32>}, {transform_indices = @transform_5, window_bounds = array<i64: 1, 32, 8>}, {transform_indices = @transform_6, window_bounds = array<i64: 1, 1, 8>}, {transform_indices = @transform_7, window_bounds = array<i64: 1, 1, 8>}, {transform_indices = @transform_8, window_bounds = array<i64: 1, 1, 3, 32>}, {pipeline_mode = #tpu.pipeline_mode<synchronous>, transform_indices = @transform_9, window_bounds = array<i64: 32, 128>}, {pipeline_mode = #tpu.pipeline_mode<synchronous>, transform_indices = @transform_10, window_bounds = array<i64: 32, 96>}, {pipeline_mode = #tpu.pipeline_mode<synchronous>, transform_indices = @transform_11, window_bounds = array<i64: 32, 96>}, {pipeline_mode = #tpu.pipeline_mode<synchronous>, transform_indices = @transform_12, window_bounds = array<i64: 1, 96>}, {pipeline_mode = #tpu.pipeline_mode<synchronous>, transform_indices = @transform_13, window_bounds = array<i64: 1, 96>}, {pipeline_mode = #tpu.pipeline_mode<synchronous>, transform_indices = @transform_14, window_bounds = array<i64: 64, 3>}, {pipeline_mode = #tpu.pipeline_mode<synchronous>, transform_indices = @transform_15, window_bounds = array<i64: 1, 3>}, {pipeline_mode = #tpu.pipeline_mode<synchronous>, transform_indices = @transform_16, window_bounds = array<i64: 128, 3>}, {pipeline_mode = #tpu.pipeline_mode<synchronous>, transform_indices = @transform_17, window_bounds = array<i64: 1, 3>}, {transform_indices = @transform_18, window_bounds = array<i64: 1, 1, 3, 128>}, {transform_indices = @transform_19, window_bounds = array<i64: 1, 1, 3, 8>}, {transform_indices = @transform_20, window_bounds = array<i64: 1, 1, 3, 8>}, {transform_indices = @transform_21, window_bounds = array<i64: 1, 1, 3, 3>}, {transform_indices = @transform_22, window_bounds = array<i64: 1, 3, 3>}]} {
    %c0 = arith.constant 0 : index
    %c0_0 = arith.constant 0 : index
    %c0_1 = arith.constant 0 : index
    %0 = vector.load %arg4[%c0, %c0_0, %c0_1] : memref<1x8x32xf32, #tpu.memory_space<vmem>>, vector<1x8x32xf32>
    %c0_2 = arith.constant 0 : index
    %c0_3 = arith.constant 0 : index
    %c0_4 = arith.constant 0 : index
    %1 = vector.load %arg5[%c0_2, %c0_3, %c0_4] : memref<1x32x8xf32, #tpu.memory_space<vmem>>, vector<1x32x8xf32>
    %c0_5 = arith.constant 0 : index
    %c0_6 = arith.constant 0 : index
    %c0_7 = arith.constant 0 : index
    %2 = vector.load %arg6[%c0_5, %c0_6, %c0_7] : memref<1x8x32xf32, #tpu.memory_space<vmem>>, vector<1x8x32xf32>
    %c0_8 = arith.constant 0 : index
    %c0_9 = arith.constant 0 : index
    %c0_10 = arith.constant 0 : index
    %3 = vector.load %arg7[%c0_8, %c0_9, %c0_10] : memref<1x32x8xf32, #tpu.memory_space<vmem>>, vector<1x32x8xf32>
    %c0_11 = arith.constant 0 : index
    %c0_12 = arith.constant 0 : index
    %c0_13 = arith.constant 0 : index
    %4 = vector.load %arg8[%c0_11, %c0_12, %c0_13] : memref<1x1x8xf32, #tpu.memory_space<vmem>>, vector<1x1x8xf32>
    %c0_14 = arith.constant 0 : index
    %c0_15 = arith.constant 0 : index
    %c0_16 = arith.constant 0 : index
    %5 = vector.load %arg9[%c0_14, %c0_15, %c0_16] : memref<1x1x8xf32, #tpu.memory_space<vmem>>, vector<1x1x8xf32>
    %c0_i32 = arith.constant 0 : i32
    %6 = arith.cmpi eq, %arg1, %c0_i32 : i32
    %7 = arith.extui %6 : i1 to i32
    %c0_i32_17 = arith.constant 0 : i32
    %8 = arith.cmpi ne, %7, %c0_i32_17 : i32
    scf.if %8 {
      %c0_82 = arith.constant 0 : index
      %c0_83 = arith.constant 0 : index
      %c0_84 = arith.constant 0 : index
      %118 = vector.load %arg2[%c0_82, %c0_83, %c0_84] : memref<1x3x32xf32, #tpu.memory_space<vmem>>, vector<1x3x32xf32>
      "tpu.trace_start"() <{level = 10 : i32, message = "bsh,bhl->bsl"}> : () -> ()
      %cst_85 = arith.constant dense<0.000000e+00> : vector<1x3x8xf32>
      %119 = tpu.matmul %118, %1, %cst_85 {dimension_numbers = #tpu.dot_dimension_numbers<[2], [1], [1], [2], [0, 0, 0, 1, 1, 2], [0], [0]>} : vector<1x3x32xf32>, vector<1x32x8xf32>, vector<1x3x8xf32> -> vector<1x3x8xf32>
      "tpu.trace_stop"() : () -> ()
      %120 = vector.broadcast %4 : vector<1x1x8xf32> to vector<1x3x8xf32>
      %121 = arith.addf %119, %120 : vector<1x3x8xf32>
      %cst_86 = arith.constant dense<0xFF800000> : vector<1x3xf32>
      %122 = vector.multi_reduction <maximumf>, %121, %cst_86 [2] : vector<1x3x8xf32> to vector<1x3xf32>
      %123 = vector.shape_cast %122 : vector<1x3xf32> to vector<1x3x1xf32>
      %124 = vector.broadcast %123 : vector<1x3x1xf32> to vector<1x3x8xf32>
      %125 = arith.subf %121, %124 : vector<1x3x8xf32>
      %126 = math.exp %125 : vector<1x3x8xf32>
      %cst_87 = arith.constant dense<0.000000e+00> : vector<1x3xf32>
      %127 = vector.multi_reduction <add>, %126, %cst_87 [2] : vector<1x3x8xf32> to vector<1x3xf32>
      %128 = vector.shape_cast %127 : vector<1x3xf32> to vector<1x3x1xf32>
      %129 = tpu.reciprocal %128 {approx = true} : vector<1x3x1xf32> -> vector<1x3x1xf32>
      %130 = vector.broadcast %129 : vector<1x3x1xf32> to vector<1x3x8xf32>
      %131 = arith.mulf %126, %130 : vector<1x3x8xf32>
      "tpu.trace_start"() <{level = 10 : i32, message = "bsl,blh->bsh"}> : () -> ()
      %cst_88 = arith.constant dense<0.000000e+00> : vector<1x3x32xf32>
      %132 = tpu.matmul %131, %0, %cst_88 {dimension_numbers = #tpu.dot_dimension_numbers<[2], [1], [1], [2], [0, 0, 0, 1, 1, 2], [0], [0]>} : vector<1x3x8xf32>, vector<1x8x32xf32>, vector<1x3x32xf32> -> vector<1x3x32xf32>
      "tpu.trace_stop"() : () -> ()
      "tpu.trace_start"() <{level = 10 : i32, message = "bsh,bhl->bsl"}> : () -> ()
      %cst_89 = arith.constant dense<0.000000e+00> : vector<1x3x8xf32>
      %133 = tpu.matmul %118, %3, %cst_89 {dimension_numbers = #tpu.dot_dimension_numbers<[2], [1], [1], [2], [0, 0, 0, 1, 1, 2], [0], [0]>} : vector<1x3x32xf32>, vector<1x32x8xf32>, vector<1x3x8xf32> -> vector<1x3x8xf32>
      "tpu.trace_stop"() : () -> ()
      %134 = vector.broadcast %5 : vector<1x1x8xf32> to vector<1x3x8xf32>
      %135 = arith.addf %133, %134 : vector<1x3x8xf32>
      %cst_90 = arith.constant dense<0xFF800000> : vector<1x3xf32>
      %136 = vector.multi_reduction <maximumf>, %135, %cst_90 [2] : vector<1x3x8xf32> to vector<1x3xf32>
      %137 = vector.shape_cast %136 : vector<1x3xf32> to vector<1x3x1xf32>
      %138 = vector.broadcast %137 : vector<1x3x1xf32> to vector<1x3x8xf32>
      %139 = arith.subf %135, %138 : vector<1x3x8xf32>
      %140 = math.exp %139 : vector<1x3x8xf32>
      %cst_91 = arith.constant dense<0.000000e+00> : vector<1x3xf32>
      %141 = vector.multi_reduction <add>, %140, %cst_91 [2] : vector<1x3x8xf32> to vector<1x3xf32>
      %142 = vector.shape_cast %141 : vector<1x3xf32> to vector<1x3x1xf32>
      %143 = tpu.reciprocal %142 {approx = true} : vector<1x3x1xf32> -> vector<1x3x1xf32>
      %144 = vector.broadcast %143 : vector<1x3x1xf32> to vector<1x3x8xf32>
      %145 = arith.mulf %140, %144 : vector<1x3x8xf32>
      "tpu.trace_start"() <{level = 10 : i32, message = "bsl,blh->bsh"}> : () -> ()
      %cst_92 = arith.constant dense<0.000000e+00> : vector<1x3x32xf32>
      %146 = tpu.matmul %145, %2, %cst_92 {dimension_numbers = #tpu.dot_dimension_numbers<[2], [1], [1], [2], [0, 0, 0, 1, 1, 2], [0], [0]>} : vector<1x3x8xf32>, vector<1x8x32xf32>, vector<1x3x32xf32> -> vector<1x3x32xf32>
      "tpu.trace_stop"() : () -> ()
      %147 = arith.addf %132, %146 : vector<1x3x32xf32>
      %148 = vector.shape_cast %147 : vector<1x3x32xf32> to vector<3x32xf32>
      %c0_93 = arith.constant 0 : index
      %c0_94 = arith.constant 0 : index
      %149 = vector.load %arg25[%c0_93, %c0_94] : memref<3x32xf32, #tpu.memory_space<vmem>>, vector<3x32xf32>
      tpu.vector_store %arg25[%c0_93, %c0_94], %148 {strides = array<i32>} : memref<3x32xf32, #tpu.memory_space<vmem>>, vector<3x32xf32>,
      %c0_95 = arith.constant 0 : index
      %c0_96 = arith.constant 0 : index
      %c0_97 = arith.constant 0 : index
      %150 = vector.load %arg3[%c0_95, %c0_96, %c0_97] : memref<1x3x32xf32, #tpu.memory_space<vmem>>, vector<1x3x32xf32>
      %151 = vector.shape_cast %150 : vector<1x3x32xf32> to vector<3x32xf32>
      %c0_98 = arith.constant 0 : index
      %c0_99 = arith.constant 0 : index
      %152 = vector.load %arg26[%c0_98, %c0_99] : memref<3x32xf32, #tpu.memory_space<vmem>>, vector<3x32xf32>
      tpu.vector_store %arg26[%c0_98, %c0_99], %151 {strides = array<i32>} : memref<3x32xf32, #tpu.memory_space<vmem>>, vector<3x32xf32>,
    } else {
    }
    %c0_18 = arith.constant 0 : index
    %c0_19 = arith.constant 0 : index
    %9 = vector.load %arg25[%c0_18, %c0_19] : memref<3x32xf32, #tpu.memory_space<vmem>>, vector<3x32xf32>
    %c0_20 = arith.constant 0 : index
    %c0_21 = arith.constant 0 : index
    %10 = vector.load %arg26[%c0_20, %c0_21] : memref<3x32xf32, #tpu.memory_space<vmem>>, vector<3x32xf32>
    %c0_22 = arith.constant 0 : index
    %c0_23 = arith.constant 0 : index
    %11 = vector.load %arg12[%c0_22, %c0_23] : memref<32x96xf32, #tpu.memory_space<vmem>>, vector<32x96xf32>
    %cst = arith.constant dense<0.000000e+00> : vector<3x96xf32>
    %12 = tpu.matmul %10, %11, %cst {dimension_numbers = #tpu.dot_dimension_numbers<[1], [0], [0], [1], [0, 0, 1, 1], [], []>} : vector<3x32xf32>, vector<32x96xf32>, vector<3x96xf32> -> vector<3x96xf32>
    %c0_24 = arith.constant 0 : index
    %c0_25 = arith.constant 0 : index
    %13 = vector.load %arg14[%c0_24, %c0_25] : memref<1x96xf32, #tpu.memory_space<vmem>>, vector<1x96xf32>
    %14 = vector.broadcast %13 : vector<1x96xf32> to vector<3x96xf32>
    %15 = arith.addf %12, %14 : vector<3x96xf32>
    %c0_26 = arith.constant 0 : index
    %c0_27 = arith.constant 0 : index
    %16 = vector.load %arg13[%c0_26, %c0_27] : memref<32x96xf32, #tpu.memory_space<vmem>>, vector<32x96xf32>
    %cst_28 = arith.constant dense<0.000000e+00> : vector<3x96xf32>
    %17 = tpu.matmul %9, %16, %cst_28 {dimension_numbers = #tpu.dot_dimension_numbers<[1], [0], [0], [1], [0, 0, 1, 1], [], []>} : vector<3x32xf32>, vector<32x96xf32>, vector<3x96xf32> -> vector<3x96xf32>
    %c0_29 = arith.constant 0 : index
    %c0_30 = arith.constant 0 : index
    %18 = vector.load %arg15[%c0_29, %c0_30] : memref<1x96xf32, #tpu.memory_space<vmem>>, vector<1x96xf32>
    %19 = vector.broadcast %18 : vector<1x96xf32> to vector<3x96xf32>
    %20 = arith.addf %17, %19 : vector<3x96xf32>
    %21 = vector.extract_strided_slice %15 {offsets = [0, 0], sizes = [3, 32], strides = [1, 1]} : vector<3x96xf32> to vector<3x32xf32>
    %22 = vector.extract_strided_slice %20 {offsets = [0, 0], sizes = [3, 32], strides = [1, 1]} : vector<3x96xf32> to vector<3x32xf32>
    %23 = arith.addf %21, %22 : vector<3x32xf32>
    %24 = arith.negf %23 : vector<3x32xf32>
    %25 = math.exp %24 : vector<3x32xf32>
    %cst_31 = arith.constant 1.000000e+00 : f32
    %26 = vector.broadcast %cst_31 : f32 to vector<3x32xf32>
    %27 = arith.addf %26, %25 : vector<3x32xf32>
    %28 = arith.divf %26, %27 : vector<3x32xf32>
    %29 = vector.extract_strided_slice %15 {offsets = [0, 32], sizes = [3, 32], strides = [1, 1]} : vector<3x96xf32> to vector<3x32xf32>
    %30 = vector.extract_strided_slice %20 {offsets = [0, 32], sizes = [3, 32], strides = [1, 1]} : vector<3x96xf32> to vector<3x32xf32>
    %31 = arith.addf %29, %30 : vector<3x32xf32>
    %32 = arith.negf %31 : vector<3x32xf32>
    %33 = math.exp %32 : vector<3x32xf32>
    %cst_32 = arith.constant 1.000000e+00 : f32
    %34 = vector.broadcast %cst_32 : f32 to vector<3x32xf32>
    %35 = arith.addf %34, %33 : vector<3x32xf32>
    %36 = arith.divf %34, %35 : vector<3x32xf32>
    %37 = vector.extract_strided_slice %15 {offsets = [0, 64], sizes = [3, 32], strides = [1, 1]} : vector<3x96xf32> to vector<3x32xf32>
    %38 = vector.extract_strided_slice %20 {offsets = [0, 64], sizes = [3, 32], strides = [1, 1]} : vector<3x96xf32> to vector<3x32xf32>
    %39 = arith.mulf %28, %38 : vector<3x32xf32>
    %40 = arith.addf %37, %39 : vector<3x32xf32>
    %41 = math.tanh %40 : vector<3x32xf32>
    %cst_33 = arith.constant 1.000000e+00 : f32
    %42 = vector.broadcast %cst_33 : f32 to vector<3x32xf32>
    %43 = arith.subf %42, %36 : vector<3x32xf32>
    %44 = arith.mulf %43, %41 : vector<3x32xf32>
    %45 = arith.mulf %36, %9 : vector<3x32xf32>
    %46 = arith.addf %44, %45 : vector<3x32xf32>
    %c0_34 = arith.constant 0 : index
    %c0_35 = arith.constant 0 : index
    %47 = vector.load %arg25[%c0_34, %c0_35] : memref<3x32xf32, #tpu.memory_space<vmem>>, vector<3x32xf32>
    tpu.vector_store %arg25[%c0_34, %c0_35], %46 {strides = array<i32>} : memref<3x32xf32, #tpu.memory_space<vmem>>, vector<3x32xf32>,
    %48 = vector.shape_cast %46 : vector<3x32xf32> to vector<1x3x32xf32>
    "tpu.trace_start"() <{level = 10 : i32, message = "bsh,bhl->bsl"}> : () -> ()
    %cst_36 = arith.constant dense<0.000000e+00> : vector<1x3x8xf32>
    %49 = tpu.matmul %48, %1, %cst_36 {dimension_numbers = #tpu.dot_dimension_numbers<[2], [1], [1], [2], [0, 0, 0, 1, 1, 2], [0], [0]>} : vector<1x3x32xf32>, vector<1x32x8xf32>, vector<1x3x8xf32> -> vector<1x3x8xf32>
    "tpu.trace_stop"() : () -> ()
    %50 = vector.broadcast %4 : vector<1x1x8xf32> to vector<1x3x8xf32>
    %51 = arith.addf %49, %50 : vector<1x3x8xf32>
    %cst_37 = arith.constant dense<0xFF800000> : vector<1x3xf32>
    %52 = vector.multi_reduction <maximumf>, %51, %cst_37 [2] : vector<1x3x8xf32> to vector<1x3xf32>
    %53 = vector.shape_cast %52 : vector<1x3xf32> to vector<1x3x1xf32>
    %54 = vector.broadcast %53 : vector<1x3x1xf32> to vector<1x3x8xf32>
    %55 = arith.subf %51, %54 : vector<1x3x8xf32>
    %56 = math.exp %55 : vector<1x3x8xf32>
    %cst_38 = arith.constant dense<0.000000e+00> : vector<1x3xf32>
    %57 = vector.multi_reduction <add>, %56, %cst_38 [2] : vector<1x3x8xf32> to vector<1x3xf32>
    %58 = vector.shape_cast %57 : vector<1x3xf32> to vector<1x3x1xf32>
    %59 = tpu.reciprocal %58 {approx = true} : vector<1x3x1xf32> -> vector<1x3x1xf32>
    %60 = vector.broadcast %59 : vector<1x3x1xf32> to vector<1x3x8xf32>
    %61 = arith.mulf %56, %60 : vector<1x3x8xf32>
    "tpu.trace_start"() <{level = 10 : i32, message = "bsl,blh->bsh"}> : () -> ()
    %cst_39 = arith.constant dense<0.000000e+00> : vector<1x3x32xf32>
    %62 = tpu.matmul %61, %0, %cst_39 {dimension_numbers = #tpu.dot_dimension_numbers<[2], [1], [1], [2], [0, 0, 0, 1, 1, 2], [0], [0]>} : vector<1x3x8xf32>, vector<1x8x32xf32>, vector<1x3x32xf32> -> vector<1x3x32xf32>
    "tpu.trace_stop"() : () -> ()
    "tpu.trace_start"() <{level = 10 : i32, message = "bsh,bhl->bsl"}> : () -> ()
    %cst_40 = arith.constant dense<0.000000e+00> : vector<1x3x8xf32>
    %63 = tpu.matmul %48, %3, %cst_40 {dimension_numbers = #tpu.dot_dimension_numbers<[2], [1], [1], [2], [0, 0, 0, 1, 1, 2], [0], [0]>} : vector<1x3x32xf32>, vector<1x32x8xf32>, vector<1x3x8xf32> -> vector<1x3x8xf32>
    "tpu.trace_stop"() : () -> ()
    %64 = vector.broadcast %5 : vector<1x1x8xf32> to vector<1x3x8xf32>
    %65 = arith.addf %63, %64 : vector<1x3x8xf32>
    %cst_41 = arith.constant dense<0xFF800000> : vector<1x3xf32>
    %66 = vector.multi_reduction <maximumf>, %65, %cst_41 [2] : vector<1x3x8xf32> to vector<1x3xf32>
    %67 = vector.shape_cast %66 : vector<1x3xf32> to vector<1x3x1xf32>
    %68 = vector.broadcast %67 : vector<1x3x1xf32> to vector<1x3x8xf32>
    %69 = arith.subf %65, %68 : vector<1x3x8xf32>
    %70 = math.exp %69 : vector<1x3x8xf32>
    %cst_42 = arith.constant dense<0.000000e+00> : vector<1x3xf32>
    %71 = vector.multi_reduction <add>, %70, %cst_42 [2] : vector<1x3x8xf32> to vector<1x3xf32>
    %72 = vector.shape_cast %71 : vector<1x3xf32> to vector<1x3x1xf32>
    %73 = tpu.reciprocal %72 {approx = true} : vector<1x3x1xf32> -> vector<1x3x1xf32>
    %74 = vector.broadcast %73 : vector<1x3x1xf32> to vector<1x3x8xf32>
    %75 = arith.mulf %70, %74 : vector<1x3x8xf32>
    "tpu.trace_start"() <{level = 10 : i32, message = "bsl,blh->bsh"}> : () -> ()
    %cst_43 = arith.constant dense<0.000000e+00> : vector<1x3x32xf32>
    %76 = tpu.matmul %75, %2, %cst_43 {dimension_numbers = #tpu.dot_dimension_numbers<[2], [1], [1], [2], [0, 0, 0, 1, 1, 2], [0], [0]>} : vector<1x3x8xf32>, vector<1x8x32xf32>, vector<1x3x32xf32> -> vector<1x3x32xf32>
    "tpu.trace_stop"() : () -> ()
    %77 = vector.shape_cast %62 : vector<1x3x32xf32> to vector<3x32xf32>
    %78 = vector.shape_cast %76 : vector<1x3x32xf32> to vector<3x32xf32>
    %c0_i32_44 = arith.constant 0 : i32
    %79 = arith.cmpi eq, %arg1, %c0_i32_44 : i32
    %80 = arith.extui %79 : i1 to i32
    %c0_i32_45 = arith.constant 0 : i32
    %81 = arith.cmpi ne, %80, %c0_i32_45 : i32
    scf.if %81 {
      %c0_82 = arith.constant 0 : index
      %c0_83 = arith.constant 0 : index
      %118 = vector.load %arg16[%c0_82, %c0_83] : memref<64x3xf32, #tpu.memory_space<vmem>>, vector<32x3xf32>
      %cst_84 = arith.constant dense<0.000000e+00> : vector<3x3xf32>
      %119 = tpu.matmul %77, %118, %cst_84 {dimension_numbers = #tpu.dot_dimension_numbers<[1], [0], [0], [1], [0, 0, 1, 1], [], []>} : vector<3x32xf32>, vector<32x3xf32>, vector<3x3xf32> -> vector<3x3xf32>
      %c32_85 = arith.constant 32 : index
      %c0_86 = arith.constant 0 : index
      %120 = vector.load %arg16[%c32_85, %c0_86] : memref<64x3xf32, #tpu.memory_space<vmem>>, vector<32x3xf32>
      %cst_87 = arith.constant dense<0.000000e+00> : vector<3x3xf32>
      %121 = tpu.matmul %78, %120, %cst_87 {dimension_numbers = #tpu.dot_dimension_numbers<[1], [0], [0], [1], [0, 0, 1, 1], [], []>} : vector<3x32xf32>, vector<32x3xf32>, vector<3x3xf32> -> vector<3x3xf32>
      %122 = arith.addf %119, %121 : vector<3x3xf32>
      %c0_88 = arith.constant 0 : index
      %c0_89 = arith.constant 0 : index
      %123 = vector.load %arg17[%c0_88, %c0_89] : memref<1x3xf32, #tpu.memory_space<vmem>>, vector<1x3xf32>
      %124 = vector.broadcast %123 : vector<1x3xf32> to vector<3x3xf32>
      %125 = arith.addf %122, %124 : vector<3x3xf32>
      %126 = vector.shape_cast %125 : vector<3x3xf32> to vector<1x3x3xf32>
      %c0_90 = arith.constant 0 : index
      %c0_91 = arith.constant 0 : index
      %c0_92 = arith.constant 0 : index
      %127 = vector.load %arg24[%c0_90, %c0_91, %c0_92] : memref<1x3x3xf32, #tpu.memory_space<vmem>>, vector<1x3x3xf32>
      tpu.vector_store %arg24[%c0_90, %c0_91, %c0_92], %126 {strides = array<i32>} : memref<1x3x3xf32, #tpu.memory_space<vmem>>, vector<1x3x3xf32>,
    } else {
    }
    %c0_46 = arith.constant 0 : index
    %c0_47 = arith.constant 0 : index
    %82 = vector.load %arg18[%c0_46, %c0_47] : memref<128x3xf32, #tpu.memory_space<vmem>>, vector<32x3xf32>
    %cst_48 = arith.constant dense<0.000000e+00> : vector<3x3xf32>
    %83 = tpu.matmul %46, %82, %cst_48 {dimension_numbers = #tpu.dot_dimension_numbers<[1], [0], [0], [1], [0, 0, 1, 1], [], []>} : vector<3x32xf32>, vector<32x3xf32>, vector<3x3xf32> -> vector<3x3xf32>
    %c32 = arith.constant 32 : index
    %c0_49 = arith.constant 0 : index
    %84 = vector.load %arg18[%c32, %c0_49] : memref<128x3xf32, #tpu.memory_space<vmem>>, vector<32x3xf32>
    %cst_50 = arith.constant dense<0.000000e+00> : vector<3x3xf32>
    %85 = tpu.matmul %10, %84, %cst_50 {dimension_numbers = #tpu.dot_dimension_numbers<[1], [0], [0], [1], [0, 0, 1, 1], [], []>} : vector<3x32xf32>, vector<32x3xf32>, vector<3x3xf32> -> vector<3x3xf32>
    %86 = arith.addf %83, %85 : vector<3x3xf32>
    %c64 = arith.constant 64 : index
    %c0_51 = arith.constant 0 : index
    %87 = vector.load %arg18[%c64, %c0_51] : memref<128x3xf32, #tpu.memory_space<vmem>>, vector<32x3xf32>
    %cst_52 = arith.constant dense<0.000000e+00> : vector<3x3xf32>
    %88 = tpu.matmul %77, %87, %cst_52 {dimension_numbers = #tpu.dot_dimension_numbers<[1], [0], [0], [1], [0, 0, 1, 1], [], []>} : vector<3x32xf32>, vector<32x3xf32>, vector<3x3xf32> -> vector<3x3xf32>
    %89 = arith.addf %86, %88 : vector<3x3xf32>
    %c96 = arith.constant 96 : index
    %c0_53 = arith.constant 0 : index
    %90 = vector.load %arg18[%c96, %c0_53] : memref<128x3xf32, #tpu.memory_space<vmem>>, vector<32x3xf32>
    %cst_54 = arith.constant dense<0.000000e+00> : vector<3x3xf32>
    %91 = tpu.matmul %78, %90, %cst_54 {dimension_numbers = #tpu.dot_dimension_numbers<[1], [0], [0], [1], [0, 0, 1, 1], [], []>} : vector<3x32xf32>, vector<32x3xf32>, vector<3x3xf32> -> vector<3x3xf32>
    %92 = arith.addf %89, %91 : vector<3x3xf32>
    %c0_55 = arith.constant 0 : index
    %c0_56 = arith.constant 0 : index
    %93 = vector.load %arg19[%c0_55, %c0_56] : memref<1x3xf32, #tpu.memory_space<vmem>>, vector<1x3xf32>
    %94 = vector.broadcast %93 : vector<1x3xf32> to vector<3x3xf32>
    %95 = arith.addf %92, %94 : vector<3x3xf32>
    %96 = arith.truncf %46 : vector<3x32xf32> to vector<3x32xbf16>
    %c0_57 = arith.constant 0 : index
    %c0_58 = arith.constant 0 : index
    %97 = vector.load %arg11[%c0_57, %c0_58] : memref<32x128xbf16, #tpu.memory_space<vmem>>, vector<32x128xbf16>
    %cst_59 = arith.constant dense<0.000000e+00> : vector<3x128xf32>
    %98 = tpu.matmul %96, %97, %cst_59 {dimension_numbers = #tpu.dot_dimension_numbers<[1], [0], [0], [1], [0, 0, 1, 1], [], []>} : vector<3x32xbf16>, vector<32x128xbf16>, vector<3x128xf32> -> vector<3x128xf32>
    %99 = vector.shape_cast %98 : vector<3x128xf32> to vector<1x3x128xf32>
    %c0_60 = arith.constant 0 : index
    %c0_61 = arith.constant 0 : index
    %c0_62 = arith.constant 0 : index
    %c0_63 = arith.constant 0 : index
    %100 = vector.load %arg20[%c0_60, %c0_61, %c0_62, %c0_63] : memref<1x1x3x128xf32, #tpu.memory_space<vmem>>, vector<1x1x3x128xf32>
    %101 = vector.shape_cast %100 : vector<1x1x3x128xf32> to vector<1x3x128xf32>
    %102 = vector.shape_cast %99 : vector<1x3x128xf32> to vector<1x1x3x128xf32>
    tpu.vector_store %arg20[%c0_60, %c0_61, %c0_62, %c0_63], %102 {strides = array<i32>} : memref<1x1x3x128xf32, #tpu.memory_space<vmem>>, vector<1x1x3x128xf32>,
    %c0_64 = arith.constant 0 : index
    %c0_65 = arith.constant 0 : index
    %c0_66 = arith.constant 0 : index
    %c0_67 = arith.constant 0 : index
    %103 = vector.load %arg21[%c0_64, %c0_65, %c0_66, %c0_67] : memref<1x1x3x8xf32, #tpu.memory_space<vmem>>, vector<1x1x3x8xf32>
    %104 = vector.shape_cast %103 : vector<1x1x3x8xf32> to vector<1x3x8xf32>
    %105 = vector.shape_cast %61 : vector<1x3x8xf32> to vector<1x1x3x8xf32>
    tpu.vector_store %arg21[%c0_64, %c0_65, %c0_66, %c0_67], %105 {strides = array<i32>} : memref<1x1x3x8xf32, #tpu.memory_space<vmem>>, vector<1x1x3x8xf32>,
    %c0_68 = arith.constant 0 : index
    %c0_69 = arith.constant 0 : index
    %c0_70 = arith.constant 0 : index
    %c0_71 = arith.constant 0 : index
    %106 = vector.load %arg22[%c0_68, %c0_69, %c0_70, %c0_71] : memref<1x1x3x8xf32, #tpu.memory_space<vmem>>, vector<1x1x3x8xf32>
    %107 = vector.shape_cast %106 : vector<1x1x3x8xf32> to vector<1x3x8xf32>
    %108 = vector.shape_cast %75 : vector<1x3x8xf32> to vector<1x1x3x8xf32>
    tpu.vector_store %arg22[%c0_68, %c0_69, %c0_70, %c0_71], %108 {strides = array<i32>} : memref<1x1x3x8xf32, #tpu.memory_space<vmem>>, vector<1x1x3x8xf32>,
    %109 = vector.shape_cast %95 : vector<3x3xf32> to vector<1x3x3xf32>
    %c0_72 = arith.constant 0 : index
    %c0_73 = arith.constant 0 : index
    %c0_74 = arith.constant 0 : index
    %c0_75 = arith.constant 0 : index
    %110 = vector.load %arg23[%c0_72, %c0_73, %c0_74, %c0_75] : memref<1x1x3x3xf32, #tpu.memory_space<vmem>>, vector<1x1x3x3xf32>
    %111 = vector.shape_cast %110 : vector<1x1x3x3xf32> to vector<1x3x3xf32>
    %112 = vector.shape_cast %109 : vector<1x3x3xf32> to vector<1x1x3x3xf32>
    tpu.vector_store %arg23[%c0_72, %c0_73, %c0_74, %c0_75], %112 {strides = array<i32>} : memref<1x1x3x3xf32, #tpu.memory_space<vmem>>, vector<1x1x3x3xf32>,
    %c0_76 = arith.constant 0 : index
    %c0_77 = arith.constant 0 : index
    %c0_78 = arith.constant 0 : index
    %c0_79 = arith.constant 0 : index
    %113 = vector.load %arg10[%c0_76, %c0_77, %c0_78, %c0_79] : memref<1x1x3x32xbf16, #tpu.memory_space<vmem>>, vector<1x1x3x32xbf16>
    %114 = vector.shape_cast %113 : vector<1x1x3x32xbf16> to vector<1x3x32xbf16>
    %115 = arith.extf %114 : vector<1x3x32xbf16> to vector<1x3x32xf32>
    %116 = vector.shape_cast %115 : vector<1x3x32xf32> to vector<3x32xf32>
    %c0_80 = arith.constant 0 : index
    %c0_81 = arith.constant 0 : index
    %117 = vector.load %arg26[%c0_80, %c0_81] : memref<3x32xf32, #tpu.memory_space<vmem>>, vector<3x32xf32>
    tpu.vector_store %arg26[%c0_80, %c0_81], %116 {strides = array<i32>} : memref<3x32xf32, #tpu.memory_space<vmem>>, vector<3x32xf32>,
    return
  }
  func.func @transform_0(%arg0: i32, %arg1: i32) -> (i32, i32, i32) {
    %c0_i32 = arith.constant 0 : i32
    %c0_i32_0 = arith.constant 0 : i32
    %c0_i32_1 = arith.constant 0 : i32
    return %arg0, %c0_i32, %c0_i32_0 : i32, i32, i32
  }
  func.func @transform_1(%arg0: i32, %arg1: i32) -> (i32, i32, i32) {
    %c0_i32 = arith.constant 0 : i32
    %c0_i32_0 = arith.constant 0 : i32
    %c0_i32_1 = arith.constant 0 : i32
    return %arg0, %c0_i32, %c0_i32_0 : i32, i32, i32
  }
  func.func @transform_2(%arg0: i32, %arg1: i32) -> (i32, i32, i32) {
    %c0_i32 = arith.constant 0 : i32
    %c0_i32_0 = arith.constant 0 : i32
    %c0_i32_1 = arith.constant 0 : i32
    return %arg0, %c0_i32, %c0_i32_0 : i32, i32, i32
  }
  func.func @transform_3(%arg0: i32, %arg1: i32) -> (i32, i32, i32) {
    %c0_i32 = arith.constant 0 : i32
    %c0_i32_0 = arith.constant 0 : i32
    %c0_i32_1 = arith.constant 0 : i32
    return %arg0, %c0_i32, %c0_i32_0 : i32, i32, i32
  }
  func.func @transform_4(%arg0: i32, %arg1: i32) -> (i32, i32, i32) {
    %c0_i32 = arith.constant 0 : i32
    %c0_i32_0 = arith.constant 0 : i32
    %c0_i32_1 = arith.constant 0 : i32
    return %arg0, %c0_i32, %c0_i32_0 : i32, i32, i32
  }
  func.func @transform_5(%arg0: i32, %arg1: i32) -> (i32, i32, i32) {
    %c0_i32 = arith.constant 0 : i32
    %c0_i32_0 = arith.constant 0 : i32
    %c0_i32_1 = arith.constant 0 : i32
    return %arg0, %c0_i32, %c0_i32_0 : i32, i32, i32
  }
  func.func @transform_6(%arg0: i32, %arg1: i32) -> (i32, i32, i32) {
    %c0_i32 = arith.constant 0 : i32
    %c0_i32_0 = arith.constant 0 : i32
    %c0_i32_1 = arith.constant 0 : i32
    return %arg0, %c0_i32, %c0_i32_0 : i32, i32, i32
  }
  func.func @transform_7(%arg0: i32, %arg1: i32) -> (i32, i32, i32) {
    %c0_i32 = arith.constant 0 : i32
    %c0_i32_0 = arith.constant 0 : i32
    %c0_i32_1 = arith.constant 0 : i32
    return %arg0, %c0_i32, %c0_i32_0 : i32, i32, i32
  }
  func.func @transform_8(%arg0: i32, %arg1: i32) -> (i32, i32, i32, i32) {
    %c0_i32 = arith.constant 0 : i32
    %c0_i32_0 = arith.constant 0 : i32
    %c0_i32_1 = arith.constant 0 : i32
    return %arg1, %arg0, %c0_i32, %c0_i32_0 : i32, i32, i32, i32
  }
  func.func @transform_9(%arg0: i32, %arg1: i32) -> (i32, i32) {
    %c0_i32 = arith.constant 0 : i32
    %c0_i32_0 = arith.constant 0 : i32
    %c0_i32_1 = arith.constant 0 : i32
    return %c0_i32, %c0_i32_0 : i32, i32
  }
  func.func @transform_10(%arg0: i32, %arg1: i32) -> (i32, i32) {
    %c0_i32 = arith.constant 0 : i32
    %c0_i32_0 = arith.constant 0 : i32
    %c0_i32_1 = arith.constant 0 : i32
    return %c0_i32, %c0_i32_0 : i32, i32
  }
  func.func @transform_11(%arg0: i32, %arg1: i32) -> (i32, i32) {
    %c0_i32 = arith.constant 0 : i32
    %c0_i32_0 = arith.constant 0 : i32
    %c0_i32_1 = arith.constant 0 : i32
    return %c0_i32, %c0_i32_0 : i32, i32
  }
  func.func @transform_12(%arg0: i32, %arg1: i32) -> (i32, i32) {
    %c0_i32 = arith.constant 0 : i32
    %c0_i32_0 = arith.constant 0 : i32
    %c0_i32_1 = arith.constant 0 : i32
    return %c0_i32, %c0_i32_0 : i32, i32
  }
  func.func @transform_13(%arg0: i32, %arg1: i32) -> (i32, i32) {
    %c0_i32 = arith.constant 0 : i32
    %c0_i32_0 = arith.constant 0 : i32
    %c0_i32_1 = arith.constant 0 : i32
    return %c0_i32, %c0_i32_0 : i32, i32
  }
  func.func @transform_14(%arg0: i32, %arg1: i32) -> (i32, i32) {
    %c0_i32 = arith.constant 0 : i32
    %c0_i32_0 = arith.constant 0 : i32
    %c0_i32_1 = arith.constant 0 : i32
    return %c0_i32, %c0_i32_0 : i32, i32
  }
  func.func @transform_15(%arg0: i32, %arg1: i32) -> (i32, i32) {
    %c0_i32 = arith.constant 0 : i32
    %c0_i32_0 = arith.constant 0 : i32
    %c0_i32_1 = arith.constant 0 : i32
    return %c0_i32, %c0_i32_0 : i32, i32
  }
  func.func @transform_16(%arg0: i32, %arg1: i32) -> (i32, i32) {
    %c0_i32 = arith.constant 0 : i32
    %c0_i32_0 = arith.constant 0 : i32
    %c0_i32_1 = arith.constant 0 : i32
    return %c0_i32, %c0_i32_0 : i32, i32
  }
  func.func @transform_17(%arg0: i32, %arg1: i32) -> (i32, i32) {
    %c0_i32 = arith.constant 0 : i32
    %c0_i32_0 = arith.constant 0 : i32
    %c0_i32_1 = arith.constant 0 : i32
    return %c0_i32, %c0_i32_0 : i32, i32
  }
  func.func @transform_18(%arg0: i32, %arg1: i32) -> (i32, i32, i32, i32) {
    %c0_i32 = arith.constant 0 : i32
    %c0_i32_0 = arith.constant 0 : i32
    %c0_i32_1 = arith.constant 0 : i32
    return %arg1, %arg0, %c0_i32, %c0_i32_0 : i32, i32, i32, i32
  }
  func.func @transform_19(%arg0: i32, %arg1: i32) -> (i32, i32, i32, i32) {
    %c0_i32 = arith.constant 0 : i32
    %c0_i32_0 = arith.constant 0 : i32
    %c0_i32_1 = arith.constant 0 : i32
    return %arg1, %arg0, %c0_i32, %c0_i32_0 : i32, i32, i32, i32
  }
  func.func @transform_20(%arg0: i32, %arg1: i32) -> (i32, i32, i32, i32) {
    %c0_i32 = arith.constant 0 : i32
    %c0_i32_0 = arith.constant 0 : i32
    %c0_i32_1 = arith.constant 0 : i32
    return %arg1, %arg0, %c0_i32, %c0_i32_0 : i32, i32, i32, i32
  }
  func.func @transform_21(%arg0: i32, %arg1: i32) -> (i32, i32, i32, i32) {
    %c0_i32 = arith.constant 0 : i32
    %c0_i32_0 = arith.constant 0 : i32
    %c0_i32_1 = arith.constant 0 : i32
    return %arg1, %arg0, %c0_i32, %c0_i32_0 : i32, i32, i32, i32
  }
  func.func @transform_22(%arg0: i32, %arg1: i32) -> (i32, i32, i32) {
    %c0_i32 = arith.constant 0 : i32
    %c0_i32_0 = arith.constant 0 : i32
    %c0_i32_1 = arith.constant 0 : i32
    return %arg0, %c0_i32, %c0_i32_0 : i32, i32, i32
  }
}

</mosaic_0001>

<llo_original>
// kernel: generator_forward.1
$region0: #{generator_forward.1}
  #allocation0 [shape = 'u32[]', space=smem, size = 0x4, offset = 0x4, fixed_abs, tag = 'smem constant byte address 0x4 - core index']
  #allocation1 [shape = 'u32[144,128]{1,0:T(1,128)}', space=vmem, size = 0x12000, scoped, tag = 'internal scratch']
  #allocation2 [shape = 'f32[3,32]{1,0:T(4,128)}', space=vmem, size = 0x800, scoped, tag = 'scratch operand']
  #allocation3 [shape = 'f32[3,32]{1,0:T(4,128)}', space=vmem, size = 0x800, scoped, tag = 'scratch operand']
  %s0 = inlined_call_operand.vmem [shape: f32[2,3,32], index: 0, kind: input, shape index: {}]
  %s1 = inlined_call_operand.vmem [shape: f32[2,3,32], index: 1, kind: input, shape index: {}]
  %s2 = inlined_call_operand.vmem [shape: f32[2,8,32], index: 2, kind: input, shape index: {}]
  %s3 = inlined_call_operand.vmem [shape: f32[2,32,8], index: 3, kind: input, shape index: {}]
  %s4 = inlined_call_operand.vmem [shape: f32[2,8,32], index: 4, kind: input, shape index: {}]
  %s5 = inlined_call_operand.vmem [shape: f32[2,32,8], index: 5, kind: input, shape index: {}]
  %s6 = inlined_call_operand.vmem [shape: f32[2,1,8], index: 6, kind: input, shape index: {}]
  %s7 = inlined_call_operand.vmem [shape: f32[2,1,8], index: 7, kind: input, shape index: {}]
  %s8 = inlined_call_operand.vmem [shape: bf16[4,2,3,32], index: 8, kind: input, shape index: {}]
  %s9 = inlined_call_operand.vmem [shape: bf16[32,128], index: 9, kind: input, shape index: {}]
  %s10 = inlined_call_operand.vmem [shape: f32[32,96], index: 10, kind: input, shape index: {}]
  %s11 = inlined_call_operand.vmem [shape: f32[32,96], index: 11, kind: input, shape index: {}]
  %s12 = inlined_call_operand.vmem [shape: f32[1,96], index: 12, kind: input, shape index: {}]
  %s13 = inlined_call_operand.vmem [shape: f32[1,96], index: 13, kind: input, shape index: {}]
  %s14 = inlined_call_operand.vmem [shape: f32[64,3], index: 14, kind: input, shape index: {}]
  %s15 = inlined_call_operand.vmem [shape: f32[1,3], index: 15, kind: input, shape index: {}]
  %s16 = inlined_call_operand.vmem [shape: f32[128,3], index: 16, kind: input, shape index: {}]
  %s17 = inlined_call_operand.vmem [shape: f32[1,3], index: 17, kind: input, shape index: {}]
  %s18 = inlined_call_operand.vmem [shape: f32[4,2,3,128], index: 18, kind: output, shape index: {0}]
  %s19 = inlined_call_operand.vmem [shape: f32[4,2,3,8], index: 19, kind: output, shape index: {1}]
  %s20 = inlined_call_operand.vmem [shape: f32[4,2,3,8], index: 20, kind: output, shape index: {2}]
  %s21 = inlined_call_operand.vmem [shape: f32[4,2,3,3], index: 21, kind: output, shape index: {3}]
  %s22 = inlined_call_operand.vmem [shape: f32[2,3,3], index: 22, kind: output, shape index: {4}]
  %23 = xla_tuple %s18, %s19, %s20, %s21, %s22
  %s24 = sld [smem:[#allocation0]]
  $region145: #{generator_forward.1} parent=0
    _
  %s26 = ssub.s32 1, %s24
  %s27 = scalar_select 0, %s26, %s24
  loop: start=0, step=1, limit=10
  $region2: #{generator_forward.1} parent=0 // loop_pre_header
    _
  $region3: #{generator_forward.1} parent=0 // loop_header
    %s29 = sphi 0, %s33
    %p30 = scmp.ge.s32.totalorder %s29, 10
    %s36 = sphi 0, %s48
    %s37 = sphi 0, %s44
    %s38 = sphi 0, %s36
    %s39 = sphi 0, %s37
    %s40 = sphi 0, %s38
    %s41 = sphi 0, %s39
    %s51 = sphi 0, %s53
    %s54 = sphi 0, %s51
    %s55 = sphi 0, %s54
    %s71 = sphi 0, %s55
    %s77 = sphi 0, %s79
    %s80 = sphi 0, %s77
    %s81 = sphi 0, %s80
    %s97 = sphi 0, %s81
    %s103 = sphi 0, %s105
    %s106 = sphi 0, %s103
    %s107 = sphi 0, %s106
    %s123 = sphi 0, %s107
    %s129 = sphi 0, %s131
    %s132 = sphi 0, %s129
    %s133 = sphi 0, %s132
    %s149 = sphi 0, %s133
    %s155 = sphi 0, %s157
    %s158 = sphi 0, %s155
    %s159 = sphi 0, %s158
    %s175 = sphi 0, %s159
    %s181 = sphi 0, %s183
    %s184 = sphi 0, %s181
    %s185 = sphi 0, %s184
    %s201 = sphi 0, %s185
    %s207 = sphi 0, %s209
    %s210 = sphi 0, %s207
    %s211 = sphi 0, %s210
    %s227 = sphi 0, %s211
    %s233 = sphi 0, %s235
    %s236 = sphi 0, %s233
    %s237 = sphi 0, %s236
    %s253 = sphi 0, %s237
    %s261 = sphi 0, %s263
    %s264 = sphi 0, %s261
    %s265 = sphi 0, %s264
    %s281 = sphi 0, %s265
    %s285 = sphi 0, %s285
    %s287 = sphi 0, %s285
    %s288 = sphi 0, %s287
    %s302 = sphi 0, %s288
    %s306 = sphi 0, %s306
    %s308 = sphi 0, %s306
    %s309 = sphi 0, %s308
    %s323 = sphi 0, %s309
    %s327 = sphi 0, %s327
    %s329 = sphi 0, %s327
    %s330 = sphi 0, %s329
    %s344 = sphi 0, %s330
    %s348 = sphi 0, %s348
    %s350 = sphi 0, %s348
    %s351 = sphi 0, %s350
    %s365 = sphi 0, %s351
    %s369 = sphi 0, %s369
    %s371 = sphi 0, %s369
    %s372 = sphi 0, %s371
    %s386 = sphi 0, %s372
    %s390 = sphi 0, %s390
    %s392 = sphi 0, %s390
    %s393 = sphi 0, %s392
    %s407 = sphi 0, %s393
    %s411 = sphi 0, %s411
    %s413 = sphi 0, %s411
    %s414 = sphi 0, %s413
    %s428 = sphi 0, %s414
    %s432 = sphi 0, %s432
    %s434 = sphi 0, %s432
    %s435 = sphi 0, %s434
    %s449 = sphi 0, %s435
    %s453 = sphi 0, %s453
    %s455 = sphi 0, %s453
    %s456 = sphi 0, %s455
    %s470 = sphi 0, %s456
    %s478 = sphi 0, %s480
    %s481 = sphi 0, %s478
    %s482 = sphi 0, %s481
    %s498 = sphi 0, %s482
    %s506 = sphi 0, %s508
    %s509 = sphi 0, %s506
    %s510 = sphi 0, %s509
    %s526 = sphi 0, %s510
    %s534 = sphi 0, %s536
    %s537 = sphi 0, %s534
    %s538 = sphi 0, %s537
    %s554 = sphi 0, %s538
    %s562 = sphi 0, %s564
    %s565 = sphi 0, %s562
    %s566 = sphi 0, %s565
    %s582 = sphi 0, %s566
    %s588 = sphi 0, %s590
    %s591 = sphi 0, %s588
    %s592 = sphi 0, %s591
    %s608 = sphi 0, %s592
  $region4: #{generator_forward.1} parent=0 // loop_header_branch
    %32 = sbr.rel (%p30) target = $region8
  $region5: #{generator_forward.1} parent=0 // loop_body
    %s34 = ssub.s32 %s29, 1
    %s35 = ssub.s32 %s29, 2
    %s42 = sadd.s32 1, %s37
    %p43 = scmp.ge.s32.totalorder %s42, 4
    %s44 = scalar_select %p43, 0, %s42
    %s45 = sadd.s32 1, %s36
    %s46 = scalar_select %p43, %s45, %s36
    %p47 = scmp.ge.s32.totalorder %s46, 2
    %s48 = scalar_select %p47, 0, %s46
    %s49 = ssub.s32 %s36, %s48
    %p50 = scmp.eq.s32.totalorder %s49, 0
    %s52 = sadd.s32 %s51, 1
    %s53 = scalar_select %p50, %s51, %s52
    %p56 = pneg %p50
    %p57 = scmp.eq.s32.totalorder %s29, 7
    %p58 = por %p56, %p57
    %p59 = scmp.ne.s32.totalorder %s51, %s54
    %p60 = scmp.eq.s32.totalorder %s29, 0
    %p61 = por %p59, %p60
    %p62 = scmp.ne.s32.totalorder %s51, %s54
    %p63 = scmp.eq.s32.totalorder %s34, 7
    %p64 = por %p62, %p63
    %p65 = scmp.ne.s32.totalorder %s54, %s55
    %p66 = scmp.eq.s32.totalorder %s34, 0
    %p67 = por %p65, %p66
    %p68 = scmp.ne.s32.totalorder %s54, %s55
    %p69 = scmp.eq.s32.totalorder %s35, 7
    %p70 = por %p68, %p69
    %p72 = scmp.ne.s32.totalorder %s55, %s71
    %p73 = scmp.eq.s32.totalorder %s35, 0
    %p74 = por %p72, %p73
    %s75 = ssub.s32 %s36, %s48
    %p76 = scmp.eq.s32.totalorder %s75, 0
    %s78 = sadd.s32 %s77, 1
    %s79 = scalar_select %p76, %s77, %s78
    %p82 = pneg %p76
    %p83 = scmp.eq.s32.totalorder %s29, 7
    %p84 = por %p82, %p83
    %p85 = scmp.ne.s32.totalorder %s77, %s80
    %p86 = scmp.eq.s32.totalorder %s29, 0
    %p87 = por %p85, %p86
    %p88 = scmp.ne.s32.totalorder %s77, %s80
    %p89 = scmp.eq.s32.totalorder %s34, 7
    %p90 = por %p88, %p89
    %p91 = scmp.ne.s32.totalorder %s80, %s81
    %p92 = scmp.eq.s32.totalorder %s34, 0
    %p93 = por %p91, %p92
    %p94 = scmp.ne.s32.totalorder %s80, %s81
    %p95 = scmp.eq.s32.totalorder %s35, 7
    %p96 = por %p94, %p95
    %p98 = scmp.ne.s32.totalorder %s81, %s97
    %p99 = scmp.eq.s32.totalorder %s35, 0
    %p100 = por %p98, %p99
    %s101 = ssub.s32 %s36, %s48
    %p102 = scmp.eq.s32.totalorder %s101, 0
    %s104 = sadd.s32 %s103, 1
    %s105 = scalar_select %p102, %s103, %s104
    %p108 = pneg %p102
    %p109 = scmp.eq.s32.totalorder %s29, 7
    %p110 = por %p108, %p109
    %p111 = scmp.ne.s32.totalorder %s103, %s106
    %p112 = scmp.eq.s32.totalorder %s29, 0
    %p113 = por %p111, %p112
    %p114 = scmp.ne.s32.totalorder %s103, %s106
    %p115 = scmp.eq.s32.totalorder %s34, 7
    %p116 = por %p114, %p115
    %p117 = scmp.ne.s32.totalorder %s106, %s107
    %p118 = scmp.eq.s32.totalorder %s34, 0
    %p119 = por %p117, %p118
    %p120 = scmp.ne.s32.totalorder %s106, %s107
    %p121 = scmp.eq.s32.totalorder %s35, 7
    %p122 = por %p120, %p121
    %p124 = scmp.ne.s32.totalorder %s107, %s123
    %p125 = scmp.eq.s32.totalorder %s35, 0
    %p126 = por %p124, %p125
    %s127 = ssub.s32 %s36, %s48
    %p128 = scmp.eq.s32.totalorder %s127, 0
    %s130 = sadd.s32 %s129, 1
    %s131 = scalar_select %p128, %s129, %s130
    %p134 = pneg %p128
    %p135 = scmp.eq.s32.totalorder %s29, 7
    %p136 = por %p134, %p135
    %p137 = scmp.ne.s32.totalorder %s129, %s132
    %p138 = scmp.eq.s32.totalorder %s29, 0
    %p139 = por %p137, %p138
    %p140 = scmp.ne.s32.totalorder %s129, %s132
    %p141 = scmp.eq.s32.totalorder %s34, 7
    %p142 = por %p140, %p141
    %p143 = scmp.ne.s32.totalorder %s132, %s133
    %p144 = scmp.eq.s32.totalorder %s34, 0
    %p145 = por %p143, %p144
    %p146 = scmp.ne.s32.totalorder %s132, %s133
    %p147 = scmp.eq.s32.totalorder %s35, 7
    %p148 = por %p146, %p147
    %p150 = scmp.ne.s32.totalorder %s133, %s149
    %p151 = scmp.eq.s32.totalorder %s35, 0
    %p152 = por %p150, %p151
    %s153 = ssub.s32 %s36, %s48
    %p154 = scmp.eq.s32.totalorder %s153, 0
    %s156 = sadd.s32 %s155, 1
    %s157 = scalar_select %p154, %s155, %s156
    %p160 = pneg %p154
    %p161 = scmp.eq.s32.totalorder %s29, 7
    %p162 = por %p160, %p161
    %p163 = scmp.ne.s32.totalorder %s155, %s158
    %p164 = scmp.eq.s32.totalorder %s29, 0
    %p165 = por %p163, %p164
    %p166 = scmp.ne.s32.totalorder %s155, %s158
    %p167 = scmp.eq.s32.totalorder %s34, 7
    %p168 = por %p166, %p167
    %p169 = scmp.ne.s32.totalorder %s158, %s159
    %p170 = scmp.eq.s32.totalorder %s34, 0
    %p171 = por %p169, %p170
    %p172 = scmp.ne.s32.totalorder %s158, %s159
    %p173 = scmp.eq.s32.totalorder %s35, 7
    %p174 = por %p172, %p173
    %p176 = scmp.ne.s32.totalorder %s159, %s175
    %p177 = scmp.eq.s32.totalorder %s35, 0
    %p178 = por %p176, %p177
    %s179 = ssub.s32 %s36, %s48
    %p180 = scmp.eq.s32.totalorder %s179, 0
    %s182 = sadd.s32 %s181, 1
    %s183 = scalar_select %p180, %s181, %s182
    %p186 = pneg %p180
    %p187 = scmp.eq.s32.totalorder %s29, 7
    %p188 = por %p186, %p187
    %p189 = scmp.ne.s32.totalorder %s181, %s184
    %p190 = scmp.eq.s32.totalorder %s29, 0
    %p191 = por %p189, %p190
    %p192 = scmp.ne.s32.totalorder %s181, %s184
    %p193 = scmp.eq.s32.totalorder %s34, 7
    %p194 = por %p192, %p193
    %p195 = scmp.ne.s32.totalorder %s184, %s185
    %p196 = scmp.eq.s32.totalorder %s34, 0
    %p197 = por %p195, %p196
    %p198 = scmp.ne.s32.totalorder %s184, %s185
    %p199 = scmp.eq.s32.totalorder %s35, 7
    %p200 = por %p198, %p199
    %p202 = scmp.ne.s32.totalorder %s185, %s201
    %p203 = scmp.eq.s32.totalorder %s35, 0
    %p204 = por %p202, %p203
    %s205 = ssub.s32 %s36, %s48
    %p206 = scmp.eq.s32.totalorder %s205, 0
    %s208 = sadd.s32 %s207, 1
    %s209 = scalar_select %p206, %s207, %s208
    %p212 = pneg %p206
    %p213 = scmp.eq.s32.totalorder %s29, 7
    %p214 = por %p212, %p213
    %p215 = scmp.ne.s32.totalorder %s207, %s210
    %p216 = scmp.eq.s32.totalorder %s29, 0
    %p217 = por %p215, %p216
    %p218 = scmp.ne.s32.totalorder %s207, %s210
    %p219 = scmp.eq.s32.totalorder %s34, 7
    %p220 = por %p218, %p219
    %p221 = scmp.ne.s32.totalorder %s210, %s211
    %p222 = scmp.eq.s32.totalorder %s34, 0
    %p223 = por %p221, %p222
    %p224 = scmp.ne.s32.totalorder %s210, %s211
    %p225 = scmp.eq.s32.totalorder %s35, 7
    %p226 = por %p224, %p225
    %p228 = scmp.ne.s32.totalorder %s211, %s227
    %p229 = scmp.eq.s32.totalorder %s35, 0
    %p230 = por %p228, %p229
    %s231 = ssub.s32 %s36, %s48
    %p232 = scmp.eq.s32.totalorder %s231, 0
    %s234 = sadd.s32 %s233, 1
    %s235 = scalar_select %p232, %s233, %s234
    %p238 = pneg %p232
    %p239 = scmp.eq.s32.totalorder %s29, 7
    %p240 = por %p238, %p239
    %p241 = scmp.ne.s32.totalorder %s233, %s236
    %p242 = scmp.eq.s32.totalorder %s29, 0
    %p243 = por %p241, %p242
    %p244 = scmp.ne.s32.totalorder %s233, %s236
    %p245 = scmp.eq.s32.totalorder %s34, 7
    %p246 = por %p244, %p245
    %p247 = scmp.ne.s32.totalorder %s236, %s237
    %p248 = scmp.eq.s32.totalorder %s34, 0
    %p249 = por %p247, %p248
    %p250 = scmp.ne.s32.totalorder %s236, %s237
    %p251 = scmp.eq.s32.totalorder %s35, 7
    %p252 = por %p250, %p251
    %p254 = scmp.ne.s32.totalorder %s237, %s253
    %p255 = scmp.eq.s32.totalorder %s35, 0
    %p256 = por %p254, %p255
    %s257 = ssub.s32 %s37, %s44
    %s258 = ssub.s32 %s36, %s48
    %s259 = sor.u32 %s257, %s258
    %p260 = scmp.eq.s32.totalorder %s259, 0
    %s262 = sadd.s32 %s261, 1
    %s263 = scalar_select %p260, %s261, %s262
    %p266 = pneg %p260
    %p267 = scmp.eq.s32.totalorder %s29, 7
    %p268 = por %p266, %p267
    %p269 = scmp.ne.s32.totalorder %s261, %s264
    %p270 = scmp.eq.s32.totalorder %s29, 0
    %p271 = por %p269, %p270
    %p272 = scmp.ne.s32.totalorder %s261, %s264
    %p273 = scmp.eq.s32.totalorder %s34, 7
    %p274 = por %p272, %p273
    %p275 = scmp.ne.s32.totalorder %s264, %s265
    %p276 = scmp.eq.s32.totalorder %s34, 0
    %p277 = por %p275, %p276
    %p278 = scmp.ne.s32.totalorder %s264, %s265
    %p279 = scmp.eq.s32.totalorder %s35, 7
    %p280 = por %p278, %p279
    %p282 = scmp.ne.s32.totalorder %s265, %s281
    %p283 = scmp.eq.s32.totalorder %s35, 0
    %p284 = por %p282, %p283
    %s286 = sadd.s32 %s285, 1
    %p289 = scmp.eq.s32.totalorder %s29, 7
    %p290 = scmp.ne.s32.totalorder %s285, %s287
    %p291 = scmp.eq.s32.totalorder %s29, 0
    %p292 = por %p290, %p291
    %p293 = scmp.ne.s32.totalorder %s285, %s287
    %p294 = scmp.eq.s32.totalorder %s34, 7
    %p295 = por %p293, %p294
    %p296 = scmp.ne.s32.totalorder %s287, %s288
    %p297 = scmp.eq.s32.totalorder %s34, 0
    %p298 = por %p296, %p297
    %p299 = scmp.ne.s32.totalorder %s287, %s288
    %p300 = scmp.eq.s32.totalorder %s35, 7
    %p301 = por %p299, %p300
    %p303 = scmp.ne.s32.totalorder %s288, %s302
    %p304 = scmp.eq.s32.totalorder %s35, 0
    %p305 = por %p303, %p304
    %s307 = sadd.s32 %s306, 1
    %p310 = scmp.eq.s32.totalorder %s29, 7
    %p311 = scmp.ne.s32.totalorder %s306, %s308
    %p312 = scmp.eq.s32.totalorder %s29, 0
    %p313 = por %p311, %p312
    %p314 = scmp.ne.s32.totalorder %s306, %s308
    %p315 = scmp.eq.s32.totalorder %s34, 7
    %p316 = por %p314, %p315
    %p317 = scmp.ne.s32.totalorder %s308, %s309
    %p318 = scmp.eq.s32.totalorder %s34, 0
    %p319 = por %p317, %p318
    %p320 = scmp.ne.s32.totalorder %s308, %s309
    %p321 = scmp.eq.s32.totalorder %s35, 7
    %p322 = por %p320, %p321
    %p324 = scmp.ne.s32.totalorder %s309, %s323
    %p325 = scmp.eq.s32.totalorder %s35, 0
    %p326 = por %p324, %p325
    %s328 = sadd.s32 %s327, 1
    %p331 = scmp.eq.s32.totalorder %s29, 7
    %p332 = scmp.ne.s32.totalorder %s327, %s329
    %p333 = scmp.eq.s32.totalorder %s29, 0
    %p334 = por %p332, %p333
    %p335 = scmp.ne.s32.totalorder %s327, %s329
    %p336 = scmp.eq.s32.totalorder %s34, 7
    %p337 = por %p335, %p336
    %p338 = scmp.ne.s32.totalorder %s329, %s330
    %p339 = scmp.eq.s32.totalorder %s34, 0
    %p340 = por %p338, %p339
    %p341 = scmp.ne.s32.totalorder %s329, %s330
    %p342 = scmp.eq.s32.totalorder %s35, 7
    %p343 = por %p341, %p342
    %p345 = scmp.ne.s32.totalorder %s330, %s344
    %p346 = scmp.eq.s32.totalorder %s35, 0
    %p347 = por %p345, %p346
    %s349 = sadd.s32 %s348, 1
    %p352 = scmp.eq.s32.totalorder %s29, 7
    %p353 = scmp.ne.s32.totalorder %s348, %s350
    %p354 = scmp.eq.s32.totalorder %s29, 0
    %p355 = por %p353, %p354
    %p356 = scmp.ne.s32.totalorder %s348, %s350
    %p357 = scmp.eq.s32.totalorder %s34, 7
    %p358 = por %p356, %p357
    %p359 = scmp.ne.s32.totalorder %s350, %s351
    %p360 = scmp.eq.s32.totalorder %s34, 0
    %p361 = por %p359, %p360
    %p362 = scmp.ne.s32.totalorder %s350, %s351
    %p363 = scmp.eq.s32.totalorder %s35, 7
    %p364 = por %p362, %p363
    %p366 = scmp.ne.s32.totalorder %s351, %s365
    %p367 = scmp.eq.s32.totalorder %s35, 0
    %p368 = por %p366, %p367
    %s370 = sadd.s32 %s369, 1
    %p373 = scmp.eq.s32.totalorder %s29, 7
    %p374 = scmp.ne.s32.totalorder %s369, %s371
    %p375 = scmp.eq.s32.totalorder %s29, 0
    %p376 = por %p374, %p375
    %p377 = scmp.ne.s32.totalorder %s369, %s371
    %p378 = scmp.eq.s32.totalorder %s34, 7
    %p379 = por %p377, %p378
    %p380 = scmp.ne.s32.totalorder %s371, %s372
    %p381 = scmp.eq.s32.totalorder %s34, 0
    %p382 = por %p380, %p381
    %p383 = scmp.ne.s32.totalorder %s371, %s372
    %p384 = scmp.eq.s32.totalorder %s35, 7
    %p385 = por %p383, %p384
    %p387 = scmp.ne.s32.totalorder %s372, %s386
    %p388 = scmp.eq.s32.totalorder %s35, 0
    %p389 = por %p387, %p388
    %s391 = sadd.s32 %s390, 1
    %p394 = scmp.eq.s32.totalorder %s29, 7
    %p395 = scmp.ne.s32.totalorder %s390, %s392
    %p396 = scmp.eq.s32.totalorder %s29, 0
    %p397 = por %p395, %p396
    %p398 = scmp.ne.s32.totalorder %s390, %s392
    %p399 = scmp.eq.s32.totalorder %s34, 7
    %p400 = por %p398, %p399
    %p401 = scmp.ne.s32.totalorder %s392, %s393
    %p402 = scmp.eq.s32.totalorder %s34, 0
    %p403 = por %p401, %p402
    %p404 = scmp.ne.s32.totalorder %s392, %s393
    %p405 = scmp.eq.s32.totalorder %s35, 7
    %p406 = por %p404, %p405
    %p408 = scmp.ne.s32.totalorder %s393, %s407
    %p409 = scmp.eq.s32.totalorder %s35, 0
    %p410 = por %p408, %p409
    %s412 = sadd.s32 %s411, 1
    %p415 = scmp.eq.s32.totalorder %s29, 7
    %p416 = scmp.ne.s32.totalorder %s411, %s413
    %p417 = scmp.eq.s32.totalorder %s29, 0
    %p418 = por %p416, %p417
    %p419 = scmp.ne.s32.totalorder %s411, %s413
    %p420 = scmp.eq.s32.totalorder %s34, 7
    %p421 = por %p419, %p420
    %p422 = scmp.ne.s32.totalorder %s413, %s414
    %p423 = scmp.eq.s32.totalorder %s34, 0
    %p424 = por %p422, %p423
    %p425 = scmp.ne.s32.totalorder %s413, %s414
    %p426 = scmp.eq.s32.totalorder %s35, 7
    %p427 = por %p425, %p426
    %p429 = scmp.ne.s32.totalorder %s414, %s428
    %p430 = scmp.eq.s32.totalorder %s35, 0
    %p431 = por %p429, %p430
    %s433 = sadd.s32 %s432, 1
    %p436 = scmp.eq.s32.totalorder %s29, 7
    %p437 = scmp.ne.s32.totalorder %s432, %s434
    %p438 = scmp.eq.s32.totalorder %s29, 0
    %p439 = por %p437, %p438
    %p440 = scmp.ne.s32.totalorder %s432, %s434
    %p441 = scmp.eq.s32.totalorder %s34, 7
    %p442 = por %p440, %p441
    %p443 = scmp.ne.s32.totalorder %s434, %s435
    %p444 = scmp.eq.s32.totalorder %s34, 0
    %p445 = por %p443, %p444
    %p446 = scmp.ne.s32.totalorder %s434, %s435
    %p447 = scmp.eq.s32.totalorder %s35, 7
    %p448 = por %p446, %p447
    %p450 = scmp.ne.s32.totalorder %s435, %s449
    %p451 = scmp.eq.s32.totalorder %s35, 0
    %p452 = por %p450, %p451
    %s454 = sadd.s32 %s453, 1
    %p457 = scmp.eq.s32.totalorder %s29, 7
    %p458 = scmp.ne.s32.totalorder %s453, %s455
    %p459 = scmp.eq.s32.totalorder %s29, 0
    %p460 = por %p458, %p459
    %p461 = scmp.ne.s32.totalorder %s453, %s455
    %p462 = scmp.eq.s32.totalorder %s34, 7
    %p463 = por %p461, %p462
    %p464 = scmp.ne.s32.totalorder %s455, %s456
    %p465 = scmp.eq.s32.totalorder %s34, 0
    %p466 = por %p464, %p465
    %p467 = scmp.ne.s32.totalorder %s455, %s456
    %p468 = scmp.eq.s32.totalorder %s35, 7
    %p469 = por %p467, %p468
    %p471 = scmp.ne.s32.totalorder %s456, %s470
    %p472 = scmp.eq.s32.totalorder %s35, 0
    %p473 = por %p471, %p472
    %s474 = ssub.s32 %s37, %s44
    %s475 = ssub.s32 %s36, %s48
    %s476 = sor.u32 %s474, %s475
    %p477 = scmp.eq.s32.totalorder %s476, 0
    %s479 = sadd.s32 %s478, 1
    %s480 = scalar_select %p477, %s478, %s479
    %p483 = pneg %p477
    %p484 = scmp.eq.s32.totalorder %s29, 7
    %p485 = por %p483, %p484
    %p486 = scmp.ne.s32.totalorder %s478, %s481
    %p487 = scmp.eq.s32.totalorder %s29, 0
    %p488 = por %p486, %p487
    %p489 = scmp.ne.s32.totalorder %s478, %s481
    %p490 = scmp.eq.s32.totalorder %s34, 7
    %p491 = por %p489, %p490
    %p492 = scmp.ne.s32.totalorder %s481, %s482
    %p493 = scmp.eq.s32.totalorder %s34, 0
    %p494 = por %p492, %p493
    %p495 = scmp.ne.s32.totalorder %s481, %s482
    %p496 = scmp.eq.s32.totalorder %s35, 7
    %p497 = por %p495, %p496
    %p499 = scmp.ne.s32.totalorder %s482, %s498
    %p500 = scmp.eq.s32.totalorder %s35, 0
    %p501 = por %p499, %p500
    %s502 = ssub.s32 %s37, %s44
    %s503 = ssub.s32 %s36, %s48
    %s504 = sor.u32 %s502, %s503
    %p505 = scmp.eq.s32.totalorder %s504, 0
    %s507 = sadd.s32 %s506, 1
    %s508 = scalar_select %p505, %s506, %s507
    %p511 = pneg %p505
    %p512 = scmp.eq.s32.totalorder %s29, 7
    %p513 = por %p511, %p512
    %p514 = scmp.ne.s32.totalorder %s506, %s509
    %p515 = scmp.eq.s32.totalorder %s29, 0
    %p516 = por %p514, %p515
    %p517 = scmp.ne.s32.totalorder %s506, %s509
    %p518 = scmp.eq.s32.totalorder %s34, 7
    %p519 = por %p517, %p518
    %p520 = scmp.ne.s32.totalorder %s509, %s510
    %p521 = scmp.eq.s32.totalorder %s34, 0
    %p522 = por %p520, %p521
    %p523 = scmp.ne.s32.totalorder %s509, %s510
    %p524 = scmp.eq.s32.totalorder %s35, 7
    %p525 = por %p523, %p524
    %p527 = scmp.ne.s32.totalorder %s510, %s526
    %p528 = scmp.eq.s32.totalorder %s35, 0
    %p529 = por %p527, %p528
    %s530 = ssub.s32 %s37, %s44
    %s531 = ssub.s32 %s36, %s48
    %s532 = sor.u32 %s530, %s531
    %p533 = scmp.eq.s32.totalorder %s532, 0
    %s535 = sadd.s32 %s534, 1
    %s536 = scalar_select %p533, %s534, %s535
    %p539 = pneg %p533
    %p540 = scmp.eq.s32.totalorder %s29, 7
    %p541 = por %p539, %p540
    %p542 = scmp.ne.s32.totalorder %s534, %s537
    %p543 = scmp.eq.s32.totalorder %s29, 0
    %p544 = por %p542, %p543
    %p545 = scmp.ne.s32.totalorder %s534, %s537
    %p546 = scmp.eq.s32.totalorder %s34, 7
    %p547 = por %p545, %p546
    %p548 = scmp.ne.s32.totalorder %s537, %s538
    %p549 = scmp.eq.s32.totalorder %s34, 0
    %p550 = por %p548, %p549
    %p551 = scmp.ne.s32.totalorder %s537, %s538
    %p552 = scmp.eq.s32.totalorder %s35, 7
    %p553 = por %p551, %p552
    %p555 = scmp.ne.s32.totalorder %s538, %s554
    %p556 = scmp.eq.s32.totalorder %s35, 0
    %p557 = por %p555, %p556
    %s558 = ssub.s32 %s37, %s44
    %s559 = ssub.s32 %s36, %s48
    %s560 = sor.u32 %s558, %s559
    %p561 = scmp.eq.s32.totalorder %s560, 0
    %s563 = sadd.s32 %s562, 1
    %s564 = scalar_select %p561, %s562, %s563
    %p567 = pneg %p561
    %p568 = scmp.eq.s32.totalorder %s29, 7
    %p569 = por %p567, %p568
    %p570 = scmp.ne.s32.totalorder %s562, %s565
    %p571 = scmp.eq.s32.totalorder %s29, 0
    %p572 = por %p570, %p571
    %p573 = scmp.ne.s32.totalorder %s562, %s565
    %p574 = scmp.eq.s32.totalorder %s34, 7
    %p575 = por %p573, %p574
    %p576 = scmp.ne.s32.totalorder %s565, %s566
    %p577 = scmp.eq.s32.totalorder %s34, 0
    %p578 = por %p576, %p577
    %p579 = scmp.ne.s32.totalorder %s565, %s566
    %p580 = scmp.eq.s32.totalorder %s35, 7
    %p581 = por %p579, %p580
    %p583 = scmp.ne.s32.totalorder %s566, %s582
    %p584 = scmp.eq.s32.totalorder %s35, 0
    %p585 = por %p583, %p584
    %s586 = ssub.s32 %s36, %s48
    %p587 = scmp.eq.s32.totalorder %s586, 0
    %s589 = sadd.s32 %s588, 1
    %s590 = scalar_select %p587, %s588, %s589
    %p593 = pneg %p587
    %p594 = scmp.eq.s32.totalorder %s29, 7
    %p595 = por %p593, %p594
    %p596 = scmp.ne.s32.totalorder %s588, %s591
    %p597 = scmp.eq.s32.totalorder %s29, 0
    %p598 = por %p596, %p597
    %p599 = scmp.ne.s32.totalorder %s588, %s591
    %p600 = scmp.eq.s32.totalorder %s34, 7
    %p601 = por %p599, %p600
    %p602 = scmp.ne.s32.totalorder %s591, %s592
    %p603 = scmp.eq.s32.totalorder %s34, 0
    %p604 = por %p602, %p603
    %p605 = scmp.ne.s32.totalorder %s591, %s592
    %p606 = scmp.eq.s32.totalorder %s35, 7
    %p607 = por %p605, %p606
    %p609 = scmp.ne.s32.totalorder %s592, %s608
    %p610 = scmp.eq.s32.totalorder %s35, 0
    %p611 = por %p609, %p610
    %p612 = scmp.le.s32.totalorder 1, %s29
    %p613 = scmp.lt.s32.totalorder %s29, 9
    %p614 = pnand %p612, %p613
    %p615 = pneg %p614
    // Predicated region
    $region9: #{generator_forward.1} parent=5 // pred_check
      _
    $region10: #{generator_forward.1} parent=5 // pred_check_branch
      %617 = sbr.rel (%p614) target = $region12
    $region11: #{generator_forward.1} parent=5 // pred_region
      %s618 = ssub.s32 %s29, 1
      // Predicated region
      $region13: #{generator_forward.1} parent=11 // pred_check
        %p619 = pneg %p298
      $region14: #{generator_forward.1} parent=11 // pred_check_branch
        %621 = sbr.rel (%p619) target = $region16
      $region15: #{generator_forward.1} parent=11 // pred_region
        _
      $region16: #{generator_forward.1} parent=11 // pred_fallthru
        _
      // Predicated region
      $region17: #{generator_forward.1} parent=11 // pred_check
        %p622 = pneg %p319
      $region18: #{generator_forward.1} parent=11 // pred_check_branch
        %624 = sbr.rel (%p622) target = $region20
      $region19: #{generator_forward.1} parent=11 // pred_region
        _
      $region20: #{generator_forward.1} parent=11 // pred_fallthru
        _
      // Predicated region
      $region21: #{generator_forward.1} parent=11 // pred_check
        %p625 = pneg %p340
      $region22: #{generator_forward.1} parent=11 // pred_check_branch
        %627 = sbr.rel (%p625) target = $region24
      $region23: #{generator_forward.1} parent=11 // pred_region
        _
      $region24: #{generator_forward.1} parent=11 // pred_fallthru
        _
      // Predicated region
      $region25: #{generator_forward.1} parent=11 // pred_check
        %p628 = pneg %p361
      $region26: #{generator_forward.1} parent=11 // pred_check_branch
        %630 = sbr.rel (%p628) target = $region28
      $region27: #{generator_forward.1} parent=11 // pred_region
        _
      $region28: #{generator_forward.1} parent=11 // pred_fallthru
        _
      // Predicated region
      $region29: #{generator_forward.1} parent=11 // pred_check
        %p631 = pneg %p382
      $region30: #{generator_forward.1} parent=11 // pred_check_branch
        %633 = sbr.rel (%p631) target = $region32
      $region31: #{generator_forward.1} parent=11 // pred_region
        _
      $region32: #{generator_forward.1} parent=11 // pred_fallthru
        _
      // Predicated region
      $region33: #{generator_forward.1} parent=11 // pred_check
        %p634 = pneg %p403
      $region34: #{generator_forward.1} parent=11 // pred_check_branch
        %636 = sbr.rel (%p634) target = $region36
      $region35: #{generator_forward.1} parent=11 // pred_region
        _
      $region36: #{generator_forward.1} parent=11 // pred_fallthru
        _
      // Predicated region
      $region37: #{generator_forward.1} parent=11 // pred_check
        %p637 = pneg %p424
      $region38: #{generator_forward.1} parent=11 // pred_check_branch
        %639 = sbr.rel (%p637) target = $region40
      $region39: #{generator_forward.1} parent=11 // pred_region
        _
      $region40: #{generator_forward.1} parent=11 // pred_fallthru
        _
      // Predicated region
      $region41: #{generator_forward.1} parent=11 // pred_check
        %p640 = pneg %p445
      $region42: #{generator_forward.1} parent=11 // pred_check_branch
        %642 = sbr.rel (%p640) target = $region44
      $region43: #{generator_forward.1} parent=11 // pred_region
        _
      $region44: #{generator_forward.1} parent=11 // pred_fallthru
        _
      // Predicated region
      $region45: #{generator_forward.1} parent=11 // pred_check
        %p643 = pneg %p466
      $region46: #{generator_forward.1} parent=11 // pred_check_branch
        %645 = sbr.rel (%p643) target = $region48
      $region47: #{generator_forward.1} parent=11 // pred_region
        _
      $region48: #{generator_forward.1} parent=11 // pred_fallthru
        _
    $region12: #{generator_forward.1} parent=5 // pred_fallthru
      _
    %p646 = scmp.lt.s32.totalorder %s29, 8
    // Predicated region
    $region49: #{generator_forward.1} parent=5 // pred_check
      %p647 = pneg %p646
    $region50: #{generator_forward.1} parent=5 // pred_check_branch
      %649 = sbr.rel (%p647) target = $region52
    $region51: #{generator_forward.1} parent=5 // pred_region
      // Predicated region
      $region53: #{generator_forward.1} parent=51 // pred_check
        %p650 = pneg %p61
      $region54: #{generator_forward.1} parent=51 // pred_check_branch
        %652 = sbr.rel (%p650) target = $region56
      $region55: #{generator_forward.1} parent=51 // pred_region
        %p653 = scmp.lt.s32.totalorder %s36, 1
        %s654 = scalar_select %p653, %s36, 1
        %s655 = smul.addr %s654, 4
        %s656 = scalar_lea.vmem %s0, %s655
      $region56: #{generator_forward.1} parent=51 // pred_fallthru
        _
      // Predicated region
      $region57: #{generator_forward.1} parent=51 // pred_check
        %p657 = pneg %p87
      $region58: #{generator_forward.1} parent=51 // pred_check_branch
        %659 = sbr.rel (%p657) target = $region60
      $region59: #{generator_forward.1} parent=51 // pred_region
        %p660 = scmp.lt.s32.totalorder %s36, 1
        %s661 = scalar_select %p660, %s36, 1
        %s662 = smul.addr %s661, 4
        %s663 = scalar_lea.vmem %s1, %s662
      $region60: #{generator_forward.1} parent=51 // pred_fallthru
        _
      // Predicated region
      $region61: #{generator_forward.1} parent=51 // pred_check
        %p664 = pneg %p113
      $region62: #{generator_forward.1} parent=51 // pred_check_branch
        %666 = sbr.rel (%p664) target = $region64
      $region63: #{generator_forward.1} parent=51 // pred_region
        %p667 = scmp.lt.s32.totalorder %s36, 1
        %s668 = scalar_select %p667, %s36, 1
        %s669 = smul.addr %s668, 8
        %s670 = scalar_lea.vmem %s2, %s669
      $region64: #{generator_forward.1} parent=51 // pred_fallthru
        _
      // Predicated region
      $region65: #{generator_forward.1} parent=51 // pred_check
        %p671 = pneg %p139
      $region66: #{generator_forward.1} parent=51 // pred_check_branch
        %673 = sbr.rel (%p671) target = $region68
      $region67: #{generator_forward.1} parent=51 // pred_region
        %p674 = scmp.lt.s32.totalorder %s36, 1
        %s675 = scalar_select %p674, %s36, 1
        %s676 = smul.addr %s675, 4
        %s677 = smul.addr %s676, 8
        %s678 = scalar_lea.vmem %s3, %s677
      $region68: #{generator_forward.1} parent=51 // pred_fallthru
        _
      // Predicated region
      $region69: #{generator_forward.1} parent=51 // pred_check
        %p679 = pneg %p165
      $region70: #{generator_forward.1} parent=51 // pred_check_branch
        %681 = sbr.rel (%p679) target = $region72
      $region71: #{generator_forward.1} parent=51 // pred_region
        %p682 = scmp.lt.s32.totalorder %s36, 1
        %s683 = scalar_select %p682, %s36, 1
        %s684 = smul.addr %s683, 8
        %s685 = scalar_lea.vmem %s4, %s684
      $region72: #{generator_forward.1} parent=51 // pred_fallthru
        _
      // Predicated region
      $region73: #{generator_forward.1} parent=51 // pred_check
        %p686 = pneg %p191
      $region74: #{generator_forward.1} parent=51 // pred_check_branch
        %688 = sbr.rel (%p686) target = $region76
      $region75: #{generator_forward.1} parent=51 // pred_region
        %p689 = scmp.lt.s32.totalorder %s36, 1
        %s690 = scalar_select %p689, %s36, 1
        %s691 = smul.addr %s690, 4
        %s692 = smul.addr %s691, 8
        %s693 = scalar_lea.vmem %s5, %s692
      $region76: #{generator_forward.1} parent=51 // pred_fallthru
        _
      // Predicated region
      $region77: #{generator_forward.1} parent=51 // pred_check
        %p694 = pneg %p217
      $region78: #{generator_forward.1} parent=51 // pred_check_branch
        %696 = sbr.rel (%p694) target = $region80
      $region79: #{generator_forward.1} parent=51 // pred_region
        %p697 = scmp.lt.s32.totalorder %s36, 1
        %s698 = scalar_select %p697, %s36, 1
        %s699 = scalar_lea.vmem %s6, %s698
      $region80: #{generator_forward.1} parent=51 // pred_fallthru
        _
      // Predicated region
      $region81: #{generator_forward.1} parent=51 // pred_check
        %p700 = pneg %p243
      $region82: #{generator_forward.1} parent=51 // pred_check_branch
        %702 = sbr.rel (%p700) target = $region84
      $region83: #{generator_forward.1} parent=51 // pred_region
        %p703 = scmp.lt.s32.totalorder %s36, 1
        %s704 = scalar_select %p703, %s36, 1
        %s705 = scalar_lea.vmem %s7, %s704
      $region84: #{generator_forward.1} parent=51 // pred_fallthru
        _
      // Predicated region
      $region85: #{generator_forward.1} parent=51 // pred_check
        %p706 = pneg %p271
      $region86: #{generator_forward.1} parent=51 // pred_check_branch
        %708 = sbr.rel (%p706) target = $region88
      $region87: #{generator_forward.1} parent=51 // pred_region
        %p709 = scmp.lt.s32.totalorder %s37, 3
        %s710 = scalar_select %p709, %s37, 3
        %p711 = scmp.lt.s32.totalorder %s36, 1
        %s712 = scalar_select %p711, %s36, 1
        %s713 = smul.addr %s710, 2
        %s714 = sadd.s32 %s712, %s713
        %s715 = smul.addr %s714, 2
        %s716 = scalar_lea.vmem %s8, %s715
      $region88: #{generator_forward.1} parent=51 // pred_fallthru
        _
    $region52: #{generator_forward.1} parent=5 // pred_fallthru
      _
    %p717 = scmp.le.s32.totalorder 1, %s29
    %p718 = scmp.lt.s32.totalorder %s29, 9
    %p719 = pnand %p717, %p718
    %p720 = pneg %p719
    // Predicated region
    $region89: #{generator_forward.1} parent=5 // pred_check
      _
    $region90: #{generator_forward.1} parent=5 // pred_check_branch
      %722 = sbr.rel (%p719) target = $region92
    $region91: #{generator_forward.1} parent=5 // pred_region
      %s723 = ssub.s32 %s29, 1
      %p724 = scmp.lt.s32.totalorder %s38, 1
      %s725 = scalar_select %p724, %s38, 1
      %s726 = smul.addr %s725, 4
      %s727 = scalar_lea.vmem %s0, %s726
      %p728 = pneg %p67
      %p729 = pneg %p64
      %p730 = scmp.lt.s32.totalorder %s38, 1
      %s731 = scalar_select %p730, %s38, 1
      %s732 = smul.addr %s731, 4
      %s733 = scalar_lea.vmem %s1, %s732
      %p734 = pneg %p93
      %p735 = pneg %p90
      %p736 = scmp.lt.s32.totalorder %s38, 1
      %s737 = scalar_select %p736, %s38, 1
      %s738 = smul.addr %s737, 8
      %s739 = scalar_lea.vmem %s2, %s738
      %p740 = pneg %p119
      %p741 = pneg %p116
      %p742 = scmp.lt.s32.totalorder %s38, 1
      %s743 = scalar_select %p742, %s38, 1
      %s744 = smul.addr %s743, 4
      %s745 = smul.addr %s744, 8
      %s746 = scalar_lea.vmem %s3, %s745
      %p747 = pneg %p145
      %p748 = pneg %p142
      %p749 = scmp.lt.s32.totalorder %s38, 1
      %s750 = scalar_select %p749, %s38, 1
      %s751 = smul.addr %s750, 8
      %s752 = scalar_lea.vmem %s4, %s751
      %p753 = pneg %p171
      %p754 = pneg %p168
      %p755 = scmp.lt.s32.totalorder %s38, 1
      %s756 = scalar_select %p755, %s38, 1
      %s757 = smul.addr %s756, 4
      %s758 = smul.addr %s757, 8
      %s759 = scalar_lea.vmem %s5, %s758
      %p760 = pneg %p197
      %p761 = pneg %p194
      %p762 = scmp.lt.s32.totalorder %s38, 1
      %s763 = scalar_select %p762, %s38, 1
      %s764 = scalar_lea.vmem %s6, %s763
      %p765 = pneg %p223
      %p766 = pneg %p220
      %p767 = scmp.lt.s32.totalorder %s38, 1
      %s768 = scalar_select %p767, %s38, 1
      %s769 = scalar_lea.vmem %s7, %s768
      %p770 = pneg %p249
      %p771 = pneg %p246
      %p772 = scmp.lt.s32.totalorder %s39, 3
      %s773 = scalar_select %p772, %s39, 3
      %p774 = scmp.lt.s32.totalorder %s38, 1
      %s775 = scalar_select %p774, %s38, 1
      %s776 = smul.addr %s773, 2
      %s777 = sadd.s32 %s775, %s776
      %s778 = smul.addr %s777, 2
      %s779 = scalar_lea.vmem %s8, %s778
      %p780 = pneg %p277
      %p781 = pneg %p274
      %p782 = pneg %p298
      %p783 = pneg %p295
      %p784 = pneg %p319
      %p785 = pneg %p316
      %p786 = pneg %p340
      %p787 = pneg %p337
      %p788 = pneg %p361
      %p789 = pneg %p358
      %p790 = pneg %p382
      %p791 = pneg %p379
      %p792 = pneg %p403
      %p793 = pneg %p400
      %p794 = pneg %p424
      %p795 = pneg %p421
      %p796 = pneg %p445
      %p797 = pneg %p442
      %p798 = pneg %p466
      %p799 = pneg %p463
      %p800 = pneg %p494
      %p801 = pneg %p491
      %p802 = scmp.lt.s32.totalorder %s39, 3
      %s803 = scalar_select %p802, %s39, 3
      %p804 = scmp.lt.s32.totalorder %s38, 1
      %s805 = scalar_select %p804, %s38, 1
      %s806 = smul.addr %s803, 2
      %s807 = sadd.s32 %s805, %s806
      %s808 = smul.addr %s807, 4
      %s809 = scalar_lea.vmem %s18, %s808
      %p810 = pneg %p522
      %p811 = pneg %p519
      %p812 = scmp.lt.s32.totalorder %s39, 3
      %s813 = scalar_select %p812, %s39, 3
      %p814 = scmp.lt.s32.totalorder %s38, 1
      %s815 = scalar_select %p814, %s38, 1
      %s816 = smul.addr %s813, 2
      %s817 = sadd.s32 %s815, %s816
      %s818 = smul.addr %s817, 4
      %s819 = scalar_lea.vmem %s19, %s818
      %p820 = pneg %p550
      %p821 = pneg %p547
      %p822 = scmp.lt.s32.totalorder %s39, 3
      %s823 = scalar_select %p822, %s39, 3
      %p824 = scmp.lt.s32.totalorder %s38, 1
      %s825 = scalar_select %p824, %s38, 1
      %s826 = smul.addr %s823, 2
      %s827 = sadd.s32 %s825, %s826
      %s828 = smul.addr %s827, 4
      %s829 = scalar_lea.vmem %s20, %s828
      %p830 = pneg %p578
      %p831 = pneg %p575
      %p832 = scmp.lt.s32.totalorder %s39, 3
      %s833 = scalar_select %p832, %s39, 3
      %p834 = scmp.lt.s32.totalorder %s38, 1
      %s835 = scalar_select %p834, %s38, 1
      %s836 = smul.addr %s833, 2
      %s837 = sadd.s32 %s835, %s836
      %s838 = smul.addr %s837, 4
      %s839 = scalar_lea.vmem %s21, %s838
      %p840 = pneg %p604
      %p841 = pneg %p601
      %p842 = scmp.lt.s32.totalorder %s38, 1
      %s843 = scalar_select %p842, %s38, 1
      %s844 = smul.addr %s843, 4
      %s845 = scalar_lea.vmem %s22, %s844
      %p846 = scmp.lt.s32.totalorder %s38, 1
      %s847 = scalar_select %p846, %s38, 1
      %s848 = smul.addr %s847, 4
      %s849 = scalar_lea.vmem %s0, %s848
      %p850 = scmp.lt.s32.totalorder %s38, 1
      %s851 = scalar_select %p850, %s38, 1
      %s852 = smul.addr %s851, 4
      %s853 = scalar_lea.vmem %s1, %s852
      %p854 = scmp.lt.s32.totalorder %s38, 1
      %s855 = scalar_select %p854, %s38, 1
      %s856 = smul.addr %s855, 8
      %s857 = scalar_lea.vmem %s2, %s856
      %p858 = scmp.lt.s32.totalorder %s38, 1
      %s859 = scalar_select %p858, %s38, 1
      %s860 = smul.addr %s859, 4
      %s861 = smul.addr %s860, 8
      %s862 = scalar_lea.vmem %s3, %s861
      %p863 = scmp.lt.s32.totalorder %s38, 1
      %s864 = scalar_select %p863, %s38, 1
      %s865 = smul.addr %s864, 8
      %s866 = scalar_lea.vmem %s4, %s865
      %p867 = scmp.lt.s32.totalorder %s38, 1
      %s868 = scalar_select %p867, %s38, 1
      %s869 = smul.addr %s868, 4
      %s870 = smul.addr %s869, 8
      %s871 = scalar_lea.vmem %s5, %s870
      %p872 = scmp.lt.s32.totalorder %s38, 1
      %s873 = scalar_select %p872, %s38, 1
      %s874 = scalar_lea.vmem %s6, %s873
      %p875 = scmp.lt.s32.totalorder %s38, 1
      %s876 = scalar_select %p875, %s38, 1
      %s877 = scalar_lea.vmem %s7, %s876
      %p878 = scmp.lt.s32.totalorder %s39, 3
      %s879 = scalar_select %p878, %s39, 3
      %p880 = scmp.lt.s32.totalorder %s38, 1
      %s881 = scalar_select %p880, %s38, 1
      %s882 = smul.addr %s879, 2
      %s883 = sadd.s32 %s881, %s882
      %s884 = smul.addr %s883, 2
      %s885 = scalar_lea.vmem %s8, %s884
      %p886 = scmp.lt.s32.totalorder %s39, 3
      %s887 = scalar_select %p886, %s39, 3
      %p888 = scmp.lt.s32.totalorder %s38, 1
      %s889 = scalar_select %p888, %s38, 1
      %s890 = smul.addr %s887, 2
      %s891 = sadd.s32 %s889, %s890
      %s892 = smul.addr %s891, 4
      %s893 = scalar_lea.vmem %s18, %s892
      %p894 = scmp.lt.s32.totalorder %s39, 3
      %s895 = scalar_select %p894, %s39, 3
      %p896 = scmp.lt.s32.totalorder %s38, 1
      %s897 = scalar_select %p896, %s38, 1
      %s898 = smul.addr %s895, 2
      %s899 = sadd.s32 %s897, %s898
      %s900 = smul.addr %s899, 4
      %s901 = scalar_lea.vmem %s19, %s900
      %p902 = scmp.lt.s32.totalorder %s39, 3
      %s903 = scalar_select %p902, %s39, 3
      %p904 = scmp.lt.s32.totalorder %s38, 1
      %s905 = scalar_select %p904, %s38, 1
      %s906 = smul.addr %s903, 2
      %s907 = sadd.s32 %s905, %s906
      %s908 = smul.addr %s907, 4
      %s909 = scalar_lea.vmem %s20, %s908
      %p910 = scmp.lt.s32.totalorder %s39, 3
      %s911 = scalar_select %p910, %s39, 3
      %p912 = scmp.lt.s32.totalorder %s38, 1
      %s913 = scalar_select %p912, %s38, 1
      %s914 = smul.addr %s911, 2
      %s915 = sadd.s32 %s913, %s914
      %s916 = smul.addr %s915, 4
      %s917 = scalar_lea.vmem %s21, %s916
      %p918 = scmp.lt.s32.totalorder %s38, 1
      %s919 = scalar_select %p918, %s38, 1
      %s920 = smul.addr %s919, 4
      %s921 = scalar_lea.vmem %s22, %s920
      %v923 = vld [vmem:[%s857] sm:$0xff]
      %v924 = vld [vmem:[%s862] sm:$0xff]
      %v925 = vld [vmem:[%s862 + $0x8] sm:$0xff]
      %v926 = vld [vmem:[%s862 + $0x10] sm:$0xff]
      %v927 = vld [vmem:[%s862 + $0x18] sm:$0xff]
      %v928 = vld [vmem:[%s866] sm:$0xff]
      %v929 = vld [vmem:[%s871] sm:$0xff]
      %v930 = vld [vmem:[%s871 + $0x8] sm:$0xff]
      %v931 = vld [vmem:[%s871 + $0x10] sm:$0xff]
      %v932 = vld [vmem:[%s871 + $0x18] sm:$0xff]
      %v933 = vld [vmem:[%s874] sm:$0x1]
      %v934 = vld [vmem:[%s877] sm:$0x1]
      %p935 = scmp.eq.s32.totalorder %s39, 0
      // Predicated region
      $region93: #{generator_forward.1} parent=91 // pred_check
        %p936 = pneg %p935
      $region94: #{generator_forward.1} parent=91 // pred_check_branch
        %938 = sbr.rel (%p936) target = $region96
      $region95: #{generator_forward.1} parent=91 // pred_region
        %v939 = vld [vmem:[%s849] sm:$0x7]
        %v941 = vlaneseq
        %v942 = vshrl.u32 %v941, 7
        %v943 = vsub.s32 0, %v942
        %v944 = vrot.slane %v933, %v943
        %vm946 = vcmask 261120
        %v948 = vsel %vm946, %v939, 0
        %950 = vmatprep.subr.mxu0 0.0
        %951 = vmatpush1.msra.mxu0 %v924
        %952 = vmatprep.subr.mxu0 0.0
        %953 = vmatpush1.msra.mxu0 %v925
        %954 = vmatprep.subr.mxu0 0.0
        %955 = vmatpush1.msra.mxu0 %v926
        %956 = vmatprep.subr.mxu0 0.0
        %957 = vmatpush1.msra.mxu0 %v927
        %958 = vmatprep.subr.mxu0 0.0
        %959 = vmatpush1.msra.mxu0 0.0
        %960 = vmatprep.subr.mxu0 0.0
        %961 = vmatpush1.msra.mxu0 0.0
        %962 = vmatprep.subr.mxu0 0.0
        %963 = vmatpush1.msra.mxu0 0.0
        %964 = vmatprep.subr.mxu0 0.0
        %965 = vmatpush1.msra.mxu0 0.0
        %966 = vmatprep.subr.mxu0 0.0
        %967 = vmatpush1.msra.mxu0 0.0
        %968 = vmatprep.subr.mxu0 0.0
        %969 = vmatpush1.msra.mxu0 0.0
        %970 = vmatprep.subr.mxu0 0.0
        %971 = vmatpush1.msra.mxu0 0.0
        %972 = vmatprep.subr.mxu0 0.0
        %973 = vmatpush1.msra.mxu0 0.0
        %974 = vmatprep.subr.mxu0 0.0
        %975 = vmatpush1.msra.mxu0 0.0
        %976 = vmatprep.subr.mxu0 0.0
        %977 = vmatpush1.msra.mxu0 0.0
        %978 = vmatprep.subr.mxu0 0.0
        %979 = vmatpush1.msra.mxu0 0.0
        %980 = vmatprep.subr.mxu0 0.0
        %981 = vmatpush1.msra.mxu0 0.0
        %982 = vmatprep.subr.mxu0 0.0
        %983 = vmatpush1.msra.mxu0 0.0
        %984 = vmatprep.subr.mxu0 0.0
        %985 = vmatpush1.msra.mxu0 0.0
        %986 = vmatprep.subr.mxu0 0.0
        %987 = vmatpush1.msra.mxu0 0.0
        %988 = vmatprep.subr.mxu0 0.0
        %989 = vmatpush1.msra.mxu0 0.0
        %990 = vmatprep.subr.mxu0 0.0
        %991 = vmatpush1.msra.mxu0 0.0
        %992 = vmatprep.subr.mxu0 0.0
        %993 = vmatpush1.msra.mxu0 0.0
        %994 = vmatprep.subr.mxu0 0.0
        %995 = vmatpush1.msra.mxu0 0.0
        %996 = vmatprep.subr.mxu0 0.0
        %997 = vmatpush1.msra.mxu0 0.0
        %998 = vmatprep.subr.mxu0 0.0
        %999 = vmatpush1.msra.mxu0 0.0
        %1000 = vmatprep.subr.mxu0 0.0
        %1001 = vmatpush1.msra.mxu0 0.0
        %1002 = vmatprep.subr.mxu0 0.0
        %1003 = vmatpush1.msra.mxu0 0.0
        %1004 = vmatprep.subr.mxu0 0.0
        %1005 = vmatpush1.msra.mxu0 0.0
        %1006 = vmatprep.subr.mxu0 0.0
        %1007 = vmatpush1.msra.mxu0 0.0
        %1008 = vmatprep.subr.mxu0 0.0
        %1009 = vmatpush1.msra.mxu0 0.0
        %1010 = vmatprep.subr.mxu0 0.0
        %1011 = vmatpush1.msra.mxu0 0.0
        %1012 = vmatprep.subr.mxu0 0.0
        %1013 = vmatpush1.msra.mxu0 0.0
        %1014 = vmatprep.mubr.f32.mxu0 0.0
        %1015 = vmatmul.mubr.f32.gmra.mrb[0].mxu0 %v948
        %v1016 = vpop.f32.mrb[0].mxu0
        %v1017 = vadd.f32 %v944, %v1016
        %v1018 = vpop.f32.mrb[0].mxu0
        %1019 = vdwg.mxu0
        %vm1020 = vcmask 59392
        %v1021 = vsel %vm1020, %v1017, -inf
        %1022 = vmax.xlane.f32.xlu0 %v1021
        %v1023 = vpop.xlane.xlu0 %1022
        %v1024 = vsub.f32 %v1017, %v1023
        %v1025 = vmul.f32 %v1024, 1.442695
        %v1026 = vpow.pop %v1025
        %v1027 = vsel %vm1020, %v1026, 0.0
        %1028 = vadd.xlane.f32.xlu0 %v1027
        %v1029 = vpop.xlane.xlu0 %1028
        %v1030 = vrcp.pop %v1029
        %v1031 = vmul.f32 %v1026, %v1030
        %v1033 = vlaneseq
        %v1034 = vshrl.u32 %v1033, 7
        %v1035 = vsub.s32 0, %v1034
        %v1036 = vrot.slane %v934, %v1035
        %1038 = vmatprep.subr.mxu0 0.0
        %1039 = vmatpush1.msra.mxu0 %v929
        %1040 = vmatprep.subr.mxu0 0.0
        %1041 = vmatpush1.msra.mxu0 %v930
        %1042 = vmatprep.subr.mxu0 0.0
        %1043 = vmatpush1.msra.mxu0 %v931
        %1044 = vmatprep.subr.mxu0 0.0
        %1045 = vmatpush1.msra.mxu0 %v932
        %1046 = vmatprep.subr.mxu0 0.0
        %1047 = vmatpush1.msra.mxu0 0.0
        %1048 = vmatprep.subr.mxu0 0.0
        %1049 = vmatpush1.msra.mxu0 0.0
        %1050 = vmatprep.subr.mxu0 0.0
        %1051 = vmatpush1.msra.mxu0 0.0
        %1052 = vmatprep.subr.mxu0 0.0
        %1053 = vmatpush1.msra.mxu0 0.0
        %1054 = vmatprep.subr.mxu0 0.0
        %1055 = vmatpush1.msra.mxu0 0.0
        %1056 = vmatprep.subr.mxu0 0.0
        %1057 = vmatpush1.msra.mxu0 0.0
        %1058 = vmatprep.subr.mxu0 0.0
        %1059 = vmatpush1.msra.mxu0 0.0
        %1060 = vmatprep.subr.mxu0 0.0
        %1061 = vmatpush1.msra.mxu0 0.0
        %1062 = vmatprep.subr.mxu0 0.0
        %1063 = vmatpush1.msra.mxu0 0.0
        %1064 = vmatprep.subr.mxu0 0.0
        %1065 = vmatpush1.msra.mxu0 0.0
        %1066 = vmatprep.subr.mxu0 0.0
        %1067 = vmatpush1.msra.mxu0 0.0
        %1068 = vmatprep.subr.mxu0 0.0
        %1069 = vmatpush1.msra.mxu0 0.0
        %1070 = vmatprep.subr.mxu0 0.0
        %1071 = vmatpush1.msra.mxu0 0.0
        %1072 = vmatprep.subr.mxu0 0.0
        %1073 = vmatpush1.msra.mxu0 0.0
        %1074 = vmatprep.subr.mxu0 0.0
        %1075 = vmatpush1.msra.mxu0 0.0
        %1076 = vmatprep.subr.mxu0 0.0
        %1077 = vmatpush1.msra.mxu0 0.0
        %1078 = vmatprep.subr.mxu0 0.0
        %1079 = vmatpush1.msra.mxu0 0.0
        %1080 = vmatprep.subr.mxu0 0.0
        %1081 = vmatpush1.msra.mxu0 0.0
        %1082 = vmatprep.subr.mxu0 0.0
        %1083 = vmatpush1.msra.mxu0 0.0
        %1084 = vmatprep.subr.mxu0 0.0
        %1085 = vmatpush1.msra.mxu0 0.0
        %1086 = vmatprep.subr.mxu0 0.0
        %1087 = vmatpush1.msra.mxu0 0.0
        %1088 = vmatprep.subr.mxu0 0.0
        %1089 = vmatpush1.msra.mxu0 0.0
        %1090 = vmatprep.subr.mxu0 0.0
        %1091 = vmatpush1.msra.mxu0 0.0
        %1092 = vmatprep.subr.mxu0 0.0
        %1093 = vmatpush1.msra.mxu0 0.0
        %1094 = vmatprep.subr.mxu0 0.0
        %1095 = vmatpush1.msra.mxu0 0.0
        %1096 = vmatprep.subr.mxu0 0.0
        %1097 = vmatpush1.msra.mxu0 0.0
        %1098 = vmatprep.subr.mxu0 0.0
        %1099 = vmatpush1.msra.mxu0 0.0
        %1100 = vmatprep.subr.mxu0 0.0
        %1101 = vmatpush1.msra.mxu0 0.0
        %1102 = vmatprep.mubr.f32.mxu0 0.0
        %1103 = vmatmul.mubr.f32.gmra.mrb[0].mxu0 %v948
        %v1104 = vpop.f32.mrb[0].mxu0
        %v1105 = vadd.f32 %v1036, %v1104
        %v1106 = vpop.f32.mrb[0].mxu0
        %1107 = vdwg.mxu0
        %v1108 = vsel %vm1020, %v1105, -inf
        %1109 = vmax.xlane.f32.xlu0 %v1108
        %v1110 = vpop.xlane.xlu0 %1109
        %v1111 = vsub.f32 %v1105, %v1110
        %v1112 = vmul.f32 %v1111, 1.442695
        %v1113 = vpow.pop %v1112
        %v1114 = vsel %vm1020, %v1113, 0.0
        %1115 = vadd.xlane.f32.xlu0 %v1114
        %v1116 = vpop.xlane.xlu0 %1115
        %v1117 = vrcp.pop %v1116
        %v1118 = vmul.f32 %v1113, %v1117
        %vm1119 = vcmask 64512
        %v1121 = vsel %vm1119, %v1118, 0
        %1123 = vmatprep.subr.mxu0 0.0
        %1124 = vmatpush1.msra.mxu0 %v928
        %1125 = vmatprep.subr.mxu0 0.0
        %1126 = vmatpush1.msra.mxu0 0.0
        %1127 = vmatprep.subr.mxu0 0.0
        %1128 = vmatpush1.msra.mxu0 0.0
        %1129 = vmatprep.subr.mxu0 0.0
        %1130 = vmatpush1.msra.mxu0 0.0
        %1131 = vmatprep.subr.mxu0 0.0
        %1132 = vmatpush1.msra.mxu0 0.0
        %1133 = vmatprep.subr.mxu0 0.0
        %1134 = vmatpush1.msra.mxu0 0.0
        %1135 = vmatprep.subr.mxu0 0.0
        %1136 = vmatpush1.msra.mxu0 0.0
        %1137 = vmatprep.subr.mxu0 0.0
        %1138 = vmatpush1.msra.mxu0 0.0
        %1139 = vmatprep.subr.mxu0 0.0
        %1140 = vmatpush1.msra.mxu0 0.0
        %1141 = vmatprep.subr.mxu0 0.0
        %1142 = vmatpush1.msra.mxu0 0.0
        %1143 = vmatprep.subr.mxu0 0.0
        %1144 = vmatpush1.msra.mxu0 0.0
        %1145 = vmatprep.subr.mxu0 0.0
        %1146 = vmatpush1.msra.mxu0 0.0
        %1147 = vmatprep.subr.mxu0 0.0
        %1148 = vmatpush1.msra.mxu0 0.0
        %1149 = vmatprep.subr.mxu0 0.0
        %1150 = vmatpush1.msra.mxu0 0.0
        %1151 = vmatprep.subr.mxu0 0.0
        %1152 = vmatpush1.msra.mxu0 0.0
        %1153 = vmatprep.subr.mxu0 0.0
        %1154 = vmatpush1.msra.mxu0 0.0
        %1155 = vmatprep.subr.mxu0 0.0
        %1156 = vmatpush1.msra.mxu0 0.0
        %1157 = vmatprep.subr.mxu0 0.0
        %1158 = vmatpush1.msra.mxu0 0.0
        %1159 = vmatprep.subr.mxu0 0.0
        %1160 = vmatpush1.msra.mxu0 0.0
        %1161 = vmatprep.subr.mxu0 0.0
        %1162 = vmatpush1.msra.mxu0 0.0
        %1163 = vmatprep.subr.mxu0 0.0
        %1164 = vmatpush1.msra.mxu0 0.0
        %1165 = vmatprep.subr.mxu0 0.0
        %1166 = vmatpush1.msra.mxu0 0.0
        %1167 = vmatprep.subr.mxu0 0.0
        %1168 = vmatpush1.msra.mxu0 0.0
        %1169 = vmatprep.subr.mxu0 0.0
        %1170 = vmatpush1.msra.mxu0 0.0
        %1171 = vmatprep.subr.mxu0 0.0
        %1172 = vmatpush1.msra.mxu0 0.0
        %1173 = vmatprep.subr.mxu0 0.0
        %1174 = vmatpush1.msra.mxu0 0.0
        %1175 = vmatprep.subr.mxu0 0.0
        %1176 = vmatpush1.msra.mxu0 0.0
        %1177 = vmatprep.subr.mxu0 0.0
        %1178 = vmatpush1.msra.mxu0 0.0
        %1179 = vmatprep.subr.mxu0 0.0
        %1180 = vmatpush1.msra.mxu0 0.0
        %1181 = vmatprep.subr.mxu0 0.0
        %1182 = vmatpush1.msra.mxu0 0.0
        %1183 = vmatprep.subr.mxu0 0.0
        %1184 = vmatpush1.msra.mxu0 0.0
        %1185 = vmatprep.subr.mxu0 0.0
        %1186 = vmatpush1.msra.mxu0 0.0
        %1187 = vmatprep.mubr.f32.mxu0 0.0
        %1188 = vmatmul.mubr.f32.gmra.mrb[0].mxu0 %v1121
        %v1189 = vpop.f32.mrb[0].mxu0
        %v1190 = vadd.f32 0.0, %v1189
        %v1191 = vpop.f32.mrb[0].mxu0
        %1192 = vdwg.mxu0
        %v1194 = vsel %vm1119, %v1031, 0
        %1196 = vmatprep.subr.mxu0 0.0
        %1197 = vmatpush1.msra.mxu0 %v923
        %1198 = vmatprep.subr.mxu0 0.0
        %1199 = vmatpush1.msra.mxu0 0.0
        %1200 = vmatprep.subr.mxu0 0.0
        %1201 = vmatpush1.msra.mxu0 0.0
        %1202 = vmatprep.subr.mxu0 0.0
        %1203 = vmatpush1.msra.mxu0 0.0
        %1204 = vmatprep.subr.mxu0 0.0
        %1205 = vmatpush1.msra.mxu0 0.0
        %1206 = vmatprep.subr.mxu0 0.0
        %1207 = vmatpush1.msra.mxu0 0.0
        %1208 = vmatprep.subr.mxu0 0.0
        %1209 = vmatpush1.msra.mxu0 0.0
        %1210 = vmatprep.subr.mxu0 0.0
        %1211 = vmatpush1.msra.mxu0 0.0
        %1212 = vmatprep.subr.mxu0 0.0
        %1213 = vmatpush1.msra.mxu0 0.0
        %1214 = vmatprep.subr.mxu0 0.0
        %1215 = vmatpush1.msra.mxu0 0.0
        %1216 = vmatprep.subr.mxu0 0.0
        %1217 = vmatpush1.msra.mxu0 0.0
        %1218 = vmatprep.subr.mxu0 0.0
        %1219 = vmatpush1.msra.mxu0 0.0
        %1220 = vmatprep.subr.mxu0 0.0
        %1221 = vmatpush1.msra.mxu0 0.0
        %1222 = vmatprep.subr.mxu0 0.0
        %1223 = vmatpush1.msra.mxu0 0.0
        %1224 = vmatprep.subr.mxu0 0.0
        %1225 = vmatpush1.msra.mxu0 0.0
        %1226 = vmatprep.subr.mxu0 0.0
        %1227 = vmatpush1.msra.mxu0 0.0
        %1228 = vmatprep.subr.mxu0 0.0
        %1229 = vmatpush1.msra.mxu0 0.0
        %1230 = vmatprep.subr.mxu0 0.0
        %1231 = vmatpush1.msra.mxu0 0.0
        %1232 = vmatprep.subr.mxu0 0.0
        %1233 = vmatpush1.msra.mxu0 0.0
        %1234 = vmatprep.subr.mxu0 0.0
        %1235 = vmatpush1.msra.mxu0 0.0
        %1236 = vmatprep.subr.mxu0 0.0
        %1237 = vmatpush1.msra.mxu0 0.0
        %1238 = vmatprep.subr.mxu0 0.0
        %1239 = vmatpush1.msra.mxu0 0.0
        %1240 = vmatprep.subr.mxu0 0.0
        %1241 = vmatpush1.msra.mxu0 0.0
        %1242 = vmatprep.subr.mxu0 0.0
        %1243 = vmatpush1.msra.mxu0 0.0
        %1244 = vmatprep.subr.mxu0 0.0
        %1245 = vmatpush1.msra.mxu0 0.0
        %1246 = vmatprep.subr.mxu0 0.0
        %1247 = vmatpush1.msra.mxu0 0.0
        %1248 = vmatprep.subr.mxu0 0.0
        %1249 = vmatpush1.msra.mxu0 0.0
        %1250 = vmatprep.subr.mxu0 0.0
        %1251 = vmatpush1.msra.mxu0 0.0
        %1252 = vmatprep.subr.mxu0 0.0
        %1253 = vmatpush1.msra.mxu0 0.0
        %1254 = vmatprep.subr.mxu0 0.0
        %1255 = vmatpush1.msra.mxu0 0.0
        %1256 = vmatprep.subr.mxu0 0.0
        %1257 = vmatpush1.msra.mxu0 0.0
        %1258 = vmatprep.subr.mxu0 0.0
        %1259 = vmatpush1.msra.mxu0 0.0
        %1260 = vmatprep.mubr.f32.mxu0 0.0
        %1261 = vmatmul.mubr.f32.gmra.mrb[0].mxu0 %v1194
        %v1262 = vpop.f32.mrb[0].mxu0
        %v1263 = vadd.f32 %v1190, %v1262
        %v1264 = vpop.f32.mrb[0].mxu0
        %1265 = vdwg.mxu0
        %vm1266 = vcmask 256000
        %1267 = vst.msk [vmem:[#allocation2] sm:$0x7] %vm1266, %v1263
        %v1268 = vld [vmem:[%s853] sm:$0x7]
        %1269 = vst.msk [vmem:[#allocation3] sm:$0x7] %vm1266, %v1268
      $region96: #{generator_forward.1} parent=91 // pred_fallthru
        _
      %v1270 = vld [vmem:[#allocation2] sm:$0x7]
      %v1271 = vld [vmem:[#allocation3] sm:$0x7]
      %v1272 = vld [vmem:[%s10] sm:$0xff]
      %v1273 = vld [vmem:[%s10 + $0x8] sm:$0xff]
      %v1274 = vld [vmem:[%s10 + $0x10] sm:$0xff]
      %v1275 = vld [vmem:[%s10 + $0x18] sm:$0xff]
      %v1276 = vld [vmem:[%s12] sm:$0x1]
      %v1278 = vlaneseq
      %v1279 = vshrl.u32 %v1278, 7
      %v1280 = vsub.s32 0, %v1279
      %v1281 = vrot.slane %v1276, %v1280
      %vm1283 = vcmask 261120
      %v1285 = vsel %vm1283, %v1271, 0
      %1287 = vmatprep.subr.mxu0 0.0
      %1288 = vmatpush1.msra.mxu0 %v1272
      %1289 = vmatprep.subr.mxu0 0.0
      %1290 = vmatpush1.msra.mxu0 %v1273
      %1291 = vmatprep.subr.mxu0 0.0
      %1292 = vmatpush1.msra.mxu0 %v1274
      %1293 = vmatprep.subr.mxu0 0.0
      %1294 = vmatpush1.msra.mxu0 %v1275
      %1295 = vmatprep.subr.mxu0 0.0
      %1296 = vmatpush1.msra.mxu0 0.0
      %1297 = vmatprep.subr.mxu0 0.0
      %1298 = vmatpush1.msra.mxu0 0.0
      %1299 = vmatprep.subr.mxu0 0.0
      %1300 = vmatpush1.msra.mxu0 0.0
      %1301 = vmatprep.subr.mxu0 0.0
      %1302 = vmatpush1.msra.mxu0 0.0
      %1303 = vmatprep.subr.mxu0 0.0
      %1304 = vmatpush1.msra.mxu0 0.0
      %1305 = vmatprep.subr.mxu0 0.0
      %1306 = vmatpush1.msra.mxu0 0.0
      %1307 = vmatprep.subr.mxu0 0.0
      %1308 = vmatpush1.msra.mxu0 0.0
      %1309 = vmatprep.subr.mxu0 0.0
      %1310 = vmatpush1.msra.mxu0 0.0
      %1311 = vmatprep.subr.mxu0 0.0
      %1312 = vmatpush1.msra.mxu0 0.0
      %1313 = vmatprep.subr.mxu0 0.0
      %1314 = vmatpush1.msra.mxu0 0.0
      %1315 = vmatprep.subr.mxu0 0.0
      %1316 = vmatpush1.msra.mxu0 0.0
      %1317 = vmatprep.subr.mxu0 0.0
      %1318 = vmatpush1.msra.mxu0 0.0
      %1319 = vmatprep.subr.mxu0 0.0
      %1320 = vmatpush1.msra.mxu0 0.0
      %1321 = vmatprep.subr.mxu0 0.0
      %1322 = vmatpush1.msra.mxu0 0.0
      %1323 = vmatprep.subr.mxu0 0.0
      %1324 = vmatpush1.msra.mxu0 0.0
      %1325 = vmatprep.subr.mxu0 0.0
      %1326 = vmatpush1.msra.mxu0 0.0
      %1327 = vmatprep.subr.mxu0 0.0
      %1328 = vmatpush1.msra.mxu0 0.0
      %1329 = vmatprep.subr.mxu0 0.0
      %1330 = vmatpush1.msra.mxu0 0.0
      %1331 = vmatprep.subr.mxu0 0.0
      %1332 = vmatpush1.msra.mxu0 0.0
      %1333 = vmatprep.subr.mxu0 0.0
      %1334 = vmatpush1.msra.mxu0 0.0
      %1335 = vmatprep.subr.mxu0 0.0
      %1336 = vmatpush1.msra.mxu0 0.0
      %1337 = vmatprep.subr.mxu0 0.0
      %1338 = vmatpush1.msra.mxu0 0.0
      %1339 = vmatprep.subr.mxu0 0.0
      %1340 = vmatpush1.msra.mxu0 0.0
      %1341 = vmatprep.subr.mxu0 0.0
      %1342 = vmatpush1.msra.mxu0 0.0
      %1343 = vmatprep.subr.mxu0 0.0
      %1344 = vmatpush1.msra.mxu0 0.0
      %1345 = vmatprep.subr.mxu0 0.0
      %1346 = vmatpush1.msra.mxu0 0.0
      %1347 = vmatprep.subr.mxu0 0.0
      %1348 = vmatpush1.msra.mxu0 0.0
      %1349 = vmatprep.subr.mxu0 0.0
      %1350 = vmatpush1.msra.mxu0 0.0
      %1351 = vmatprep.mubr.f32.mxu0 0.0
      %1352 = vmatmul.mubr.f32.gmra.mrb[0].mxu0 %v1285
      %v1353 = vpop.f32.mrb[0].mxu0
      %v1354 = vadd.f32 %v1281, %v1353
      %v1355 = vpop.f32.mrb[0].mxu0
      %1356 = vdwg.mxu0
      %v1357 = vld [vmem:[%s11] sm:$0xff]
      %v1358 = vld [vmem:[%s11 + $0x8] sm:$0xff]
      %v1359 = vld [vmem:[%s11 + $0x10] sm:$0xff]
      %v1360 = vld [vmem:[%s11 + $0x18] sm:$0xff]
      %v1361 = vld [vmem:[%s13] sm:$0x1]
      %v1363 = vlaneseq
      %v1364 = vshrl.u32 %v1363, 7
      %v1365 = vsub.s32 0, %v1364
      %v1366 = vrot.slane %v1361, %v1365
      %v1369 = vsel %vm1283, %v1270, 0
      %1371 = vmatprep.subr.mxu0 0.0
      %1372 = vmatpush1.msra.mxu0 %v1357
      %1373 = vmatprep.subr.mxu0 0.0
      %1374 = vmatpush1.msra.mxu0 %v1358
      %1375 = vmatprep.subr.mxu0 0.0
      %1376 = vmatpush1.msra.mxu0 %v1359
      %1377 = vmatprep.subr.mxu0 0.0
      %1378 = vmatpush1.msra.mxu0 %v1360
      %1379 = vmatprep.subr.mxu0 0.0
      %1380 = vmatpush1.msra.mxu0 0.0
      %1381 = vmatprep.subr.mxu0 0.0
      %1382 = vmatpush1.msra.mxu0 0.0
      %1383 = vmatprep.subr.mxu0 0.0
      %1384 = vmatpush1.msra.mxu0 0.0
      %1385 = vmatprep.subr.mxu0 0.0
      %1386 = vmatpush1.msra.mxu0 0.0
      %1387 = vmatprep.subr.mxu0 0.0
      %1388 = vmatpush1.msra.mxu0 0.0
      %1389 = vmatprep.subr.mxu0 0.0
      %1390 = vmatpush1.msra.mxu0 0.0
      %1391 = vmatprep.subr.mxu0 0.0
      %1392 = vmatpush1.msra.mxu0 0.0
      %1393 = vmatprep.subr.mxu0 0.0
      %1394 = vmatpush1.msra.mxu0 0.0
      %1395 = vmatprep.subr.mxu0 0.0
      %1396 = vmatpush1.msra.mxu0 0.0
      %1397 = vmatprep.subr.mxu0 0.0
      %1398 = vmatpush1.msra.mxu0 0.0
      %1399 = vmatprep.subr.mxu0 0.0
      %1400 = vmatpush1.msra.mxu0 0.0
      %1401 = vmatprep.subr.mxu0 0.0
      %1402 = vmatpush1.msra.mxu0 0.0
      %1403 = vmatprep.subr.mxu0 0.0
      %1404 = vmatpush1.msra.mxu0 0.0
      %1405 = vmatprep.subr.mxu0 0.0
      %1406 = vmatpush1.msra.mxu0 0.0
      %1407 = vmatprep.subr.mxu0 0.0
      %1408 = vmatpush1.msra.mxu0 0.0
      %1409 = vmatprep.subr.mxu0 0.0
      %1410 = vmatpush1.msra.mxu0 0.0
      %1411 = vmatprep.subr.mxu0 0.0
      %1412 = vmatpush1.msra.mxu0 0.0
      %1413 = vmatprep.subr.mxu0 0.0
      %1414 = vmatpush1.msra.mxu0 0.0
      %1415 = vmatprep.subr.mxu0 0.0
      %1416 = vmatpush1.msra.mxu0 0.0
      %1417 = vmatprep.subr.mxu0 0.0
      %1418 = vmatpush1.msra.mxu0 0.0
      %1419 = vmatprep.subr.mxu0 0.0
      %1420 = vmatpush1.msra.mxu0 0.0
      %1421 = vmatprep.subr.mxu0 0.0
      %1422 = vmatpush1.msra.mxu0 0.0
      %1423 = vmatprep.subr.mxu0 0.0
      %1424 = vmatpush1.msra.mxu0 0.0
      %1425 = vmatprep.subr.mxu0 0.0
      %1426 = vmatpush1.msra.mxu0 0.0
      %1427 = vmatprep.subr.mxu0 0.0
      %1428 = vmatpush1.msra.mxu0 0.0
      %1429 = vmatprep.subr.mxu0 0.0
      %1430 = vmatpush1.msra.mxu0 0.0
      %1431 = vmatprep.subr.mxu0 0.0
      %1432 = vmatpush1.msra.mxu0 0.0
      %1433 = vmatprep.subr.mxu0 0.0
      %1434 = vmatpush1.msra.mxu0 0.0
      %1435 = vmatprep.mubr.f32.mxu0 0.0
      %1436 = vmatmul.mubr.f32.gmra.mrb[0].mxu0 %v1369
      %v1437 = vpop.f32.mrb[0].mxu0
      %v1438 = vadd.f32 %v1366, %v1437
      %v1439 = vpop.f32.mrb[0].mxu0
      %1440 = vdwg.mxu0
      %v1441 = vadd.f32 %v1354, %v1438
      %v1442 = vxor.u32 %v1441, 2147483648
      %v1443 = vmul.f32 %v1442, 1.442695
      %v1444 = vpow.pop %v1443
      %v1445 = vadd.f32 %v1444, 1.0
      %v1446 = vrcp.pop %v1445
      %v1447 = vmul.f32 1.0, %v1446
      %1449 = vrot.lane.b32.xlu0 %v1438, 64
      %v1450 = vpop.permute.xlu0 %1449
      %v1452 = vmul.f32 %v1447, %v1450
      %1454 = vrot.lane.b32.xlu0 %v1452, 64
      %v1455 = vpop.permute.xlu0 %1454
      %v1457 = vadd.f32 %v1354, %v1455
      %v1458 = vtanh.pop %v1457
      %v1459 = vsub.f32 1.0, %v1447
      %1461 = vrot.lane.b32.xlu0 %v1458, 96
      %v1462 = vpop.permute.xlu0 %1461
      %v1464 = vmul.f32 %v1459, %v1462
      %1465 = vrot.lane.b32.xlu0 %v1270, 32
      %v1466 = vpop.permute.xlu0 %1465
      %v1468 = vmul.f32 %v1447, %v1466
      %v1469 = vadd.f32 %v1464, %v1468
      %1471 = vrot.lane.b32.xlu0 %v1469, 96
      %v1472 = vpop.permute.xlu0 %1471
      %vm1474 = vcmask 256000
      %1475 = vst.msk [vmem:[#allocation2] sm:$0x7] %vm1474, %v1472
      %v1477 = vlaneseq
      %v1478 = vshrl.u32 %v1477, 7
      %v1479 = vsub.s32 0, %v1478
      %v1480 = vrot.slane %v933, %v1479
      %v1482 = vsel %vm1283, %v1472, 0
      %1484 = vmatprep.subr.mxu0 0.0
      %1485 = vmatpush1.msra.mxu0 %v924
      %1486 = vmatprep.subr.mxu0 0.0
      %1487 = vmatpush1.msra.mxu0 %v925
      %1488 = vmatprep.subr.mxu0 0.0
      %1489 = vmatpush1.msra.mxu0 %v926
      %1490 = vmatprep.subr.mxu0 0.0
      %1491 = vmatpush1.msra.mxu0 %v927
      %1492 = vmatprep.subr.mxu0 0.0
      %1493 = vmatpush1.msra.mxu0 0.0
      %1494 = vmatprep.subr.mxu0 0.0
      %1495 = vmatpush1.msra.mxu0 0.0
      %1496 = vmatprep.subr.mxu0 0.0
      %1497 = vmatpush1.msra.mxu0 0.0
      %1498 = vmatprep.subr.mxu0 0.0
      %1499 = vmatpush1.msra.mxu0 0.0
      %1500 = vmatprep.subr.mxu0 0.0
      %1501 = vmatpush1.msra.mxu0 0.0
      %1502 = vmatprep.subr.mxu0 0.0
      %1503 = vmatpush1.msra.mxu0 0.0
      %1504 = vmatprep.subr.mxu0 0.0
      %1505 = vmatpush1.msra.mxu0 0.0
      %1506 = vmatprep.subr.mxu0 0.0
      %1507 = vmatpush1.msra.mxu0 0.0
      %1508 = vmatprep.subr.mxu0 0.0
      %1509 = vmatpush1.msra.mxu0 0.0
      %1510 = vmatprep.subr.mxu0 0.0
      %1511 = vmatpush1.msra.mxu0 0.0
      %1512 = vmatprep.subr.mxu0 0.0
      %1513 = vmatpush1.msra.mxu0 0.0
      %1514 = vmatprep.subr.mxu0 0.0
      %1515 = vmatpush1.msra.mxu0 0.0
      %1516 = vmatprep.subr.mxu0 0.0
      %1517 = vmatpush1.msra.mxu0 0.0
      %1518 = vmatprep.subr.mxu0 0.0
      %1519 = vmatpush1.msra.mxu0 0.0
      %1520 = vmatprep.subr.mxu0 0.0
      %1521 = vmatpush1.msra.mxu0 0.0
      %1522 = vmatprep.subr.mxu0 0.0
      %1523 = vmatpush1.msra.mxu0 0.0
      %1524 = vmatprep.subr.mxu0 0.0
      %1525 = vmatpush1.msra.mxu0 0.0
      %1526 = vmatprep.subr.mxu0 0.0
      %1527 = vmatpush1.msra.mxu0 0.0
      %1528 = vmatprep.subr.mxu0 0.0
      %1529 = vmatpush1.msra.mxu0 0.0
      %1530 = vmatprep.subr.mxu0 0.0
      %1531 = vmatpush1.msra.mxu0 0.0
      %1532 = vmatprep.subr.mxu0 0.0
      %1533 = vmatpush1.msra.mxu0 0.0
      %1534 = vmatprep.subr.mxu0 0.0
      %1535 = vmatpush1.msra.mxu0 0.0
      %1536 = vmatprep.subr.mxu0 0.0
      %1537 = vmatpush1.msra.mxu0 0.0
      %1538 = vmatprep.subr.mxu0 0.0
      %1539 = vmatpush1.msra.mxu0 0.0
      %1540 = vmatprep.subr.mxu0 0.0
      %1541 = vmatpush1.msra.mxu0 0.0
      %1542 = vmatprep.subr.mxu0 0.0
      %1543 = vmatpush1.msra.mxu0 0.0
      %1544 = vmatprep.subr.mxu0 0.0
      %1545 = vmatpush1.msra.mxu0 0.0
      %1546 = vmatprep.subr.mxu0 0.0
      %1547 = vmatpush1.msra.mxu0 0.0
      %1548 = vmatprep.mubr.f32.mxu0 0.0
      %1549 = vmatmul.mubr.f32.gmra.mrb[0].mxu0 %v1482
      %v1550 = vpop.f32.mrb[0].mxu0
      %v1551 = vadd.f32 %v1480, %v1550
      %v1552 = vpop.f32.mrb[0].mxu0
      %1553 = vdwg.mxu0
      %vm1554 = vcmask 59392
      %v1555 = vsel %vm1554, %v1551, -inf
      %1556 = vmax.xlane.f32.xlu0 %v1555
      %v1557 = vpop.xlane.xlu0 %1556
      %v1558 = vsub.f32 %v1551, %v1557
      %v1559 = vmul.f32 %v1558, 1.442695
      %v1560 = vpow.pop %v1559
      %v1561 = vsel %vm1554, %v1560, 0.0
      %1562 = vadd.xlane.f32.xlu0 %v1561
      %v1563 = vpop.xlane.xlu0 %1562
      %v1564 = vrcp.pop %v1563
      %v1565 = vmul.f32 %v1560, %v1564
      %vm1566 = vcmask 64512
      %v1568 = vsel %vm1566, %v1565, 0
      %1570 = vmatprep.subr.mxu0 0.0
      %1571 = vmatpush1.msra.mxu0 %v923
      %1572 = vmatprep.subr.mxu0 0.0
      %1573 = vmatpush1.msra.mxu0 0.0
      %1574 = vmatprep.subr.mxu0 0.0
      %1575 = vmatpush1.msra.mxu0 0.0
      %1576 = vmatprep.subr.mxu0 0.0
      %1577 = vmatpush1.msra.mxu0 0.0
      %1578 = vmatprep.subr.mxu0 0.0
      %1579 = vmatpush1.msra.mxu0 0.0
      %1580 = vmatprep.subr.mxu0 0.0
      %1581 = vmatpush1.msra.mxu0 0.0
      %1582 = vmatprep.subr.mxu0 0.0
      %1583 = vmatpush1.msra.mxu0 0.0
      %1584 = vmatprep.subr.mxu0 0.0
      %1585 = vmatpush1.msra.mxu0 0.0
      %1586 = vmatprep.subr.mxu0 0.0
      %1587 = vmatpush1.msra.mxu0 0.0
      %1588 = vmatprep.subr.mxu0 0.0
      %1589 = vmatpush1.msra.mxu0 0.0
      %1590 = vmatprep.subr.mxu0 0.0
      %1591 = vmatpush1.msra.mxu0 0.0
      %1592 = vmatprep.subr.mxu0 0.0
      %1593 = vmatpush1.msra.mxu0 0.0
      %1594 = vmatprep.subr.mxu0 0.0
      %1595 = vmatpush1.msra.mxu0 0.0
      %1596 = vmatprep.subr.mxu0 0.0
      %1597 = vmatpush1.msra.mxu0 0.0
      %1598 = vmatprep.subr.mxu0 0.0
      %1599 = vmatpush1.msra.mxu0 0.0
      %1600 = vmatprep.subr.mxu0 0.0
      %1601 = vmatpush1.msra.mxu0 0.0
      %1602 = vmatprep.subr.mxu0 0.0
      %1603 = vmatpush1.msra.mxu0 0.0
      %1604 = vmatprep.subr.mxu0 0.0
      %1605 = vmatpush1.msra.mxu0 0.0
      %1606 = vmatprep.subr.mxu0 0.0
      %1607 = vmatpush1.msra.mxu0 0.0
      %1608 = vmatprep.subr.mxu0 0.0
      %1609 = vmatpush1.msra.mxu0 0.0
      %1610 = vmatprep.subr.mxu0 0.0
      %1611 = vmatpush1.msra.mxu0 0.0
      %1612 = vmatprep.subr.mxu0 0.0
      %1613 = vmatpush1.msra.mxu0 0.0
      %1614 = vmatprep.subr.mxu0 0.0
      %1615 = vmatpush1.msra.mxu0 0.0
      %1616 = vmatprep.subr.mxu0 0.0
      %1617 = vmatpush1.msra.mxu0 0.0
      %1618 = vmatprep.subr.mxu0 0.0
      %1619 = vmatpush1.msra.mxu0 0.0
      %1620 = vmatprep.subr.mxu0 0.0
      %1621 = vmatpush1.msra.mxu0 0.0
      %1622 = vmatprep.subr.mxu0 0.0
      %1623 = vmatpush1.msra.mxu0 0.0
      %1624 = vmatprep.subr.mxu0 0.0
      %1625 = vmatpush1.msra.mxu0 0.0
      %1626 = vmatprep.subr.mxu0 0.0
      %1627 = vmatpush1.msra.mxu0 0.0
      %1628 = vmatprep.subr.mxu0 0.0
      %1629 = vmatpush1.msra.mxu0 0.0
      %1630 = vmatprep.subr.mxu0 0.0
      %1631 = vmatpush1.msra.mxu0 0.0
      %1632 = vmatprep.subr.mxu0 0.0
      %1633 = vmatpush1.msra.mxu0 0.0
      %1634 = vmatprep.mubr.f32.mxu0 0.0
      %1635 = vmatmul.mubr.f32.gmra.mrb[0].mxu0 %v1568
      %v1636 = vpop.f32.mrb[0].mxu0
      %v1637 = vadd.f32 0.0, %v1636
      %v1638 = vpop.f32.mrb[0].mxu0
      %1639 = vdwg.mxu0
      %v1641 = vlaneseq
      %v1642 = vshrl.u32 %v1641, 7
      %v1643 = vsub.s32 0, %v1642
      %v1644 = vrot.slane %v934, %v1643
      %1646 = vmatprep.subr.mxu0 0.0
      %1647 = vmatpush1.msra.mxu0 %v929
      %1648 = vmatprep.subr.mxu0 0.0
      %1649 = vmatpush1.msra.mxu0 %v930
      %1650 = vmatprep.subr.mxu0 0.0
      %1651 = vmatpush1.msra.mxu0 %v931
      %1652 = vmatprep.subr.mxu0 0.0
      %1653 = vmatpush1.msra.mxu0 %v932
      %1654 = vmatprep.subr.mxu0 0.0
      %1655 = vmatpush1.msra.mxu0 0.0
      %1656 = vmatprep.subr.mxu0 0.0
      %1657 = vmatpush1.msra.mxu0 0.0
      %1658 = vmatprep.subr.mxu0 0.0
      %1659 = vmatpush1.msra.mxu0 0.0
      %1660 = vmatprep.subr.mxu0 0.0
      %1661 = vmatpush1.msra.mxu0 0.0
      %1662 = vmatprep.subr.mxu0 0.0
      %1663 = vmatpush1.msra.mxu0 0.0
      %1664 = vmatprep.subr.mxu0 0.0
      %1665 = vmatpush1.msra.mxu0 0.0
      %1666 = vmatprep.subr.mxu0 0.0
      %1667 = vmatpush1.msra.mxu0 0.0
      %1668 = vmatprep.subr.mxu0 0.0
      %1669 = vmatpush1.msra.mxu0 0.0
      %1670 = vmatprep.subr.mxu0 0.0
      %1671 = vmatpush1.msra.mxu0 0.0
      %1672 = vmatprep.subr.mxu0 0.0
      %1673 = vmatpush1.msra.mxu0 0.0
      %1674 = vmatprep.subr.mxu0 0.0
      %1675 = vmatpush1.msra.mxu0 0.0
      %1676 = vmatprep.subr.mxu0 0.0
      %1677 = vmatpush1.msra.mxu0 0.0
      %1678 = vmatprep.subr.mxu0 0.0
      %1679 = vmatpush1.msra.mxu0 0.0
      %1680 = vmatprep.subr.mxu0 0.0
      %1681 = vmatpush1.msra.mxu0 0.0
      %1682 = vmatprep.subr.mxu0 0.0
      %1683 = vmatpush1.msra.mxu0 0.0
      %1684 = vmatprep.subr.mxu0 0.0
      %1685 = vmatpush1.msra.mxu0 0.0
      %1686 = vmatprep.subr.mxu0 0.0
      %1687 = vmatpush1.msra.mxu0 0.0
      %1688 = vmatprep.subr.mxu0 0.0
      %1689 = vmatpush1.msra.mxu0 0.0
      %1690 = vmatprep.subr.mxu0 0.0
      %1691 = vmatpush1.msra.mxu0 0.0
      %1692 = vmatprep.subr.mxu0 0.0
      %1693 = vmatpush1.msra.mxu0 0.0
      %1694 = vmatprep.subr.mxu0 0.0
      %1695 = vmatpush1.msra.mxu0 0.0
      %1696 = vmatprep.subr.mxu0 0.0
      %1697 = vmatpush1.msra.mxu0 0.0
      %1698 = vmatprep.subr.mxu0 0.0
      %1699 = vmatpush1.msra.mxu0 0.0
      %1700 = vmatprep.subr.mxu0 0.0
      %1701 = vmatpush1.msra.mxu0 0.0
      %1702 = vmatprep.subr.mxu0 0.0
      %1703 = vmatpush1.msra.mxu0 0.0
      %1704 = vmatprep.subr.mxu0 0.0
      %1705 = vmatpush1.msra.mxu0 0.0
      %1706 = vmatprep.subr.mxu0 0.0
      %1707 = vmatpush1.msra.mxu0 0.0
      %1708 = vmatprep.subr.mxu0 0.0
      %1709 = vmatpush1.msra.mxu0 0.0
      %1710 = vmatprep.mubr.f32.mxu0 0.0
      %1711 = vmatmul.mubr.f32.gmra.mrb[0].mxu0 %v1482
      %v1712 = vpop.f32.mrb[0].mxu0
      %v1713 = vadd.f32 %v1644, %v1712
      %v1714 = vpop.f32.mrb[0].mxu0
      %1715 = vdwg.mxu0
      %v1716 = vsel %vm1554, %v1713, -inf
      %1717 = vmax.xlane.f32.xlu0 %v1716
      %v1718 = vpop.xlane.xlu0 %1717
      %v1719 = vsub.f32 %v1713, %v1718
      %v1720 = vmul.f32 %v1719, 1.442695
      %v1721 = vpow.pop %v1720
      %v1722 = vsel %vm1554, %v1721, 0.0
      %1723 = vadd.xlane.f32.xlu0 %v1722
      %v1724 = vpop.xlane.xlu0 %1723
      %v1725 = vrcp.pop %v1724
      %v1726 = vmul.f32 %v1721, %v1725
      %v1728 = vsel %vm1566, %v1726, 0
      %1730 = vmatprep.subr.mxu0 0.0
      %1731 = vmatpush1.msra.mxu0 %v928
      %1732 = vmatprep.subr.mxu0 0.0
      %1733 = vmatpush1.msra.mxu0 0.0
      %1734 = vmatprep.subr.mxu0 0.0
      %1735 = vmatpush1.msra.mxu0 0.0
      %1736 = vmatprep.subr.mxu0 0.0
      %1737 = vmatpush1.msra.mxu0 0.0
      %1738 = vmatprep.subr.mxu0 0.0
      %1739 = vmatpush1.msra.mxu0 0.0
      %1740 = vmatprep.subr.mxu0 0.0
      %1741 = vmatpush1.msra.mxu0 0.0
      %1742 = vmatprep.subr.mxu0 0.0
      %1743 = vmatpush1.msra.mxu0 0.0
      %1744 = vmatprep.subr.mxu0 0.0
      %1745 = vmatpush1.msra.mxu0 0.0
      %1746 = vmatprep.subr.mxu0 0.0
      %1747 = vmatpush1.msra.mxu0 0.0
      %1748 = vmatprep.subr.mxu0 0.0
      %1749 = vmatpush1.msra.mxu0 0.0
      %1750 = vmatprep.subr.mxu0 0.0
      %1751 = vmatpush1.msra.mxu0 0.0
      %1752 = vmatprep.subr.mxu0 0.0
      %1753 = vmatpush1.msra.mxu0 0.0
      %1754 = vmatprep.subr.mxu0 0.0
      %1755 = vmatpush1.msra.mxu0 0.0
      %1756 = vmatprep.subr.mxu0 0.0
      %1757 = vmatpush1.msra.mxu0 0.0
      %1758 = vmatprep.subr.mxu0 0.0
      %1759 = vmatpush1.msra.mxu0 0.0
      %1760 = vmatprep.subr.mxu0 0.0
      %1761 = vmatpush1.msra.mxu0 0.0
      %1762 = vmatprep.subr.mxu0 0.0
      %1763 = vmatpush1.msra.mxu0 0.0
      %1764 = vmatprep.subr.mxu0 0.0
      %1765 = vmatpush1.msra.mxu0 0.0
      %1766 = vmatprep.subr.mxu0 0.0
      %1767 = vmatpush1.msra.mxu0 0.0
      %1768 = vmatprep.subr.mxu0 0.0
      %1769 = vmatpush1.msra.mxu0 0.0
      %1770 = vmatprep.subr.mxu0 0.0
      %1771 = vmatpush1.msra.mxu0 0.0
      %1772 = vmatprep.subr.mxu0 0.0
      %1773 = vmatpush1.msra.mxu0 0.0
      %1774 = vmatprep.subr.mxu0 0.0
      %1775 = vmatpush1.msra.mxu0 0.0
      %1776 = vmatprep.subr.mxu0 0.0
      %1777 = vmatpush1.msra.mxu0 0.0
      %1778 = vmatprep.subr.mxu0 0.0
      %1779 = vmatpush1.msra.mxu0 0.0
      %1780 = vmatprep.subr.mxu0 0.0
      %1781 = vmatpush1.msra.mxu0 0.0
      %1782 = vmatprep.subr.mxu0 0.0
      %1783 = vmatpush1.msra.mxu0 0.0
      %1784 = vmatprep.subr.mxu0 0.0
      %1785 = vmatpush1.msra.mxu0 0.0
      %1786 = vmatprep.subr.mxu0 0.0
      %1787 = vmatpush1.msra.mxu0 0.0
      %1788 = vmatprep.subr.mxu0 0.0
      %1789 = vmatpush1.msra.mxu0 0.0
      %1790 = vmatprep.subr.mxu0 0.0
      %1791 = vmatpush1.msra.mxu0 0.0
      %1792 = vmatprep.subr.mxu0 0.0
      %1793 = vmatpush1.msra.mxu0 0.0
      %1794 = vmatprep.mubr.f32.mxu0 0.0
      %1795 = vmatmul.mubr.f32.gmra.mrb[0].mxu0 %v1728
      %v1796 = vpop.f32.mrb[0].mxu0
      %v1797 = vadd.f32 0.0, %v1796
      %v1798 = vpop.f32.mrb[0].mxu0
      %1799 = vdwg.mxu0
      // Predicated region
      $region97: #{generator_forward.1} parent=91 // pred_check
        %p1800 = pneg %p935
      $region98: #{generator_forward.1} parent=91 // pred_check_branch
        %1802 = sbr.rel (%p1800) target = $region100
      $region99: #{generator_forward.1} parent=91 // pred_region
        %v1803 = vld [vmem:[%s14] sm:$0xff]
        %v1804 = vld [vmem:[%s14 + $0x8] sm:$0xff]
        %v1805 = vld [vmem:[%s14 + $0x10] sm:$0xff]
        %v1806 = vld [vmem:[%s14 + $0x18] sm:$0xff]
        %v1807 = vld [vmem:[%s14 + $0x20] sm:$0xff]
        %v1808 = vld [vmem:[%s14 + $0x28] sm:$0xff]
        %v1809 = vld [vmem:[%s14 + $0x30] sm:$0xff]
        %v1810 = vld [vmem:[%s14 + $0x38] sm:$0xff]
        %v1812 = vsel %vm1283, %v1797, 0
        %1814 = vmatprep.subr.mxu0 0.0
        %1815 = vmatpush1.msra.mxu0 %v1807
        %1816 = vmatprep.subr.mxu0 0.0
        %1817 = vmatpush1.msra.mxu0 %v1808
        %1818 = vmatprep.subr.mxu0 0.0
        %1819 = vmatpush1.msra.mxu0 %v1809
        %1820 = vmatprep.subr.mxu0 0.0
        %1821 = vmatpush1.msra.mxu0 %v1810
        %1822 = vmatprep.subr.mxu0 0.0
        %1823 = vmatpush1.msra.mxu0 0.0
        %1824 = vmatprep.subr.mxu0 0.0
        %1825 = vmatpush1.msra.mxu0 0.0
        %1826 = vmatprep.subr.mxu0 0.0
        %1827 = vmatpush1.msra.mxu0 0.0
        %1828 = vmatprep.subr.mxu0 0.0
        %1829 = vmatpush1.msra.mxu0 0.0
        %1830 = vmatprep.subr.mxu0 0.0
        %1831 = vmatpush1.msra.mxu0 0.0
        %1832 = vmatprep.subr.mxu0 0.0
        %1833 = vmatpush1.msra.mxu0 0.0
        %1834 = vmatprep.subr.mxu0 0.0
        %1835 = vmatpush1.msra.mxu0 0.0
        %1836 = vmatprep.subr.mxu0 0.0
        %1837 = vmatpush1.msra.mxu0 0.0
        %1838 = vmatprep.subr.mxu0 0.0
        %1839 = vmatpush1.msra.mxu0 0.0
        %1840 = vmatprep.subr.mxu0 0.0
        %1841 = vmatpush1.msra.mxu0 0.0
        %1842 = vmatprep.subr.mxu0 0.0
        %1843 = vmatpush1.msra.mxu0 0.0
        %1844 = vmatprep.subr.mxu0 0.0
        %1845 = vmatpush1.msra.mxu0 0.0
        %1846 = vmatprep.subr.mxu0 0.0
        %1847 = vmatpush1.msra.mxu0 0.0
        %1848 = vmatprep.subr.mxu0 0.0
        %1849 = vmatpush1.msra.mxu0 0.0
        %1850 = vmatprep.subr.mxu0 0.0
        %1851 = vmatpush1.msra.mxu0 0.0
        %1852 = vmatprep.subr.mxu0 0.0
        %1853 = vmatpush1.msra.mxu0 0.0
        %1854 = vmatprep.subr.mxu0 0.0
        %1855 = vmatpush1.msra.mxu0 0.0
        %1856 = vmatprep.subr.mxu0 0.0
        %1857 = vmatpush1.msra.mxu0 0.0
        %1858 = vmatprep.subr.mxu0 0.0
        %1859 = vmatpush1.msra.mxu0 0.0
        %1860 = vmatprep.subr.mxu0 0.0
        %1861 = vmatpush1.msra.mxu0 0.0
        %1862 = vmatprep.subr.mxu0 0.0
        %1863 = vmatpush1.msra.mxu0 0.0
        %1864 = vmatprep.subr.mxu0 0.0
        %1865 = vmatpush1.msra.mxu0 0.0
        %1866 = vmatprep.subr.mxu0 0.0
        %1867 = vmatpush1.msra.mxu0 0.0
        %1868 = vmatprep.subr.mxu0 0.0
        %1869 = vmatpush1.msra.mxu0 0.0
        %1870 = vmatprep.subr.mxu0 0.0
        %1871 = vmatpush1.msra.mxu0 0.0
        %1872 = vmatprep.subr.mxu0 0.0
        %1873 = vmatpush1.msra.mxu0 0.0
        %1874 = vmatprep.subr.mxu0 0.0
        %1875 = vmatpush1.msra.mxu0 0.0
        %1876 = vmatprep.subr.mxu0 0.0
        %1877 = vmatpush1.msra.mxu0 0.0
        %1878 = vmatprep.mubr.f32.mxu0 0.0
        %1879 = vmatmul.mubr.f32.gmra.mrb[0].mxu0 %v1812
        %v1880 = vpop.f32.mrb[0].mxu0
        %v1881 = vadd.f32 0.0, %v1880
        %v1882 = vpop.f32.mrb[0].mxu0
        %1883 = vdwg.mxu0
        %v1885 = vsel %vm1283, %v1637, 0
        %1887 = vmatprep.subr.mxu0 0.0
        %1888 = vmatpush1.msra.mxu0 %v1803
        %1889 = vmatprep.subr.mxu0 0.0
        %1890 = vmatpush1.msra.mxu0 %v1804
        %1891 = vmatprep.subr.mxu0 0.0
        %1892 = vmatpush1.msra.mxu0 %v1805
        %1893 = vmatprep.subr.mxu0 0.0
        %1894 = vmatpush1.msra.mxu0 %v1806
        %1895 = vmatprep.subr.mxu0 0.0
        %1896 = vmatpush1.msra.mxu0 0.0
        %1897 = vmatprep.subr.mxu0 0.0
        %1898 = vmatpush1.msra.mxu0 0.0
        %1899 = vmatprep.subr.mxu0 0.0
        %1900 = vmatpush1.msra.mxu0 0.0
        %1901 = vmatprep.subr.mxu0 0.0
        %1902 = vmatpush1.msra.mxu0 0.0
        %1903 = vmatprep.subr.mxu0 0.0
        %1904 = vmatpush1.msra.mxu0 0.0
        %1905 = vmatprep.subr.mxu0 0.0
        %1906 = vmatpush1.msra.mxu0 0.0
        %1907 = vmatprep.subr.mxu0 0.0
        %1908 = vmatpush1.msra.mxu0 0.0
        %1909 = vmatprep.subr.mxu0 0.0
        %1910 = vmatpush1.msra.mxu0 0.0
        %1911 = vmatprep.subr.mxu0 0.0
        %1912 = vmatpush1.msra.mxu0 0.0
        %1913 = vmatprep.subr.mxu0 0.0
        %1914 = vmatpush1.msra.mxu0 0.0
        %1915 = vmatprep.subr.mxu0 0.0
        %1916 = vmatpush1.msra.mxu0 0.0
        %1917 = vmatprep.subr.mxu0 0.0
        %1918 = vmatpush1.msra.mxu0 0.0
        %1919 = vmatprep.subr.mxu0 0.0
        %1920 = vmatpush1.msra.mxu0 0.0
        %1921 = vmatprep.subr.mxu0 0.0
        %1922 = vmatpush1.msra.mxu0 0.0
        %1923 = vmatprep.subr.mxu0 0.0
        %1924 = vmatpush1.msra.mxu0 0.0
        %1925 = vmatprep.subr.mxu0 0.0
        %1926 = vmatpush1.msra.mxu0 0.0
        %1927 = vmatprep.subr.mxu0 0.0
        %1928 = vmatpush1.msra.mxu0 0.0
        %1929 = vmatprep.subr.mxu0 0.0
        %1930 = vmatpush1.msra.mxu0 0.0
        %1931 = vmatprep.subr.mxu0 0.0
        %1932 = vmatpush1.msra.mxu0 0.0
        %1933 = vmatprep.subr.mxu0 0.0
        %1934 = vmatpush1.msra.mxu0 0.0
        %1935 = vmatprep.subr.mxu0 0.0
        %1936 = vmatpush1.msra.mxu0 0.0
        %1937 = vmatprep.subr.mxu0 0.0
        %1938 = vmatpush1.msra.mxu0 0.0
        %1939 = vmatprep.subr.mxu0 0.0
        %1940 = vmatpush1.msra.mxu0 0.0
        %1941 = vmatprep.subr.mxu0 0.0
        %1942 = vmatpush1.msra.mxu0 0.0
        %1943 = vmatprep.subr.mxu0 0.0
        %1944 = vmatpush1.msra.mxu0 0.0
        %1945 = vmatprep.subr.mxu0 0.0
        %1946 = vmatpush1.msra.mxu0 0.0
        %1947 = vmatprep.subr.mxu0 0.0
        %1948 = vmatpush1.msra.mxu0 0.0
        %1949 = vmatprep.subr.mxu0 0.0
        %1950 = vmatpush1.msra.mxu0 0.0
        %1951 = vmatprep.mubr.f32.mxu0 0.0
        %1952 = vmatmul.mubr.f32.gmra.mrb[0].mxu0 %v1885
        %v1953 = vpop.f32.mrb[0].mxu0
        %v1954 = vadd.f32 %v1881, %v1953
        %v1955 = vpop.f32.mrb[0].mxu0
        %1956 = vdwg.mxu0
        %v1957 = vld [vmem:[%s15] sm:$0x1]
        %v1959 = vlaneseq
        %v1960 = vshrl.u32 %v1959, 7
        %v1961 = vsub.s32 0, %v1960
        %v1962 = vrot.slane %v1957, %v1961
        %v1964 = vadd.f32 %v1954, %v1962
        %vm1965 = vcmask 18432
        %1966 = vst.msk [vmem:[%s921] sm:$0x7] %vm1965, %v1964
      $region100: #{generator_forward.1} parent=91 // pred_fallthru
        _
      %v1967 = vld [vmem:[%s16] sm:$0xff]
      %v1968 = vld [vmem:[%s16 + $0x8] sm:$0xff]
      %v1969 = vld [vmem:[%s16 + $0x10] sm:$0xff]
      %v1970 = vld [vmem:[%s16 + $0x18] sm:$0xff]
      %v1971 = vld [vmem:[%s16 + $0x20] sm:$0xff]
      %v1972 = vld [vmem:[%s16 + $0x28] sm:$0xff]
      %v1973 = vld [vmem:[%s16 + $0x30] sm:$0xff]
      %v1974 = vld [vmem:[%s16 + $0x38] sm:$0xff]
      %1975 = vmatprep.subr.mxu0 0.0
      %1976 = vmatpush1.msra.mxu0 %v1971
      %1977 = vmatprep.subr.mxu0 0.0
      %1978 = vmatpush1.msra.mxu0 %v1972
      %1979 = vmatprep.subr.mxu0 0.0
      %1980 = vmatpush1.msra.mxu0 %v1973
      %1981 = vmatprep.subr.mxu0 0.0
      %1982 = vmatpush1.msra.mxu0 %v1974
      %1983 = vmatprep.subr.mxu0 0.0
      %1984 = vmatpush1.msra.mxu0 0.0
      %1985 = vmatprep.subr.mxu0 0.0
      %1986 = vmatpush1.msra.mxu0 0.0
      %1987 = vmatprep.subr.mxu0 0.0
      %1988 = vmatpush1.msra.mxu0 0.0
      %1989 = vmatprep.subr.mxu0 0.0
      %1990 = vmatpush1.msra.mxu0 0.0
      %1991 = vmatprep.subr.mxu0 0.0
      %1992 = vmatpush1.msra.mxu0 0.0
      %1993 = vmatprep.subr.mxu0 0.0
      %1994 = vmatpush1.msra.mxu0 0.0
      %1995 = vmatprep.subr.mxu0 0.0
      %1996 = vmatpush1.msra.mxu0 0.0
      %1997 = vmatprep.subr.mxu0 0.0
      %1998 = vmatpush1.msra.mxu0 0.0
      %1999 = vmatprep.subr.mxu0 0.0
      %2000 = vmatpush1.msra.mxu0 0.0
      %2001 = vmatprep.subr.mxu0 0.0
      %2002 = vmatpush1.msra.mxu0 0.0
      %2003 = vmatprep.subr.mxu0 0.0
      %2004 = vmatpush1.msra.mxu0 0.0
      %2005 = vmatprep.subr.mxu0 0.0
      %2006 = vmatpush1.msra.mxu0 0.0
      %2007 = vmatprep.subr.mxu0 0.0
      %2008 = vmatpush1.msra.mxu0 0.0
      %2009 = vmatprep.subr.mxu0 0.0
      %2010 = vmatpush1.msra.mxu0 0.0
      %2011 = vmatprep.subr.mxu0 0.0
      %2012 = vmatpush1.msra.mxu0 0.0
      %2013 = vmatprep.subr.mxu0 0.0
      %2014 = vmatpush1.msra.mxu0 0.0
      %2015 = vmatprep.subr.mxu0 0.0
      %2016 = vmatpush1.msra.mxu0 0.0
      %2017 = vmatprep.subr.mxu0 0.0
      %2018 = vmatpush1.msra.mxu0 0.0
      %2019 = vmatprep.subr.mxu0 0.0
      %2020 = vmatpush1.msra.mxu0 0.0
      %2021 = vmatprep.subr.mxu0 0.0
      %2022 = vmatpush1.msra.mxu0 0.0
      %2023 = vmatprep.subr.mxu0 0.0
      %2024 = vmatpush1.msra.mxu0 0.0
      %2025 = vmatprep.subr.mxu0 0.0
      %2026 = vmatpush1.msra.mxu0 0.0
      %2027 = vmatprep.subr.mxu0 0.0
      %2028 = vmatpush1.msra.mxu0 0.0
      %2029 = vmatprep.subr.mxu0 0.0
      %2030 = vmatpush1.msra.mxu0 0.0
      %2031 = vmatprep.subr.mxu0 0.0
      %2032 = vmatpush1.msra.mxu0 0.0
      %2033 = vmatprep.subr.mxu0 0.0
      %2034 = vmatpush1.msra.mxu0 0.0
      %2035 = vmatprep.subr.mxu0 0.0
      %2036 = vmatpush1.msra.mxu0 0.0
      %2037 = vmatprep.subr.mxu0 0.0
      %2038 = vmatpush1.msra.mxu0 0.0
      %2039 = vmatprep.mubr.f32.mxu0 0.0
      %2040 = vmatmul.mubr.f32.gmra.mrb[0].mxu0 %v1285
      %v2041 = vpop.f32.mrb[0].mxu0
      %v2042 = vadd.f32 0.0, %v2041
      %v2043 = vpop.f32.mrb[0].mxu0
      %2044 = vdwg.mxu0
      %2045 = vmatprep.subr.mxu0 0.0
      %2046 = vmatpush1.msra.mxu0 %v1967
      %2047 = vmatprep.subr.mxu0 0.0
      %2048 = vmatpush1.msra.mxu0 %v1968
      %2049 = vmatprep.subr.mxu0 0.0
      %2050 = vmatpush1.msra.mxu0 %v1969
      %2051 = vmatprep.subr.mxu0 0.0
      %2052 = vmatpush1.msra.mxu0 %v1970
      %2053 = vmatprep.subr.mxu0 0.0
      %2054 = vmatpush1.msra.mxu0 0.0
      %2055 = vmatprep.subr.mxu0 0.0
      %2056 = vmatpush1.msra.mxu0 0.0
      %2057 = vmatprep.subr.mxu0 0.0
      %2058 = vmatpush1.msra.mxu0 0.0
      %2059 = vmatprep.subr.mxu0 0.0
      %2060 = vmatpush1.msra.mxu0 0.0
      %2061 = vmatprep.subr.mxu0 0.0
      %2062 = vmatpush1.msra.mxu0 0.0
      %2063 = vmatprep.subr.mxu0 0.0
      %2064 = vmatpush1.msra.mxu0 0.0
      %2065 = vmatprep.subr.mxu0 0.0
      %2066 = vmatpush1.msra.mxu0 0.0
      %2067 = vmatprep.subr.mxu0 0.0
      %2068 = vmatpush1.msra.mxu0 0.0
      %2069 = vmatprep.subr.mxu0 0.0
      %2070 = vmatpush1.msra.mxu0 0.0
      %2071 = vmatprep.subr.mxu0 0.0
      %2072 = vmatpush1.msra.mxu0 0.0
      %2073 = vmatprep.subr.mxu0 0.0
      %2074 = vmatpush1.msra.mxu0 0.0
      %2075 = vmatprep.subr.mxu0 0.0
      %2076 = vmatpush1.msra.mxu0 0.0
      %2077 = vmatprep.subr.mxu0 0.0
      %2078 = vmatpush1.msra.mxu0 0.0
      %2079 = vmatprep.subr.mxu0 0.0
      %2080 = vmatpush1.msra.mxu0 0.0
      %2081 = vmatprep.subr.mxu0 0.0
      %2082 = vmatpush1.msra.mxu0 0.0
      %2083 = vmatprep.subr.mxu0 0.0
      %2084 = vmatpush1.msra.mxu0 0.0
      %2085 = vmatprep.subr.mxu0 0.0
      %2086 = vmatpush1.msra.mxu0 0.0
      %2087 = vmatprep.subr.mxu0 0.0
      %2088 = vmatpush1.msra.mxu0 0.0
      %2089 = vmatprep.subr.mxu0 0.0
      %2090 = vmatpush1.msra.mxu0 0.0
      %2091 = vmatprep.subr.mxu0 0.0
      %2092 = vmatpush1.msra.mxu0 0.0
      %2093 = vmatprep.subr.mxu0 0.0
      %2094 = vmatpush1.msra.mxu0 0.0
      %2095 = vmatprep.subr.mxu0 0.0
      %2096 = vmatpush1.msra.mxu0 0.0
      %2097 = vmatprep.subr.mxu0 0.0
      %2098 = vmatpush1.msra.mxu0 0.0
      %2099 = vmatprep.subr.mxu0 0.0
      %2100 = vmatpush1.msra.mxu0 0.0
      %2101 = vmatprep.subr.mxu0 0.0
      %2102 = vmatpush1.msra.mxu0 0.0
      %2103 = vmatprep.subr.mxu0 0.0
      %2104 = vmatpush1.msra.mxu0 0.0
      %2105 = vmatprep.subr.mxu0 0.0
      %2106 = vmatpush1.msra.mxu0 0.0
      %2107 = vmatprep.subr.mxu0 0.0
      %2108 = vmatpush1.msra.mxu0 0.0
      %2109 = vmatprep.mubr.f32.mxu0 0.0
      %2110 = vmatmul.mubr.f32.gmra.mrb[0].mxu0 %v1482
      %v2111 = vpop.f32.mrb[0].mxu0
      %v2112 = vadd.f32 %v2042, %v2111
      %v2113 = vpop.f32.mrb[0].mxu0
      %2114 = vdwg.mxu0
      %v2115 = vld [vmem:[%s16 + $0x40] sm:$0xff]
      %v2116 = vld [vmem:[%s16 + $0x48] sm:$0xff]
      %v2117 = vld [vmem:[%s16 + $0x50] sm:$0xff]
      %v2118 = vld [vmem:[%s16 + $0x58] sm:$0xff]
      %v2120 = vsel %vm1283, %v1637, 0
      %2122 = vmatprep.subr.mxu0 0.0
      %2123 = vmatpush1.msra.mxu0 %v2115
      %2124 = vmatprep.subr.mxu0 0.0
      %2125 = vmatpush1.msra.mxu0 %v2116
      %2126 = vmatprep.subr.mxu0 0.0
      %2127 = vmatpush1.msra.mxu0 %v2117
      %2128 = vmatprep.subr.mxu0 0.0
      %2129 = vmatpush1.msra.mxu0 %v2118
      %2130 = vmatprep.subr.mxu0 0.0
      %2131 = vmatpush1.msra.mxu0 0.0
      %2132 = vmatprep.subr.mxu0 0.0
      %2133 = vmatpush1.msra.mxu0 0.0
      %2134 = vmatprep.subr.mxu0 0.0
      %2135 = vmatpush1.msra.mxu0 0.0
      %2136 = vmatprep.subr.mxu0 0.0
      %2137 = vmatpush1.msra.mxu0 0.0
      %2138 = vmatprep.subr.mxu0 0.0
      %2139 = vmatpush1.msra.mxu0 0.0
      %2140 = vmatprep.subr.mxu0 0.0
      %2141 = vmatpush1.msra.mxu0 0.0
      %2142 = vmatprep.subr.mxu0 0.0
      %2143 = vmatpush1.msra.mxu0 0.0
      %2144 = vmatprep.subr.mxu0 0.0
      %2145 = vmatpush1.msra.mxu0 0.0
      %2146 = vmatprep.subr.mxu0 0.0
      %2147 = vmatpush1.msra.mxu0 0.0
      %2148 = vmatprep.subr.mxu0 0.0
      %2149 = vmatpush1.msra.mxu0 0.0
      %2150 = vmatprep.subr.mxu0 0.0
      %2151 = vmatpush1.msra.mxu0 0.0
      %2152 = vmatprep.subr.mxu0 0.0
      %2153 = vmatpush1.msra.mxu0 0.0
      %2154 = vmatprep.subr.mxu0 0.0
      %2155 = vmatpush1.msra.mxu0 0.0
      %2156 = vmatprep.subr.mxu0 0.0
      %2157 = vmatpush1.msra.mxu0 0.0
      %2158 = vmatprep.subr.mxu0 0.0
      %2159 = vmatpush1.msra.mxu0 0.0
      %2160 = vmatprep.subr.mxu0 0.0
      %2161 = vmatpush1.msra.mxu0 0.0
      %2162 = vmatprep.subr.mxu0 0.0
      %2163 = vmatpush1.msra.mxu0 0.0
      %2164 = vmatprep.subr.mxu0 0.0
      %2165 = vmatpush1.msra.mxu0 0.0
      %2166 = vmatprep.subr.mxu0 0.0
      %2167 = vmatpush1.msra.mxu0 0.0
      %2168 = vmatprep.subr.mxu0 0.0
      %2169 = vmatpush1.msra.mxu0 0.0
      %2170 = vmatprep.subr.mxu0 0.0
      %2171 = vmatpush1.msra.mxu0 0.0
      %2172 = vmatprep.subr.mxu0 0.0
      %2173 = vmatpush1.msra.mxu0 0.0
      %2174 = vmatprep.subr.mxu0 0.0
      %2175 = vmatpush1.msra.mxu0 0.0
      %2176 = vmatprep.subr.mxu0 0.0
      %2177 = vmatpush1.msra.mxu0 0.0
      %2178 = vmatprep.subr.mxu0 0.0
      %2179 = vmatpush1.msra.mxu0 0.0
      %2180 = vmatprep.subr.mxu0 0.0
      %2181 = vmatpush1.msra.mxu0 0.0
      %2182 = vmatprep.subr.mxu0 0.0
      %2183 = vmatpush1.msra.mxu0 0.0
      %2184 = vmatprep.subr.mxu0 0.0
      %2185 = vmatpush1.msra.mxu0 0.0
      %2186 = vmatprep.mubr.f32.mxu0 0.0
      %2187 = vmatmul.mubr.f32.gmra.mrb[0].mxu0 %v2120
      %v2188 = vpop.f32.mrb[0].mxu0
      %v2189 = vadd.f32 0.0, %v2188
      %v2190 = vpop.f32.mrb[0].mxu0
      %2191 = vdwg.mxu0
      %v2192 = vadd.f32 %v2112, %v2189
      %v2193 = vld [vmem:[%s16 + $0x60] sm:$0xff]
      %v2194 = vld [vmem:[%s16 + $0x68] sm:$0xff]
      %v2195 = vld [vmem:[%s16 + $0x70] sm:$0xff]
      %v2196 = vld [vmem:[%s16 + $0x78] sm:$0xff]
      %v2198 = vsel %vm1283, %v1797, 0
      %2200 = vmatprep.subr.mxu0 0.0
      %2201 = vmatpush1.msra.mxu0 %v2193
      %2202 = vmatprep.subr.mxu0 0.0
      %2203 = vmatpush1.msra.mxu0 %v2194
      %2204 = vmatprep.subr.mxu0 0.0
      %2205 = vmatpush1.msra.mxu0 %v2195
      %2206 = vmatprep.subr.mxu0 0.0
      %2207 = vmatpush1.msra.mxu0 %v2196
      %2208 = vmatprep.subr.mxu0 0.0
      %2209 = vmatpush1.msra.mxu0 0.0
      %2210 = vmatprep.subr.mxu0 0.0
      %2211 = vmatpush1.msra.mxu0 0.0
      %2212 = vmatprep.subr.mxu0 0.0
      %2213 = vmatpush1.msra.mxu0 0.0
      %2214 = vmatprep.subr.mxu0 0.0
      %2215 = vmatpush1.msra.mxu0 0.0
      %2216 = vmatprep.subr.mxu0 0.0
      %2217 = vmatpush1.msra.mxu0 0.0
      %2218 = vmatprep.subr.mxu0 0.0
      %2219 = vmatpush1.msra.mxu0 0.0
      %2220 = vmatprep.subr.mxu0 0.0
      %2221 = vmatpush1.msra.mxu0 0.0
      %2222 = vmatprep.subr.mxu0 0.0
      %2223 = vmatpush1.msra.mxu0 0.0
      %2224 = vmatprep.subr.mxu0 0.0
      %2225 = vmatpush1.msra.mxu0 0.0
      %2226 = vmatprep.subr.mxu0 0.0
      %2227 = vmatpush1.msra.mxu0 0.0
      %2228 = vmatprep.subr.mxu0 0.0
      %2229 = vmatpush1.msra.mxu0 0.0
      %2230 = vmatprep.subr.mxu0 0.0
      %2231 = vmatpush1.msra.mxu0 0.0
      %2232 = vmatprep.subr.mxu0 0.0
      %2233 = vmatpush1.msra.mxu0 0.0
      %2234 = vmatprep.subr.mxu0 0.0
      %2235 = vmatpush1.msra.mxu0 0.0
      %2236 = vmatprep.subr.mxu0 0.0
      %2237 = vmatpush1.msra.mxu0 0.0
      %2238 = vmatprep.subr.mxu0 0.0
      %2239 = vmatpush1.msra.mxu0 0.0
      %2240 = vmatprep.subr.mxu0 0.0
      %2241 = vmatpush1.msra.mxu0 0.0
      %2242 = vmatprep.subr.mxu0 0.0
      %2243 = vmatpush1.msra.mxu0 0.0
      %2244 = vmatprep.subr.mxu0 0.0
      %2245 = vmatpush1.msra.mxu0 0.0
      %2246 = vmatprep.subr.mxu0 0.0
      %2247 = vmatpush1.msra.mxu0 0.0
      %2248 = vmatprep.subr.mxu0 0.0
      %2249 = vmatpush1.msra.mxu0 0.0
      %2250 = vmatprep.subr.mxu0 0.0
      %2251 = vmatpush1.msra.mxu0 0.0
      %2252 = vmatprep.subr.mxu0 0.0
      %2253 = vmatpush1.msra.mxu0 0.0
      %2254 = vmatprep.subr.mxu0 0.0
      %2255 = vmatpush1.msra.mxu0 0.0
      %2256 = vmatprep.subr.mxu0 0.0
      %2257 = vmatpush1.msra.mxu0 0.0
      %2258 = vmatprep.subr.mxu0 0.0
      %2259 = vmatpush1.msra.mxu0 0.0
      %2260 = vmatprep.subr.mxu0 0.0
      %2261 = vmatpush1.msra.mxu0 0.0
      %2262 = vmatprep.subr.mxu0 0.0
      %2263 = vmatpush1.msra.mxu0 0.0
      %2264 = vmatprep.mubr.f32.mxu0 0.0
      %2265 = vmatmul.mubr.f32.gmra.mrb[0].mxu0 %v2198
      %v2266 = vpop.f32.mrb[0].mxu0
      %v2267 = vadd.f32 0.0, %v2266
      %v2268 = vpop.f32.mrb[0].mxu0
      %2269 = vdwg.mxu0
      %v2270 = vadd.f32 %v2192, %v2267
      %v2271 = vld [vmem:[%s17] sm:$0x1]
      %v2273 = vlaneseq
      %v2274 = vshrl.u32 %v2273, 7
      %v2275 = vsub.s32 0, %v2274
      %v2276 = vrot.slane %v2271, %v2275
      %v2278 = vadd.f32 %v2270, %v2276
      %v2279 = vpack.c.bf16 %v1469, %v1469
      %v2280 = vld [vmem:[%s9] sm:$0xf]
      %v2281 = vld [vmem:[%s9 + $0x4] sm:$0xf]
      %v2282 = vld [vmem:[%s9 + $0x8] sm:$0xf]
      %v2283 = vld [vmem:[%s9 + $0xc] sm:$0xf]
      %2285 = vrot.lane.b32.xlu0 %v2279, 96
      %v2286 = vpop.permute.xlu0 %2285
      %v2291 = vunpack.c.l.b16 %v2280
      %v2292 = vunpack.c.l.b16 %v2281
      %v2293 = vunpack.c.l.b16 %v2282
      %v2294 = vunpack.c.l.b16 %v2283
      %v2295 = vpack.c.b16 %v2292, %v2291
      %v2296 = vpack.c.b16 %v2294, %v2293
      %v2300 = vsel %vm1283, %v2286, 0
      %2302 = vmatprep.subr.bf16.mxu0 0
      %2303 = vmatpush1.bf16.msra.mxu0 %v2295
      %2304 = vmatprep.subr.bf16.mxu0 0
      %2305 = vmatpush1.bf16.msra.mxu0 %v2296
      %2306 = vmatprep.subr.bf16.mxu0 0
      %2307 = vmatpush1.bf16.msra.mxu0 0
      %2308 = vmatprep.subr.bf16.mxu0 0
      %2309 = vmatpush1.bf16.msra.mxu0 0
      %2310 = vmatprep.subr.bf16.mxu0 0
      %2311 = vmatpush1.bf16.msra.mxu0 0
      %2312 = vmatprep.subr.bf16.mxu0 0
      %2313 = vmatpush1.bf16.msra.mxu0 0
      %2314 = vmatprep.subr.bf16.mxu0 0
      %2315 = vmatpush1.bf16.msra.mxu0 0
      %2316 = vmatprep.subr.bf16.mxu0 0
      %2317 = vmatpush1.bf16.msra.mxu0 0
      %2318 = vmatprep.subr.bf16.mxu0 0
      %2319 = vmatpush1.bf16.msra.mxu0 0
      %2320 = vmatprep.subr.bf16.mxu0 0
      %2321 = vmatpush1.bf16.msra.mxu0 0
      %2322 = vmatprep.subr.bf16.mxu0 0
      %2323 = vmatpush1.bf16.msra.mxu0 0
      %2324 = vmatprep.subr.bf16.mxu0 0
      %2325 = vmatpush1.bf16.msra.mxu0 0
      %2326 = vmatprep.subr.bf16.mxu0 0
      %2327 = vmatpush1.bf16.msra.mxu0 0
      %2328 = vmatprep.subr.bf16.mxu0 0
      %2329 = vmatpush1.bf16.msra.mxu0 0
      %2330 = vmatprep.subr.bf16.mxu0 0
      %2331 = vmatpush1.bf16.msra.mxu0 0
      %2332 = vmatprep.subr.bf16.mxu0 0
      %2333 = vmatpush1.bf16.msra.mxu0 0
      %2334 = vmatprep.mubr.bf16.mxu0 0
      %2335 = vmatmul.mubr.bf16.gmra.mrb[0].mxu0 %v2300
      %v2336 = vpop.f32.mrb[0].mxu0
      %v2337 = vadd.f32 0.0, %v2336
      %v2338 = vpop.f32.mrb[0].mxu0
      %v2339 = vpop.f32.mrb[0].mxu0
      %v2340 = vpop.f32.mrb[0].mxu0
      %2341 = vdwg.mxu0
      %2342 = vst [vmem:[%s893] sm:$0x7] %v2337
      %2343 = vst.msk [vmem:[%s901] sm:$0x7] %vm1554, %v1565
      %2344 = vst.msk [vmem:[%s909] sm:$0x7] %vm1554, %v1726
      %vm2345 = vcmask 18432
      %2346 = vst.msk [vmem:[%s917] sm:$0x7] %vm2345, %v2278
      %v2347 = vld [vmem:[%s885] sm:$0x3]
      %v2348 = vunpack.c.l.bf16 %v2347
      %2349 = vst.msk [vmem:[#allocation3] sm:$0x7] %vm1474, %v2348
      %p2350 = scmp.lt.s32.totalorder %s39, 3
      %s2351 = scalar_select %p2350, %s39, 3
      %p2352 = scmp.lt.s32.totalorder %s38, 1
      %s2353 = scalar_select %p2352, %s38, 1
      %s2354 = smul.addr %s2351, 2
      %s2355 = sadd.s32 %s2353, %s2354
      %s2356 = smul.addr %s2355, 4
      %s2357 = scalar_lea.vmem %s18, %s2356
      %p2358 = scmp.lt.s32.totalorder %s39, 3
      %s2359 = scalar_select %p2358, %s39, 3
      %p2360 = scmp.lt.s32.totalorder %s38, 1
      %s2361 = scalar_select %p2360, %s38, 1
      %s2362 = smul.addr %s2359, 2
      %s2363 = sadd.s32 %s2361, %s2362
      %s2364 = smul.addr %s2363, 4
      %s2365 = scalar_lea.vmem %s19, %s2364
      %p2366 = scmp.lt.s32.totalorder %s39, 3
      %s2367 = scalar_select %p2366, %s39, 3
      %p2368 = scmp.lt.s32.totalorder %s38, 1
      %s2369 = scalar_select %p2368, %s38, 1
      %s2370 = smul.addr %s2367, 2
      %s2371 = sadd.s32 %s2369, %s2370
      %s2372 = smul.addr %s2371, 4
      %s2373 = scalar_lea.vmem %s20, %s2372
      %p2374 = scmp.lt.s32.totalorder %s39, 3
      %s2375 = scalar_select %p2374, %s39, 3
      %p2376 = scmp.lt.s32.totalorder %s38, 1
      %s2377 = scalar_select %p2376, %s38, 1
      %s2378 = smul.addr %s2375, 2
      %s2379 = sadd.s32 %s2377, %s2378
      %s2380 = smul.addr %s2379, 4
      %s2381 = scalar_lea.vmem %s21, %s2380
      %p2382 = scmp.lt.s32.totalorder %s38, 1
      %s2383 = scalar_select %p2382, %s38, 1
      %s2384 = smul.addr %s2383, 4
      %s2385 = scalar_lea.vmem %s22, %s2384
      // Predicated region
      $region101: #{generator_forward.1} parent=91 // pred_check
        %p2386 = pneg %p491
      $region102: #{generator_forward.1} parent=91 // pred_check_branch
        %2388 = sbr.rel (%p2386) target = $region104
      $region103: #{generator_forward.1} parent=91 // pred_region
        _
      $region104: #{generator_forward.1} parent=91 // pred_fallthru
        _
      // Predicated region
      $region105: #{generator_forward.1} parent=91 // pred_check
        %p2389 = pneg %p519
      $region106: #{generator_forward.1} parent=91 // pred_check_branch
        %2391 = sbr.rel (%p2389) target = $region108
      $region107: #{generator_forward.1} parent=91 // pred_region
        _
      $region108: #{generator_forward.1} parent=91 // pred_fallthru
        _
      // Predicated region
      $region109: #{generator_forward.1} parent=91 // pred_check
        %p2392 = pneg %p547
      $region110: #{generator_forward.1} parent=91 // pred_check_branch
        %2394 = sbr.rel (%p2392) target = $region112
      $region111: #{generator_forward.1} parent=91 // pred_region
        _
      $region112: #{generator_forward.1} parent=91 // pred_fallthru
        _
      // Predicated region
      $region113: #{generator_forward.1} parent=91 // pred_check
        %p2395 = pneg %p575
      $region114: #{generator_forward.1} parent=91 // pred_check_branch
        %2397 = sbr.rel (%p2395) target = $region116
      $region115: #{generator_forward.1} parent=91 // pred_region
        _
      $region116: #{generator_forward.1} parent=91 // pred_fallthru
        _
      // Predicated region
      $region117: #{generator_forward.1} parent=91 // pred_check
        %p2398 = pneg %p601
      $region118: #{generator_forward.1} parent=91 // pred_check_branch
        %2400 = sbr.rel (%p2398) target = $region120
      $region119: #{generator_forward.1} parent=91 // pred_region
        _
      $region120: #{generator_forward.1} parent=91 // pred_fallthru
        _
    $region92: #{generator_forward.1} parent=5 // pred_fallthru
      _
    %p2401 = scmp.le.s32.totalorder 2, %s29
    // Predicated region
    $region121: #{generator_forward.1} parent=5 // pred_check
      %p2402 = pneg %p2401
    $region122: #{generator_forward.1} parent=5 // pred_check_branch
      %2404 = sbr.rel (%p2402) target = $region124
    $region123: #{generator_forward.1} parent=5 // pred_region
      %s2405 = ssub.s32 %s29, 2
      // Predicated region
      $region125: #{generator_forward.1} parent=123 // pred_check
        %p2406 = pneg %p497
      $region126: #{generator_forward.1} parent=123 // pred_check_branch
        %2408 = sbr.rel (%p2406) target = $region128
      $region127: #{generator_forward.1} parent=123 // pred_region
        %p2409 = scmp.lt.s32.totalorder %s41, 3
        %s2410 = scalar_select %p2409, %s41, 3
        %p2411 = scmp.lt.s32.totalorder %s40, 1
        %s2412 = scalar_select %p2411, %s40, 1
        %s2413 = smul.addr %s2410, 2
        %s2414 = sadd.s32 %s2412, %s2413
        %s2415 = smul.addr %s2414, 4
        %s2416 = scalar_lea.vmem %s18, %s2415
      $region128: #{generator_forward.1} parent=123 // pred_fallthru
        _
      // Predicated region
      $region129: #{generator_forward.1} parent=123 // pred_check
        %p2417 = pneg %p525
      $region130: #{generator_forward.1} parent=123 // pred_check_branch
        %2419 = sbr.rel (%p2417) target = $region132
      $region131: #{generator_forward.1} parent=123 // pred_region
        %p2420 = scmp.lt.s32.totalorder %s41, 3
        %s2421 = scalar_select %p2420, %s41, 3
        %p2422 = scmp.lt.s32.totalorder %s40, 1
        %s2423 = scalar_select %p2422, %s40, 1
        %s2424 = smul.addr %s2421, 2
        %s2425 = sadd.s32 %s2423, %s2424
        %s2426 = smul.addr %s2425, 4
        %s2427 = scalar_lea.vmem %s19, %s2426
      $region132: #{generator_forward.1} parent=123 // pred_fallthru
        _
      // Predicated region
      $region133: #{generator_forward.1} parent=123 // pred_check
        %p2428 = pneg %p553
      $region134: #{generator_forward.1} parent=123 // pred_check_branch
        %2430 = sbr.rel (%p2428) target = $region136
      $region135: #{generator_forward.1} parent=123 // pred_region
        %p2431 = scmp.lt.s32.totalorder %s41, 3
        %s2432 = scalar_select %p2431, %s41, 3
        %p2433 = scmp.lt.s32.totalorder %s40, 1
        %s2434 = scalar_select %p2433, %s40, 1
        %s2435 = smul.addr %s2432, 2
        %s2436 = sadd.s32 %s2434, %s2435
        %s2437 = smul.addr %s2436, 4
        %s2438 = scalar_lea.vmem %s20, %s2437
      $region136: #{generator_forward.1} parent=123 // pred_fallthru
        _
      // Predicated region
      $region137: #{generator_forward.1} parent=123 // pred_check
        %p2439 = pneg %p581
      $region138: #{generator_forward.1} parent=123 // pred_check_branch
        %2441 = sbr.rel (%p2439) target = $region140
      $region139: #{generator_forward.1} parent=123 // pred_region
        %p2442 = scmp.lt.s32.totalorder %s41, 3
        %s2443 = scalar_select %p2442, %s41, 3
        %p2444 = scmp.lt.s32.totalorder %s40, 1
        %s2445 = scalar_select %p2444, %s40, 1
        %s2446 = smul.addr %s2443, 2
        %s2447 = sadd.s32 %s2445, %s2446
        %s2448 = smul.addr %s2447, 4
        %s2449 = scalar_lea.vmem %s21, %s2448
      $region140: #{generator_forward.1} parent=123 // pred_fallthru
        _
      // Predicated region
      $region141: #{generator_forward.1} parent=123 // pred_check
        %p2450 = pneg %p607
      $region142: #{generator_forward.1} parent=123 // pred_check_branch
        %2452 = sbr.rel (%p2450) target = $region144
      $region143: #{generator_forward.1} parent=123 // pred_region
        %p2453 = scmp.lt.s32.totalorder %s40, 1
        %s2454 = scalar_select %p2453, %s40, 1
        %s2455 = smul.addr %s2454, 4
        %s2456 = scalar_lea.vmem %s22, %s2455
      $region144: #{generator_forward.1} parent=123 // pred_fallthru
        _
    $region124: #{generator_forward.1} parent=5 // pred_fallthru
      _
  $region6: #{generator_forward.1} parent=0 // loop_footer
    %s33 = sadd.s32 1, %s29
  $region7: #{generator_forward.1} parent=0 // loop_footer_branch
    %28 = sbr.rel target = $region3
  $region8: #{generator_forward.1} parent=0 // loop_exit
    _

</llo_original>
